<compile_context>
chip_gen: v7x
topology: tpu7x:2x2x1
jax: 0.10.0
libtpu: 0.0.40
codegen_flags: <defaults>
</compile_context>

<pallas_src>
import numpy as np

import jax
import jax.numpy as jnp
from jax import lax
from jax.experimental import pallas as pl
from jax.experimental.pallas import tpu as pltpu


# ---------------------------------------------------------------------------
# Fused forward kernel (B_TILE images per grid step)
# ---------------------------------------------------------------------------
def _net_fused_kernel(xp_ref, band1_ref, band2_ref, fc1w_ref, fc2w_ref,
                      bias_ref, out_ref, h1_ref):
    f32 = jnp.float32
    bf16 = jnp.bfloat16
    bt = out_ref.shape[0]                       # B_TILE images this step

    b_c1 = bias_ref[0:1, :]                     # [1,128] conv1 bias (12 cols x 10 ch)
    b_c2 = bias_ref[1:2, :]                     # [1,128] conv2 bias (4 cols x 20 ch)
    b_f1 = bias_ref[2:3, :]                     # [1,128] fc1 bias (50 lanes used)
    b_f2 = bias_ref[3:4, :]                     # [1,128] fc2 bias (10 lanes used)

    band1 = band1_ref[...]                      # [140, 256] bf16

    # ---- conv1 (5 taps folded into K=140) + 2x2 maxpool + relu -------------
    # xp_ref[2e+dh, s*bt + b, i*28 + w] = image row 4s+2e+dh+i, col w.
    # One dot per (e, dh); dw=0 / dw=1 pool-column parities live in the two
    # 128-lane halves of the 256-wide result.
    for e in range(2):
        acc_e = None
        for dh in range(2):
            res = jnp.dot(xp_ref[2 * e + dh], band1,
                          preferred_element_type=f32)             # [6*bt, 256]
            res = jnp.maximum(res[:, :128], res[:, 128:])          # max over dw
            acc_e = res if acc_e is None else jnp.maximum(acc_e, res)  # over dh
        h1_e = jnp.maximum(acc_e + b_c1, 0.0).astype(bf16)         # [6*bt, 128]
        # h1_ref[e, s, b, q*10+ci] = pooled conv1 at pooled row 2s+e, col q, ch ci
        h1_ref[e] = h1_e.reshape(6, bt, 128)
    # TODO(synk): nn.Dropout2d after conv2 is treated as identity (eval mode).

    # ---- conv2 (5x5) + 2x2 maxpool + relu -----------------------------------
    # Pooled conv1 row p = 2s'+e' lives at h1_ref[e', s']; tap i for pool-row
    # parity dh2 needs rows 2*s2 + dh2 + i (s2 = 0..3) => a contiguous s' window.
    r2 = []
    for dh2 in range(2):
        acc = None
        for i in range(5):
            j = dh2 + i
            lhs = h1_ref[j % 2, j // 2:j // 2 + 4]                 # [4, bt, 128] bf16
            d = jnp.dot(lhs.reshape(4 * bt, 128), band2_ref[i],
                        preferred_element_type=f32)                # [4*bt, 256]
            acc = d if acc is None else acc + d
        r2.append(jnp.maximum(acc[:, :128], acc[:, 128:]))         # max over dw2
    h2 = jnp.maximum(jnp.maximum(r2[0], r2[1]) + b_c2, 0.0)        # [4*bt, 128] f32
    h2 = h2.astype(bf16)                                           # rows: p2-major, image-minor

    # ---- fc1 + relu (the 4 pooled rows folded into K = 512) -----------------
    h2cat = jnp.concatenate([h2[p2 * bt:(p2 + 1) * bt, :] for p2 in range(4)],
                            axis=-1)                               # [bt, 512] bf16
    y = jnp.dot(h2cat, fc1w_ref[...], preferred_element_type=f32) + b_f1
    y = jnp.maximum(y, 0.0)                                        # [bt, 128] f32
    # TODO(synk): F.dropout before fc2 is treated as identity (eval mode).

    # ---- fc2 + log_softmax ---------------------------------------------------
    z = jnp.dot(y.astype(bf16), fc2w_ref[...],
                preferred_element_type=f32) + b_f2                 # [bt, 128]
    lane = lax.broadcasted_iota(jnp.int32, (bt, 128), 1)
    z = jnp.where(lane < 10, z, -1e30)        # mask the lane padding (10 classes)
    m = jnp.max(z, axis=-1, keepdims=True)
    s = z - m
    lse = jnp.log(jnp.sum(jnp.exp(s), axis=-1, keepdims=True))
    out_ref[...] = s - lse


# ---------------------------------------------------------------------------
# Host-side (one-time) parameter repacking: PyTorch layout -> MXU operands
# ---------------------------------------------------------------------------
def pack_params(params):
    """Encodes im2col + pool-parity structure into zero-padded, lane-dense
    banded weight matrices so the kernel never gathers patches."""
    w1 = np.asarray(params["conv1_w"], np.float32)      # [10, 1, 5, 5]
    b1 = np.asarray(params["conv1_b"], np.float32)      # [10]
    w2 = np.asarray(params["conv2_w"], np.float32)      # [20, 10, 5, 5]
    b2 = np.asarray(params["conv2_b"], np.float32)      # [20]
    fw1 = np.asarray(params["fc1_w"], np.float32)       # [320, 50]
    fb1 = np.asarray(params["fc1_b"], np.float32)       # [50]
    fw2 = np.asarray(params["fc2_w"], np.float32)       # [50, 10]
    fb2 = np.asarray(params["fc2_b"], np.float32)       # [10]

    # conv1: band1[i*28 + w, dw*128 + q*10 + co] = w1[co, 0, i, w - (2q + dw)]
    band1 = np.zeros((140, 256), np.float32)
    for i in range(5):
        for dw in range(2):
            for q in range(12):
                for j in range(5):
                    w = 2 * q + dw + j
                    band1[i * 28 + w,
                          dw * 128 + q * 10:dw * 128 + q * 10 + 10] = w1[:, 0, i, j]

    # conv2: band2[i, wcol*10+ci, dw*128 + q2*20+co] = w2[co, ci, i, wcol-(2q2+dw)]
    band2 = np.zeros((5, 128, 256), np.float32)
    for i in range(5):
        for dw in range(2):
            for q2 in range(4):
                for j in range(5):
                    wcol = 2 * q2 + dw + j
                    for ci in range(10):
                        band2[i, wcol * 10 + ci,
                              dw * 128 + q2 * 20:dw * 128 + q2 * 20 + 20] = w2[:, ci, i, j]

    # fc1: K order is (p2, q2, co); PyTorch .view(-1, 320) flattens NCHW as
    # (co, p2, q2) -> row co*16 + p2*4 + q2.
    fc1p = np.zeros((512, 128), np.float32)
    for p2 in range(4):
        for q2 in range(4):
            for co in range(20):
                fc1p[p2 * 128 + q2 * 20 + co, :50] = fw1[co * 16 + p2 * 4 + q2, :]

    fc2p = np.zeros((128, 128), np.float32)
    fc2p[:50, :10] = fw2

    bias = np.zeros((4, 128), np.float32)
    bias[0, :120] = np.tile(b1, 12)
    bias[1, :80] = np.tile(b2, 4)
    bias[2, :50] = fb1
    bias[3, :10] = fb2

    return {
        "band1": jnp.asarray(band1, dtype=jnp.bfloat16),
        "band2": jnp.asarray(band2, dtype=jnp.bfloat16),
        "fc1w": jnp.asarray(fc1p, dtype=jnp.bfloat16),
        "fc2w": jnp.asarray(fc2p, dtype=jnp.bfloat16),
        "bias": jnp.asarray(bias, dtype=jnp.float32),
    }


# ---------------------------------------------------------------------------
# Forward pass wrapper
# ---------------------------------------------------------------------------
def net_forward(packed, x, b_tile=32):
    """x: [B, 1, 28, 28] float32 -> log-probs [B, 10]."""
    B = x.shape[0]
    assert x.shape[1:] == (1, 28, 28)
    assert b_tile % 8 == 0
    n_steps = -(-B // b_tile)
    b_pad = n_steps * b_tile
    if b_pad != B:
        x = jnp.concatenate(
            [x, jnp.zeros((b_pad - B,) + x.shape[1:], x.dtype)], axis=0)

    # Host-side im2row packing (bf16): for group g = 2e+dh, row-block s, image b
    # the LHS row holds the 5 folded conv taps of image rows 4s+g .. 4s+g+4.
    img = x[:, 0, :, :].astype(jnp.bfloat16)                       # [b_pad,28,28]
    rows = (4 * np.arange(6)[None, :, None]
            + np.arange(4)[:, None, None]
            + np.arange(5)[None, None, :])                         # [4,6,5] static
    xg = img[:, rows, :]                                           # [b_pad,4,6,5,28]
    xp = (xg.reshape(n_steps, b_tile, 4, 6, 140)
            .transpose(0, 2, 3, 1, 4)                              # s-major, image-minor
            .reshape(n_steps, 4, 6 * b_tile, 140))

    out = pl.pallas_call(
        _net_fused_kernel,
        grid=(n_steps,),
        out_shape=jax.ShapeDtypeStruct((b_pad, 128), jnp.float32),
        in_specs=[
            pl.BlockSpec((None, 4, 6 * b_tile, 140), lambda g: (g, 0, 0, 0)),  # images
            pl.BlockSpec((140, 256), lambda g: (0, 0)),                        # band1
            pl.BlockSpec((5, 128, 256), lambda g: (0, 0, 0)),                  # band2
            pl.BlockSpec((512, 128), lambda g: (0, 0)),                        # fc1
            pl.BlockSpec((128, 128), lambda g: (0, 0)),                        # fc2
            pl.BlockSpec((4, 128), lambda g: (0, 0)),                          # biases
        ],
        out_specs=pl.BlockSpec((b_tile, 128), lambda g: (g, 0)),
        scratch_shapes=[pltpu.VMEM((2, 6, b_tile, 128), jnp.bfloat16)],        # h1 staging
        compiler_params=pltpu.CompilerParams(
            dimension_semantics=("parallel",)),
    )(xp, packed["band1"], packed["band2"], packed["fc1w"],
      packed["fc2w"], packed["bias"])
    return out[:B, :10]


# ---------------------------------------------------------------------------
# Parameter init (PyTorch-like layout) + pure-XLA reference for self-check
# ---------------------------------------------------------------------------
def init_params(key):
    ks = jax.random.split(key, 8)

    def u(k, shape, fan_in):
        bound = 1.0 / jnp.sqrt(fan_in)
        return jax.random.uniform(k, shape, jnp.float32, -bound, bound)

    return {
        "conv1_w": u(ks[0], (10, 1, 5, 5), 1 * 5 * 5),
        "conv1_b": u(ks[1], (10,), 1 * 5 * 5),
        "conv2_w": u(ks[2], (20, 10, 5, 5), 10 * 5 * 5),
        "conv2_b": u(ks[3], (20,), 10 * 5 * 5),
        # fc weights stored pre-transposed as [in, out] for x @ W
        "fc1_w": u(ks[4], (320, 50), 320),
        "fc1_b": u(ks[5], (50,), 320),
        "fc2_w": u(ks[6], (50, 10), 50),
        "fc2_b": u(ks[7], (10,), 50),
    }


def _reference_forward(params, x):
    """Pure-JAX/XLA reference, used only for the self-check in __main__."""
    def conv(h, w, b):
        out = lax.conv_general_dilated(
            h, w, window_strides=(1, 1), padding="VALID",
            dimension_numbers=("NCHW", "OIHW", "NCHW"))
        return out + b[None, :, None, None]

    def pool_relu(h):
        n, c, hh, ww = h.shape
        h = h.reshape(n, c, hh // 2, 2, ww // 2, 2).max(axis=(3, 5))
        return jnp.maximum(h, 0.0)

    h = pool_relu(conv(x, params["conv1_w"], params["conv1_b"]))
    h = pool_relu(conv(h, params["conv2_w"], params["conv2_b"]))
    h = h.reshape(h.shape[0], 320)
    h = jnp.maximum(h @ params["fc1_w"] + params["fc1_b"], 0.0)
    z = h @ params["fc2_w"] + params["fc2_b"]
    return jax.nn.log_softmax(z, axis=-1)


if __name__ == "__main__":
    root = jax.random.PRNGKey(0)
    k_param, k_x = jax.random.split(root)
    params = init_params(k_param)
    packed = pack_params(params)

    B = 64                       # 2 grid steps at b_tile=32 -> both v7x TCs busy
    x = jax.random.normal(k_x, (B, 1, 28, 28), jnp.float32)

    fwd = jax.jit(net_forward)
    out = fwd(packed, x)
    jax.block_until_ready(out)

    assert out.shape == (B, 10)
    # rows of log_softmax must exponentiate-sum to ~1
    assert jnp.allclose(jnp.sum(jnp.exp(out), axis=1), 1.0, atol=1e-3)

    # Cross-check against a pure-XLA reference with the same bf16 weight/input
    # rounding as the kernel (remaining diff: in-kernel bf16 activation casts).
    params_bf16 = jax.tree_util.tree_map(
        lambda a: a.astype(jnp.bfloat16).astype(jnp.float32), params)
    ref = _reference_forward(params_bf16,
                             x.astype(jnp.bfloat16).astype(jnp.float32))
    err = float(jnp.max(jnp.abs(out - ref)))
    assert err < 5e-2, err
    print("KERNEL_OK")
</pallas_src>

<mosaic_0001>
module attributes {stable_mosaic.version = 11 : i64} {
  func.func @_net_fused_kernel(%arg0: i32, %arg1: memref<1x4x192x140xbf16, #tpu.memory_space<vmem>>, %arg2: memref<140x256xbf16, #tpu.memory_space<vmem>>, %arg3: memref<5x128x256xbf16, #tpu.memory_space<vmem>>, %arg4: memref<512x128xbf16, #tpu.memory_space<vmem>>, %arg5: memref<128x128xbf16, #tpu.memory_space<vmem>>, %arg6: memref<4x128xf32, #tpu.memory_space<vmem>>, %arg7: memref<32x128xf32, #tpu.memory_space<vmem>>, %arg8: memref<2x6x32x128xbf16, #tpu.memory_space<vmem>>) attributes {dimension_semantics = [#tpu.dimension_semantics<parallel>], iteration_bounds = array<i64: 2>, scalar_prefetch = 0 : i64, scratch_operands = 1 : i64, tpu.core_type = #tpu.core_type<tc>, window_params = [{transform_indices = @transform_0, window_bounds = array<i64: 1, 4, 192, 140>}, {pipeline_mode = #tpu.pipeline_mode<synchronous>, transform_indices = @transform_1, window_bounds = array<i64: 140, 256>}, {pipeline_mode = #tpu.pipeline_mode<synchronous>, transform_indices = @transform_2, window_bounds = array<i64: 5, 128, 256>}, {pipeline_mode = #tpu.pipeline_mode<synchronous>, transform_indices = @transform_3, window_bounds = array<i64: 512, 128>}, {pipeline_mode = #tpu.pipeline_mode<synchronous>, transform_indices = @transform_4, window_bounds = array<i64: 128, 128>}, {pipeline_mode = #tpu.pipeline_mode<synchronous>, transform_indices = @transform_5, window_bounds = array<i64: 4, 128>}, {transform_indices = @transform_6, window_bounds = array<i64: 32, 128>}]} {
    %c0 = arith.constant 0 : index
    %c0_0 = arith.constant 0 : index
    %0 = vector.load %arg6[%c0, %c0_0] : memref<4x128xf32, #tpu.memory_space<vmem>>, vector<1x128xf32>
    %c1 = arith.constant 1 : index
    %c0_1 = arith.constant 0 : index
    %1 = vector.load %arg6[%c1, %c0_1] : memref<4x128xf32, #tpu.memory_space<vmem>>, vector<1x128xf32>
    %c2 = arith.constant 2 : index
    %c0_2 = arith.constant 0 : index
    %2 = vector.load %arg6[%c2, %c0_2] : memref<4x128xf32, #tpu.memory_space<vmem>>, vector<1x128xf32>
    %c3 = arith.constant 3 : index
    %c0_3 = arith.constant 0 : index
    %3 = vector.load %arg6[%c3, %c0_3] : memref<4x128xf32, #tpu.memory_space<vmem>>, vector<1x128xf32>
    %c0_4 = arith.constant 0 : index
    %c0_5 = arith.constant 0 : index
    %4 = vector.load %arg2[%c0_4, %c0_5] : memref<140x256xbf16, #tpu.memory_space<vmem>>, vector<140x256xbf16>
    %c0_6 = arith.constant 0 : index
    %c0_7 = arith.constant 0 : index
    %c0_8 = arith.constant 0 : index
    %c0_9 = arith.constant 0 : index
    %5 = vector.load %arg1[%c0_6, %c0_7, %c0_8, %c0_9] : memref<1x4x192x140xbf16, #tpu.memory_space<vmem>>, vector<1x1x192x140xbf16>
    %6 = vector.shape_cast %5 : vector<1x1x192x140xbf16> to vector<192x140xbf16>
    %cst = arith.constant dense<0.000000e+00> : vector<192x256xf32>
    %7 = tpu.matmul %6, %4, %cst {dimension_numbers = #tpu.dot_dimension_numbers<[1], [0], [0], [1], [0, 0, 1, 1], [], []>} : vector<192x140xbf16>, vector<140x256xbf16>, vector<192x256xf32> -> vector<192x256xf32>
    %8 = vector.extract_strided_slice %7 {offsets = [0, 0], sizes = [192, 128], strides = [1, 1]} : vector<192x256xf32> to vector<192x128xf32>
    %9 = vector.extract_strided_slice %7 {offsets = [0, 128], sizes = [192, 128], strides = [1, 1]} : vector<192x256xf32> to vector<192x128xf32>
    %10 = arith.maximumf %8, %9 : vector<192x128xf32>
    %c0_10 = arith.constant 0 : index
    %c1_11 = arith.constant 1 : index
    %c0_12 = arith.constant 0 : index
    %c0_13 = arith.constant 0 : index
    %11 = vector.load %arg1[%c0_10, %c1_11, %c0_12, %c0_13] : memref<1x4x192x140xbf16, #tpu.memory_space<vmem>>, vector<1x1x192x140xbf16>
    %12 = vector.shape_cast %11 : vector<1x1x192x140xbf16> to vector<192x140xbf16>
    %cst_14 = arith.constant dense<0.000000e+00> : vector<192x256xf32>
    %13 = tpu.matmul %12, %4, %cst_14 {dimension_numbers = #tpu.dot_dimension_numbers<[1], [0], [0], [1], [0, 0, 1, 1], [], []>} : vector<192x140xbf16>, vector<140x256xbf16>, vector<192x256xf32> -> vector<192x256xf32>
    %14 = vector.extract_strided_slice %13 {offsets = [0, 0], sizes = [192, 128], strides = [1, 1]} : vector<192x256xf32> to vector<192x128xf32>
    %15 = vector.extract_strided_slice %13 {offsets = [0, 128], sizes = [192, 128], strides = [1, 1]} : vector<192x256xf32> to vector<192x128xf32>
    %16 = arith.maximumf %14, %15 : vector<192x128xf32>
    %17 = arith.maximumf %10, %16 : vector<192x128xf32>
    %18 = vector.broadcast %0 : vector<1x128xf32> to vector<192x128xf32>
    %19 = arith.addf %17, %18 : vector<192x128xf32>
    %cst_15 = arith.constant 0.000000e+00 : f32
    %20 = vector.broadcast %cst_15 : f32 to vector<192x128xf32>
    %21 = arith.maximumf %19, %20 : vector<192x128xf32>
    %22 = arith.truncf %21 : vector<192x128xf32> to vector<192x128xbf16>
    %23 = vector.shape_cast %22 : vector<192x128xbf16> to vector<6x32x128xbf16>
    %c0_16 = arith.constant 0 : index
    %c0_17 = arith.constant 0 : index
    %c0_18 = arith.constant 0 : index
    %c0_19 = arith.constant 0 : index
    %24 = vector.load %arg8[%c0_16, %c0_17, %c0_18, %c0_19] : memref<2x6x32x128xbf16, #tpu.memory_space<vmem>>, vector<1x6x32x128xbf16>
    %25 = vector.shape_cast %24 : vector<1x6x32x128xbf16> to vector<6x32x128xbf16>
    %26 = vector.shape_cast %23 : vector<6x32x128xbf16> to vector<1x6x32x128xbf16>
    tpu.vector_store %arg8[%c0_16, %c0_17, %c0_18, %c0_19], %26 {strides = array<i32>} : memref<2x6x32x128xbf16, #tpu.memory_space<vmem>>, vector<1x6x32x128xbf16>,
    %c0_20 = arith.constant 0 : index
    %c2_21 = arith.constant 2 : index
    %c0_22 = arith.constant 0 : index
    %c0_23 = arith.constant 0 : index
    %27 = vector.load %arg1[%c0_20, %c2_21, %c0_22, %c0_23] : memref<1x4x192x140xbf16, #tpu.memory_space<vmem>>, vector<1x1x192x140xbf16>
    %28 = vector.shape_cast %27 : vector<1x1x192x140xbf16> to vector<192x140xbf16>
    %cst_24 = arith.constant dense<0.000000e+00> : vector<192x256xf32>
    %29 = tpu.matmul %28, %4, %cst_24 {dimension_numbers = #tpu.dot_dimension_numbers<[1], [0], [0], [1], [0, 0, 1, 1], [], []>} : vector<192x140xbf16>, vector<140x256xbf16>, vector<192x256xf32> -> vector<192x256xf32>
    %30 = vector.extract_strided_slice %29 {offsets = [0, 0], sizes = [192, 128], strides = [1, 1]} : vector<192x256xf32> to vector<192x128xf32>
    %31 = vector.extract_strided_slice %29 {offsets = [0, 128], sizes = [192, 128], strides = [1, 1]} : vector<192x256xf32> to vector<192x128xf32>
    %32 = arith.maximumf %30, %31 : vector<192x128xf32>
    %c0_25 = arith.constant 0 : index
    %c3_26 = arith.constant 3 : index
    %c0_27 = arith.constant 0 : index
    %c0_28 = arith.constant 0 : index
    %33 = vector.load %arg1[%c0_25, %c3_26, %c0_27, %c0_28] : memref<1x4x192x140xbf16, #tpu.memory_space<vmem>>, vector<1x1x192x140xbf16>
    %34 = vector.shape_cast %33 : vector<1x1x192x140xbf16> to vector<192x140xbf16>
    %cst_29 = arith.constant dense<0.000000e+00> : vector<192x256xf32>
    %35 = tpu.matmul %34, %4, %cst_29 {dimension_numbers = #tpu.dot_dimension_numbers<[1], [0], [0], [1], [0, 0, 1, 1], [], []>} : vector<192x140xbf16>, vector<140x256xbf16>, vector<192x256xf32> -> vector<192x256xf32>
    %36 = vector.extract_strided_slice %35 {offsets = [0, 0], sizes = [192, 128], strides = [1, 1]} : vector<192x256xf32> to vector<192x128xf32>
    %37 = vector.extract_strided_slice %35 {offsets = [0, 128], sizes = [192, 128], strides = [1, 1]} : vector<192x256xf32> to vector<192x128xf32>
    %38 = arith.maximumf %36, %37 : vector<192x128xf32>
    %39 = arith.maximumf %32, %38 : vector<192x128xf32>
    %40 = vector.broadcast %0 : vector<1x128xf32> to vector<192x128xf32>
    %41 = arith.addf %39, %40 : vector<192x128xf32>
    %cst_30 = arith.constant 0.000000e+00 : f32
    %42 = vector.broadcast %cst_30 : f32 to vector<192x128xf32>
    %43 = arith.maximumf %41, %42 : vector<192x128xf32>
    %44 = arith.truncf %43 : vector<192x128xf32> to vector<192x128xbf16>
    %45 = vector.shape_cast %44 : vector<192x128xbf16> to vector<6x32x128xbf16>
    %c1_31 = arith.constant 1 : index
    %c0_32 = arith.constant 0 : index
    %c0_33 = arith.constant 0 : index
    %c0_34 = arith.constant 0 : index
    %46 = vector.load %arg8[%c1_31, %c0_32, %c0_33, %c0_34] : memref<2x6x32x128xbf16, #tpu.memory_space<vmem>>, vector<1x6x32x128xbf16>
    %47 = vector.shape_cast %46 : vector<1x6x32x128xbf16> to vector<6x32x128xbf16>
    %48 = vector.shape_cast %45 : vector<6x32x128xbf16> to vector<1x6x32x128xbf16>
    tpu.vector_store %arg8[%c1_31, %c0_32, %c0_33, %c0_34], %48 {strides = array<i32>} : memref<2x6x32x128xbf16, #tpu.memory_space<vmem>>, vector<1x6x32x128xbf16>,
    %c0_35 = arith.constant 0 : index
    %c0_36 = arith.constant 0 : index
    %c0_37 = arith.constant 0 : index
    %c0_38 = arith.constant 0 : index
    %49 = vector.load %arg8[%c0_35, %c0_36, %c0_37, %c0_38] : memref<2x6x32x128xbf16, #tpu.memory_space<vmem>>, vector<1x4x32x128xbf16>
    %50 = vector.shape_cast %49 : vector<1x4x32x128xbf16> to vector<4x32x128xbf16>
    %51 = vector.shape_cast %50 : vector<4x32x128xbf16> to vector<128x128xbf16>
    %c0_39 = arith.constant 0 : index
    %c0_40 = arith.constant 0 : index
    %c0_41 = arith.constant 0 : index
    %52 = vector.load %arg3[%c0_39, %c0_40, %c0_41] : memref<5x128x256xbf16, #tpu.memory_space<vmem>>, vector<1x128x256xbf16>
    %53 = vector.shape_cast %52 : vector<1x128x256xbf16> to vector<128x256xbf16>
    %cst_42 = arith.constant dense<0.000000e+00> : vector<128x256xf32>
    %54 = tpu.matmul %51, %53, %cst_42 {dimension_numbers = #tpu.dot_dimension_numbers<[1], [0], [0], [1], [0, 0, 1, 1], [], []>} : vector<128x128xbf16>, vector<128x256xbf16>, vector<128x256xf32> -> vector<128x256xf32>
    %c1_43 = arith.constant 1 : index
    %c0_44 = arith.constant 0 : index
    %c0_45 = arith.constant 0 : index
    %c0_46 = arith.constant 0 : index
    %55 = vector.load %arg8[%c1_43, %c0_44, %c0_45, %c0_46] : memref<2x6x32x128xbf16, #tpu.memory_space<vmem>>, vector<1x4x32x128xbf16>
    %56 = vector.shape_cast %55 : vector<1x4x32x128xbf16> to vector<4x32x128xbf16>
    %57 = vector.shape_cast %56 : vector<4x32x128xbf16> to vector<128x128xbf16>
    %c1_47 = arith.constant 1 : index
    %c0_48 = arith.constant 0 : index
    %c0_49 = arith.constant 0 : index
    %58 = vector.load %arg3[%c1_47, %c0_48, %c0_49] : memref<5x128x256xbf16, #tpu.memory_space<vmem>>, vector<1x128x256xbf16>
    %59 = vector.shape_cast %58 : vector<1x128x256xbf16> to vector<128x256xbf16>
    %cst_50 = arith.constant dense<0.000000e+00> : vector<128x256xf32>
    %60 = tpu.matmul %57, %59, %cst_50 {dimension_numbers = #tpu.dot_dimension_numbers<[1], [0], [0], [1], [0, 0, 1, 1], [], []>} : vector<128x128xbf16>, vector<128x256xbf16>, vector<128x256xf32> -> vector<128x256xf32>
    %61 = arith.addf %54, %60 : vector<128x256xf32>
    %c0_51 = arith.constant 0 : index
    %c1_52 = arith.constant 1 : index
    %c0_53 = arith.constant 0 : index
    %c0_54 = arith.constant 0 : index
    %62 = vector.load %arg8[%c0_51, %c1_52, %c0_53, %c0_54] : memref<2x6x32x128xbf16, #tpu.memory_space<vmem>>, vector<1x4x32x128xbf16>
    %63 = vector.shape_cast %62 : vector<1x4x32x128xbf16> to vector<4x32x128xbf16>
    %64 = vector.shape_cast %63 : vector<4x32x128xbf16> to vector<128x128xbf16>
    %c2_55 = arith.constant 2 : index
    %c0_56 = arith.constant 0 : index
    %c0_57 = arith.constant 0 : index
    %65 = vector.load %arg3[%c2_55, %c0_56, %c0_57] : memref<5x128x256xbf16, #tpu.memory_space<vmem>>, vector<1x128x256xbf16>
    %66 = vector.shape_cast %65 : vector<1x128x256xbf16> to vector<128x256xbf16>
    %cst_58 = arith.constant dense<0.000000e+00> : vector<128x256xf32>
    %67 = tpu.matmul %64, %66, %cst_58 {dimension_numbers = #tpu.dot_dimension_numbers<[1], [0], [0], [1], [0, 0, 1, 1], [], []>} : vector<128x128xbf16>, vector<128x256xbf16>, vector<128x256xf32> -> vector<128x256xf32>
    %68 = arith.addf %61, %67 : vector<128x256xf32>
    %c1_59 = arith.constant 1 : index
    %c1_60 = arith.constant 1 : index
    %c0_61 = arith.constant 0 : index
    %c0_62 = arith.constant 0 : index
    %69 = vector.load %arg8[%c1_59, %c1_60, %c0_61, %c0_62] : memref<2x6x32x128xbf16, #tpu.memory_space<vmem>>, vector<1x4x32x128xbf16>
    %70 = vector.shape_cast %69 : vector<1x4x32x128xbf16> to vector<4x32x128xbf16>
    %71 = vector.shape_cast %70 : vector<4x32x128xbf16> to vector<128x128xbf16>
    %c3_63 = arith.constant 3 : index
    %c0_64 = arith.constant 0 : index
    %c0_65 = arith.constant 0 : index
    %72 = vector.load %arg3[%c3_63, %c0_64, %c0_65] : memref<5x128x256xbf16, #tpu.memory_space<vmem>>, vector<1x128x256xbf16>
    %73 = vector.shape_cast %72 : vector<1x128x256xbf16> to vector<128x256xbf16>
    %cst_66 = arith.constant dense<0.000000e+00> : vector<128x256xf32>
    %74 = tpu.matmul %71, %73, %cst_66 {dimension_numbers = #tpu.dot_dimension_numbers<[1], [0], [0], [1], [0, 0, 1, 1], [], []>} : vector<128x128xbf16>, vector<128x256xbf16>, vector<128x256xf32> -> vector<128x256xf32>
    %75 = arith.addf %68, %74 : vector<128x256xf32>
    %c0_67 = arith.constant 0 : index
    %c2_68 = arith.constant 2 : index
    %c0_69 = arith.constant 0 : index
    %c0_70 = arith.constant 0 : index
    %76 = vector.load %arg8[%c0_67, %c2_68, %c0_69, %c0_70] : memref<2x6x32x128xbf16, #tpu.memory_space<vmem>>, vector<1x4x32x128xbf16>
    %77 = vector.shape_cast %76 : vector<1x4x32x128xbf16> to vector<4x32x128xbf16>
    %78 = vector.shape_cast %77 : vector<4x32x128xbf16> to vector<128x128xbf16>
    %c4 = arith.constant 4 : index
    %c0_71 = arith.constant 0 : index
    %c0_72 = arith.constant 0 : index
    %79 = vector.load %arg3[%c4, %c0_71, %c0_72] : memref<5x128x256xbf16, #tpu.memory_space<vmem>>, vector<1x128x256xbf16>
    %80 = vector.shape_cast %79 : vector<1x128x256xbf16> to vector<128x256xbf16>
    %cst_73 = arith.constant dense<0.000000e+00> : vector<128x256xf32>
    %81 = tpu.matmul %78, %80, %cst_73 {dimension_numbers = #tpu.dot_dimension_numbers<[1], [0], [0], [1], [0, 0, 1, 1], [], []>} : vector<128x128xbf16>, vector<128x256xbf16>, vector<128x256xf32> -> vector<128x256xf32>
    %82 = arith.addf %75, %81 : vector<128x256xf32>
    %83 = vector.extract_strided_slice %82 {offsets = [0, 0], sizes = [128, 128], strides = [1, 1]} : vector<128x256xf32> to vector<128x128xf32>
    %84 = vector.extract_strided_slice %82 {offsets = [0, 128], sizes = [128, 128], strides = [1, 1]} : vector<128x256xf32> to vector<128x128xf32>
    %85 = arith.maximumf %83, %84 : vector<128x128xf32>
    %c1_74 = arith.constant 1 : index
    %c0_75 = arith.constant 0 : index
    %c0_76 = arith.constant 0 : index
    %c0_77 = arith.constant 0 : index
    %86 = vector.load %arg8[%c1_74, %c0_75, %c0_76, %c0_77] : memref<2x6x32x128xbf16, #tpu.memory_space<vmem>>, vector<1x4x32x128xbf16>
    %87 = vector.shape_cast %86 : vector<1x4x32x128xbf16> to vector<4x32x128xbf16>
    %88 = vector.shape_cast %87 : vector<4x32x128xbf16> to vector<128x128xbf16>
    %c0_78 = arith.constant 0 : index
    %c0_79 = arith.constant 0 : index
    %c0_80 = arith.constant 0 : index
    %89 = vector.load %arg3[%c0_78, %c0_79, %c0_80] : memref<5x128x256xbf16, #tpu.memory_space<vmem>>, vector<1x128x256xbf16>
    %90 = vector.shape_cast %89 : vector<1x128x256xbf16> to vector<128x256xbf16>
    %cst_81 = arith.constant dense<0.000000e+00> : vector<128x256xf32>
    %91 = tpu.matmul %88, %90, %cst_81 {dimension_numbers = #tpu.dot_dimension_numbers<[1], [0], [0], [1], [0, 0, 1, 1], [], []>} : vector<128x128xbf16>, vector<128x256xbf16>, vector<128x256xf32> -> vector<128x256xf32>
    %c0_82 = arith.constant 0 : index
    %c1_83 = arith.constant 1 : index
    %c0_84 = arith.constant 0 : index
    %c0_85 = arith.constant 0 : index
    %92 = vector.load %arg8[%c0_82, %c1_83, %c0_84, %c0_85] : memref<2x6x32x128xbf16, #tpu.memory_space<vmem>>, vector<1x4x32x128xbf16>
    %93 = vector.shape_cast %92 : vector<1x4x32x128xbf16> to vector<4x32x128xbf16>
    %94 = vector.shape_cast %93 : vector<4x32x128xbf16> to vector<128x128xbf16>
    %c1_86 = arith.constant 1 : index
    %c0_87 = arith.constant 0 : index
    %c0_88 = arith.constant 0 : index
    %95 = vector.load %arg3[%c1_86, %c0_87, %c0_88] : memref<5x128x256xbf16, #tpu.memory_space<vmem>>, vector<1x128x256xbf16>
    %96 = vector.shape_cast %95 : vector<1x128x256xbf16> to vector<128x256xbf16>
    %cst_89 = arith.constant dense<0.000000e+00> : vector<128x256xf32>
    %97 = tpu.matmul %94, %96, %cst_89 {dimension_numbers = #tpu.dot_dimension_numbers<[1], [0], [0], [1], [0, 0, 1, 1], [], []>} : vector<128x128xbf16>, vector<128x256xbf16>, vector<128x256xf32> -> vector<128x256xf32>
    %98 = arith.addf %91, %97 : vector<128x256xf32>
    %c1_90 = arith.constant 1 : index
    %c1_91 = arith.constant 1 : index
    %c0_92 = arith.constant 0 : index
    %c0_93 = arith.constant 0 : index
    %99 = vector.load %arg8[%c1_90, %c1_91, %c0_92, %c0_93] : memref<2x6x32x128xbf16, #tpu.memory_space<vmem>>, vector<1x4x32x128xbf16>
    %100 = vector.shape_cast %99 : vector<1x4x32x128xbf16> to vector<4x32x128xbf16>
    %101 = vector.shape_cast %100 : vector<4x32x128xbf16> to vector<128x128xbf16>
    %c2_94 = arith.constant 2 : index
    %c0_95 = arith.constant 0 : index
    %c0_96 = arith.constant 0 : index
    %102 = vector.load %arg3[%c2_94, %c0_95, %c0_96] : memref<5x128x256xbf16, #tpu.memory_space<vmem>>, vector<1x128x256xbf16>
    %103 = vector.shape_cast %102 : vector<1x128x256xbf16> to vector<128x256xbf16>
    %cst_97 = arith.constant dense<0.000000e+00> : vector<128x256xf32>
    %104 = tpu.matmul %101, %103, %cst_97 {dimension_numbers = #tpu.dot_dimension_numbers<[1], [0], [0], [1], [0, 0, 1, 1], [], []>} : vector<128x128xbf16>, vector<128x256xbf16>, vector<128x256xf32> -> vector<128x256xf32>
    %105 = arith.addf %98, %104 : vector<128x256xf32>
    %c0_98 = arith.constant 0 : index
    %c2_99 = arith.constant 2 : index
    %c0_100 = arith.constant 0 : index
    %c0_101 = arith.constant 0 : index
    %106 = vector.load %arg8[%c0_98, %c2_99, %c0_100, %c0_101] : memref<2x6x32x128xbf16, #tpu.memory_space<vmem>>, vector<1x4x32x128xbf16>
    %107 = vector.shape_cast %106 : vector<1x4x32x128xbf16> to vector<4x32x128xbf16>
    %108 = vector.shape_cast %107 : vector<4x32x128xbf16> to vector<128x128xbf16>
    %c3_102 = arith.constant 3 : index
    %c0_103 = arith.constant 0 : index
    %c0_104 = arith.constant 0 : index
    %109 = vector.load %arg3[%c3_102, %c0_103, %c0_104] : memref<5x128x256xbf16, #tpu.memory_space<vmem>>, vector<1x128x256xbf16>
    %110 = vector.shape_cast %109 : vector<1x128x256xbf16> to vector<128x256xbf16>
    %cst_105 = arith.constant dense<0.000000e+00> : vector<128x256xf32>
    %111 = tpu.matmul %108, %110, %cst_105 {dimension_numbers = #tpu.dot_dimension_numbers<[1], [0], [0], [1], [0, 0, 1, 1], [], []>} : vector<128x128xbf16>, vector<128x256xbf16>, vector<128x256xf32> -> vector<128x256xf32>
    %112 = arith.addf %105, %111 : vector<128x256xf32>
    %c1_106 = arith.constant 1 : index
    %c2_107 = arith.constant 2 : index
    %c0_108 = arith.constant 0 : index
    %c0_109 = arith.constant 0 : index
    %113 = vector.load %arg8[%c1_106, %c2_107, %c0_108, %c0_109] : memref<2x6x32x128xbf16, #tpu.memory_space<vmem>>, vector<1x4x32x128xbf16>
    %114 = vector.shape_cast %113 : vector<1x4x32x128xbf16> to vector<4x32x128xbf16>
    %115 = vector.shape_cast %114 : vector<4x32x128xbf16> to vector<128x128xbf16>
    %c4_110 = arith.constant 4 : index
    %c0_111 = arith.constant 0 : index
    %c0_112 = arith.constant 0 : index
    %116 = vector.load %arg3[%c4_110, %c0_111, %c0_112] : memref<5x128x256xbf16, #tpu.memory_space<vmem>>, vector<1x128x256xbf16>
    %117 = vector.shape_cast %116 : vector<1x128x256xbf16> to vector<128x256xbf16>
    %cst_113 = arith.constant dense<0.000000e+00> : vector<128x256xf32>
    %118 = tpu.matmul %115, %117, %cst_113 {dimension_numbers = #tpu.dot_dimension_numbers<[1], [0], [0], [1], [0, 0, 1, 1], [], []>} : vector<128x128xbf16>, vector<128x256xbf16>, vector<128x256xf32> -> vector<128x256xf32>
    %119 = arith.addf %112, %118 : vector<128x256xf32>
    %120 = vector.extract_strided_slice %119 {offsets = [0, 0], sizes = [128, 128], strides = [1, 1]} : vector<128x256xf32> to vector<128x128xf32>
    %121 = vector.extract_strided_slice %119 {offsets = [0, 128], sizes = [128, 128], strides = [1, 1]} : vector<128x256xf32> to vector<128x128xf32>
    %122 = arith.maximumf %120, %121 : vector<128x128xf32>
    %123 = arith.maximumf %85, %122 : vector<128x128xf32>
    %124 = vector.broadcast %1 : vector<1x128xf32> to vector<128x128xf32>
    %125 = arith.addf %123, %124 : vector<128x128xf32>
    %cst_114 = arith.constant 0.000000e+00 : f32
    %126 = vector.broadcast %cst_114 : f32 to vector<128x128xf32>
    %127 = arith.maximumf %125, %126 : vector<128x128xf32>
    %128 = arith.truncf %127 : vector<128x128xf32> to vector<128x128xbf16>
    %129 = vector.extract_strided_slice %128 {offsets = [0, 0], sizes = [32, 128], strides = [1, 1]} : vector<128x128xbf16> to vector<32x128xbf16>
    %130 = vector.extract_strided_slice %128 {offsets = [32, 0], sizes = [32, 128], strides = [1, 1]} : vector<128x128xbf16> to vector<32x128xbf16>
    %131 = vector.extract_strided_slice %128 {offsets = [64, 0], sizes = [32, 128], strides = [1, 1]} : vector<128x128xbf16> to vector<32x128xbf16>
    %132 = vector.extract_strided_slice %128 {offsets = [96, 0], sizes = [32, 128], strides = [1, 1]} : vector<128x128xbf16> to vector<32x128xbf16>
    %133 = tpu.concatenate %129, %130, %131, %132 in 1 : vector<32x128xbf16>, vector<32x128xbf16>, vector<32x128xbf16>, vector<32x128xbf16> -> vector<32x512xbf16>
    %c0_115 = arith.constant 0 : index
    %c0_116 = arith.constant 0 : index
    %134 = vector.load %arg4[%c0_115, %c0_116] : memref<512x128xbf16, #tpu.memory_space<vmem>>, vector<512x128xbf16>
    %cst_117 = arith.constant dense<0.000000e+00> : vector<32x128xf32>
    %135 = tpu.matmul %133, %134, %cst_117 {dimension_numbers = #tpu.dot_dimension_numbers<[1], [0], [0], [1], [0, 0, 1, 1], [], []>} : vector<32x512xbf16>, vector<512x128xbf16>, vector<32x128xf32> -> vector<32x128xf32>
    %136 = vector.broadcast %2 : vector<1x128xf32> to vector<32x128xf32>
    %137 = arith.addf %135, %136 : vector<32x128xf32>
    %cst_118 = arith.constant 0.000000e+00 : f32
    %138 = vector.broadcast %cst_118 : f32 to vector<32x128xf32>
    %139 = arith.maximumf %137, %138 : vector<32x128xf32>
    %140 = arith.truncf %139 : vector<32x128xf32> to vector<32x128xbf16>
    %c0_119 = arith.constant 0 : index
    %c0_120 = arith.constant 0 : index
    %141 = vector.load %arg5[%c0_119, %c0_120] : memref<128x128xbf16, #tpu.memory_space<vmem>>, vector<128x128xbf16>
    %cst_121 = arith.constant dense<0.000000e+00> : vector<32x128xf32>
    %142 = tpu.matmul %140, %141, %cst_121 {dimension_numbers = #tpu.dot_dimension_numbers<[1], [0], [0], [1], [0, 0, 1, 1], [], []>} : vector<32x128xbf16>, vector<128x128xbf16>, vector<32x128xf32> -> vector<32x128xf32>
    %143 = vector.broadcast %3 : vector<1x128xf32> to vector<32x128xf32>
    %144 = arith.addf %142, %143 : vector<32x128xf32>
    %145 = tpu.iota {dimensions = array<i32: 1>} : vector<32x128xi32>
    %c10_i32 = arith.constant 10 : i32
    %146 = vector.broadcast %c10_i32 : i32 to vector<32x128xi32>
    %147 = arith.cmpi slt, %145, %146 : vector<32x128xi32>
    %cst_122 = arith.constant -1.000000e+30 : f32
    %148 = vector.broadcast %cst_122 : f32 to vector<32x128xf32>
    %149 = arith.select %147, %144, %148 : vector<32x128xi1>, vector<32x128xf32>
    %cst_123 = arith.constant dense<0xFF800000> : vector<32xf32>
    %150 = vector.multi_reduction <maximumf>, %149, %cst_123 [1] : vector<32x128xf32> to vector<32xf32>
    %151 = vector.shape_cast %150 : vector<32xf32> to vector<32x1xf32>
    %152 = vector.broadcast %151 : vector<32x1xf32> to vector<32x128xf32>
    %153 = arith.subf %149, %152 : vector<32x128xf32>
    %154 = math.exp %153 : vector<32x128xf32>
    %cst_124 = arith.constant dense<0.000000e+00> : vector<32xf32>
    %155 = vector.multi_reduction <add>, %154, %cst_124 [1] : vector<32x128xf32> to vector<32xf32>
    %156 = vector.shape_cast %155 : vector<32xf32> to vector<32x1xf32>
    %157 = math.log %156 : vector<32x1xf32>
    %158 = vector.broadcast %157 : vector<32x1xf32> to vector<32x128xf32>
    %159 = arith.subf %153, %158 : vector<32x128xf32>
    %c0_125 = arith.constant 0 : index
    %c0_126 = arith.constant 0 : index
    %160 = vector.load %arg7[%c0_125, %c0_126] : memref<32x128xf32, #tpu.memory_space<vmem>>, vector<32x128xf32>
    tpu.vector_store %arg7[%c0_125, %c0_126], %159 {strides = array<i32>} : memref<32x128xf32, #tpu.memory_space<vmem>>, vector<32x128xf32>,
    return
  }
  func.func @transform_0(%arg0: i32) -> (i32, i32, i32, i32) {
    %c0_i32 = arith.constant 0 : i32
    %c0_i32_0 = arith.constant 0 : i32
    %c0_i32_1 = arith.constant 0 : i32
    %c0_i32_2 = arith.constant 0 : i32
    return %arg0, %c0_i32, %c0_i32_0, %c0_i32_1 : i32, i32, i32, i32
  }
  func.func @transform_1(%arg0: i32) -> (i32, i32) {
    %c0_i32 = arith.constant 0 : i32
    %c0_i32_0 = arith.constant 0 : i32
    %c0_i32_1 = arith.constant 0 : i32
    return %c0_i32, %c0_i32_0 : i32, i32
  }
  func.func @transform_2(%arg0: i32) -> (i32, i32, i32) {
    %c0_i32 = arith.constant 0 : i32
    %c0_i32_0 = arith.constant 0 : i32
    %c0_i32_1 = arith.constant 0 : i32
    %c0_i32_2 = arith.constant 0 : i32
    return %c0_i32, %c0_i32_0, %c0_i32_1 : i32, i32, i32
  }
  func.func @transform_3(%arg0: i32) -> (i32, i32) {
    %c0_i32 = arith.constant 0 : i32
    %c0_i32_0 = arith.constant 0 : i32
    %c0_i32_1 = arith.constant 0 : i32
    return %c0_i32, %c0_i32_0 : i32, i32
  }
  func.func @transform_4(%arg0: i32) -> (i32, i32) {
    %c0_i32 = arith.constant 0 : i32
    %c0_i32_0 = arith.constant 0 : i32
    %c0_i32_1 = arith.constant 0 : i32
    return %c0_i32, %c0_i32_0 : i32, i32
  }
  func.func @transform_5(%arg0: i32) -> (i32, i32) {
    %c0_i32 = arith.constant 0 : i32
    %c0_i32_0 = arith.constant 0 : i32
    %c0_i32_1 = arith.constant 0 : i32
    return %c0_i32, %c0_i32_0 : i32, i32
  }
  func.func @transform_6(%arg0: i32) -> (i32, i32) {
    %c0_i32 = arith.constant 0 : i32
    %c0_i32_0 = arith.constant 0 : i32
    return %arg0, %c0_i32 : i32, i32
  }
}

</mosaic_0001>

<llo_original>
// kernel: net_forward.1
$region0: #{net_forward.1}
  #allocation0 [shape = 'u32[]', space=smem, size = 0x4, offset = 0x4, fixed_abs, tag = 'smem constant byte address 0x4 - core index']
  #allocation1 [shape = 'u32[144,128]{1,0:T(1,128)}', space=vmem, size = 0x12000, scoped, tag = 'internal scratch']
  #allocation2 [shape = 'bf16[2,6,32,128]{3,2,1,0:T(16,128)(2,1)}', space=vmem, size = 0x18000, scoped, tag = 'scratch operand']
  %s0 = inlined_call_operand.vmem [shape: bf16[2,4,192,140], index: 0, kind: input, shape index: {}]
  %s1 = inlined_call_operand.vmem [shape: bf16[140,256], index: 1, kind: input, shape index: {}]
  %s2 = inlined_call_operand.vmem [shape: bf16[5,128,256], index: 2, kind: input, shape index: {}]
  %s3 = inlined_call_operand.vmem [shape: bf16[512,128], index: 3, kind: input, shape index: {}]
  %s4 = inlined_call_operand.vmem [shape: bf16[128,128], index: 4, kind: input, shape index: {}]
  %s5 = inlined_call_operand.vmem [shape: f32[4,128], index: 5, kind: input, shape index: {}]
  %s6 = inlined_call_operand.vmem [shape: f32[64,128], index: 6, kind: output, shape index: {}]
  %s7 = sld [smem:[#allocation0]]
  $region57: #{net_forward.1} parent=0
    _
  %s9 = ssub.s32 1, %s7
  %s10 = scalar_select 0, %s9, %s7
  loop: start=0, step=1, limit=4
  $region2: #{net_forward.1} parent=0 // loop_pre_header
    _
  $region3: #{net_forward.1} parent=0 // loop_header
    %s12 = sphi 0, %s16
    %p13 = scmp.ge.s32.totalorder %s12, 4
    %s22 = sphi 0, %s24
    %s25 = sphi 0, %s22
    %s26 = sphi 0, %s25
    %s42 = sphi 0, %s26
    %s46 = sphi 0, %s46
    %s48 = sphi 0, %s46
    %s49 = sphi 0, %s48
    %s63 = sphi 0, %s49
    %s67 = sphi 0, %s67
    %s69 = sphi 0, %s67
    %s70 = sphi 0, %s69
    %s84 = sphi 0, %s70
    %s88 = sphi 0, %s88
    %s90 = sphi 0, %s88
    %s91 = sphi 0, %s90
    %s105 = sphi 0, %s91
    %s109 = sphi 0, %s109
    %s111 = sphi 0, %s109
    %s112 = sphi 0, %s111
    %s126 = sphi 0, %s112
    %s130 = sphi 0, %s130
    %s132 = sphi 0, %s130
    %s133 = sphi 0, %s132
    %s147 = sphi 0, %s133
    %s153 = sphi 0, %s155
    %s156 = sphi 0, %s153
    %s157 = sphi 0, %s156
    %s173 = sphi 0, %s157
  $region4: #{net_forward.1} parent=0 // loop_header_branch
    %15 = sbr.rel (%p13) target = $region8
  $region5: #{net_forward.1} parent=0 // loop_body
    %s17 = ssub.s32 %s12, 1
    %s18 = ssub.s32 %s12, 2
    %s19 = sadd.s32 %s12, 1
    %s20 = ssub.s32 %s12, %s19
    %p21 = scmp.eq.s32.totalorder %s20, 0
    %s23 = sadd.s32 %s22, 1
    %s24 = scalar_select %p21, %s22, %s23
    %p27 = pneg %p21
    %p28 = scmp.eq.s32.totalorder %s12, 1
    %p29 = por %p27, %p28
    %p30 = scmp.ne.s32.totalorder %s22, %s25
    %p31 = scmp.eq.s32.totalorder %s12, 0
    %p32 = por %p30, %p31
    %p33 = scmp.ne.s32.totalorder %s22, %s25
    %p34 = scmp.eq.s32.totalorder %s17, 1
    %p35 = por %p33, %p34
    %p36 = scmp.ne.s32.totalorder %s25, %s26
    %p37 = scmp.eq.s32.totalorder %s17, 0
    %p38 = por %p36, %p37
    %p39 = scmp.ne.s32.totalorder %s25, %s26
    %p40 = scmp.eq.s32.totalorder %s18, 1
    %p41 = por %p39, %p40
    %p43 = scmp.ne.s32.totalorder %s26, %s42
    %p44 = scmp.eq.s32.totalorder %s18, 0
    %p45 = por %p43, %p44
    %s47 = sadd.s32 %s46, 1
    %p50 = scmp.eq.s32.totalorder %s12, 1
    %p51 = scmp.ne.s32.totalorder %s46, %s48
    %p52 = scmp.eq.s32.totalorder %s12, 0
    %p53 = por %p51, %p52
    %p54 = scmp.ne.s32.totalorder %s46, %s48
    %p55 = scmp.eq.s32.totalorder %s17, 1
    %p56 = por %p54, %p55
    %p57 = scmp.ne.s32.totalorder %s48, %s49
    %p58 = scmp.eq.s32.totalorder %s17, 0
    %p59 = por %p57, %p58
    %p60 = scmp.ne.s32.totalorder %s48, %s49
    %p61 = scmp.eq.s32.totalorder %s18, 1
    %p62 = por %p60, %p61
    %p64 = scmp.ne.s32.totalorder %s49, %s63
    %p65 = scmp.eq.s32.totalorder %s18, 0
    %p66 = por %p64, %p65
    %s68 = sadd.s32 %s67, 1
    %p71 = scmp.eq.s32.totalorder %s12, 1
    %p72 = scmp.ne.s32.totalorder %s67, %s69
    %p73 = scmp.eq.s32.totalorder %s12, 0
    %p74 = por %p72, %p73
    %p75 = scmp.ne.s32.totalorder %s67, %s69
    %p76 = scmp.eq.s32.totalorder %s17, 1
    %p77 = por %p75, %p76
    %p78 = scmp.ne.s32.totalorder %s69, %s70
    %p79 = scmp.eq.s32.totalorder %s17, 0
    %p80 = por %p78, %p79
    %p81 = scmp.ne.s32.totalorder %s69, %s70
    %p82 = scmp.eq.s32.totalorder %s18, 1
    %p83 = por %p81, %p82
    %p85 = scmp.ne.s32.totalorder %s70, %s84
    %p86 = scmp.eq.s32.totalorder %s18, 0
    %p87 = por %p85, %p86
    %s89 = sadd.s32 %s88, 1
    %p92 = scmp.eq.s32.totalorder %s12, 1
    %p93 = scmp.ne.s32.totalorder %s88, %s90
    %p94 = scmp.eq.s32.totalorder %s12, 0
    %p95 = por %p93, %p94
    %p96 = scmp.ne.s32.totalorder %s88, %s90
    %p97 = scmp.eq.s32.totalorder %s17, 1
    %p98 = por %p96, %p97
    %p99 = scmp.ne.s32.totalorder %s90, %s91
    %p100 = scmp.eq.s32.totalorder %s17, 0
    %p101 = por %p99, %p100
    %p102 = scmp.ne.s32.totalorder %s90, %s91
    %p103 = scmp.eq.s32.totalorder %s18, 1
    %p104 = por %p102, %p103
    %p106 = scmp.ne.s32.totalorder %s91, %s105
    %p107 = scmp.eq.s32.totalorder %s18, 0
    %p108 = por %p106, %p107
    %s110 = sadd.s32 %s109, 1
    %p113 = scmp.eq.s32.totalorder %s12, 1
    %p114 = scmp.ne.s32.totalorder %s109, %s111
    %p115 = scmp.eq.s32.totalorder %s12, 0
    %p116 = por %p114, %p115
    %p117 = scmp.ne.s32.totalorder %s109, %s111
    %p118 = scmp.eq.s32.totalorder %s17, 1
    %p119 = por %p117, %p118
    %p120 = scmp.ne.s32.totalorder %s111, %s112
    %p121 = scmp.eq.s32.totalorder %s17, 0
    %p122 = por %p120, %p121
    %p123 = scmp.ne.s32.totalorder %s111, %s112
    %p124 = scmp.eq.s32.totalorder %s18, 1
    %p125 = por %p123, %p124
    %p127 = scmp.ne.s32.totalorder %s112, %s126
    %p128 = scmp.eq.s32.totalorder %s18, 0
    %p129 = por %p127, %p128
    %s131 = sadd.s32 %s130, 1
    %p134 = scmp.eq.s32.totalorder %s12, 1
    %p135 = scmp.ne.s32.totalorder %s130, %s132
    %p136 = scmp.eq.s32.totalorder %s12, 0
    %p137 = por %p135, %p136
    %p138 = scmp.ne.s32.totalorder %s130, %s132
    %p139 = scmp.eq.s32.totalorder %s17, 1
    %p140 = por %p138, %p139
    %p141 = scmp.ne.s32.totalorder %s132, %s133
    %p142 = scmp.eq.s32.totalorder %s17, 0
    %p143 = por %p141, %p142
    %p144 = scmp.ne.s32.totalorder %s132, %s133
    %p145 = scmp.eq.s32.totalorder %s18, 1
    %p146 = por %p144, %p145
    %p148 = scmp.ne.s32.totalorder %s133, %s147
    %p149 = scmp.eq.s32.totalorder %s18, 0
    %p150 = por %p148, %p149
    %s151 = ssub.s32 %s12, %s19
    %p152 = scmp.eq.s32.totalorder %s151, 0
    %s154 = sadd.s32 %s153, 1
    %s155 = scalar_select %p152, %s153, %s154
    %p158 = pneg %p152
    %p159 = scmp.eq.s32.totalorder %s12, 1
    %p160 = por %p158, %p159
    %p161 = scmp.ne.s32.totalorder %s153, %s156
    %p162 = scmp.eq.s32.totalorder %s12, 0
    %p163 = por %p161, %p162
    %p164 = scmp.ne.s32.totalorder %s153, %s156
    %p165 = scmp.eq.s32.totalorder %s17, 1
    %p166 = por %p164, %p165
    %p167 = scmp.ne.s32.totalorder %s156, %s157
    %p168 = scmp.eq.s32.totalorder %s17, 0
    %p169 = por %p167, %p168
    %p170 = scmp.ne.s32.totalorder %s156, %s157
    %p171 = scmp.eq.s32.totalorder %s18, 1
    %p172 = por %p170, %p171
    %p174 = scmp.ne.s32.totalorder %s157, %s173
    %p175 = scmp.eq.s32.totalorder %s18, 0
    %p176 = por %p174, %p175
    %p177 = scmp.le.s32.totalorder 1, %s12
    %p178 = scmp.lt.s32.totalorder %s12, 3
    %p179 = pnand %p177, %p178
    %p180 = pneg %p179
    // Predicated region
    $region9: #{net_forward.1} parent=5 // pred_check
      _
    $region10: #{net_forward.1} parent=5 // pred_check_branch
      %182 = sbr.rel (%p179) target = $region12
    $region11: #{net_forward.1} parent=5 // pred_region
      %s183 = ssub.s32 %s12, 1
      // Predicated region
      $region13: #{net_forward.1} parent=11 // pred_check
        %p184 = pneg %p59
      $region14: #{net_forward.1} parent=11 // pred_check_branch
        %186 = sbr.rel (%p184) target = $region16
      $region15: #{net_forward.1} parent=11 // pred_region
        _
      $region16: #{net_forward.1} parent=11 // pred_fallthru
        _
      // Predicated region
      $region17: #{net_forward.1} parent=11 // pred_check
        %p187 = pneg %p80
      $region18: #{net_forward.1} parent=11 // pred_check_branch
        %189 = sbr.rel (%p187) target = $region20
      $region19: #{net_forward.1} parent=11 // pred_region
        _
      $region20: #{net_forward.1} parent=11 // pred_fallthru
        _
      // Predicated region
      $region21: #{net_forward.1} parent=11 // pred_check
        %p190 = pneg %p101
      $region22: #{net_forward.1} parent=11 // pred_check_branch
        %192 = sbr.rel (%p190) target = $region24
      $region23: #{net_forward.1} parent=11 // pred_region
        _
      $region24: #{net_forward.1} parent=11 // pred_fallthru
        _
      // Predicated region
      $region25: #{net_forward.1} parent=11 // pred_check
        %p193 = pneg %p122
      $region26: #{net_forward.1} parent=11 // pred_check_branch
        %195 = sbr.rel (%p193) target = $region28
      $region27: #{net_forward.1} parent=11 // pred_region
        _
      $region28: #{net_forward.1} parent=11 // pred_fallthru
        _
      // Predicated region
      $region29: #{net_forward.1} parent=11 // pred_check
        %p196 = pneg %p143
      $region30: #{net_forward.1} parent=11 // pred_check_branch
        %198 = sbr.rel (%p196) target = $region32
      $region31: #{net_forward.1} parent=11 // pred_region
        _
      $region32: #{net_forward.1} parent=11 // pred_fallthru
        _
    $region12: #{net_forward.1} parent=5 // pred_fallthru
      _
    %p199 = scmp.lt.s32.totalorder %s12, 2
    // Predicated region
    $region33: #{net_forward.1} parent=5 // pred_check
      %p200 = pneg %p199
    $region34: #{net_forward.1} parent=5 // pred_check_branch
      %202 = sbr.rel (%p200) target = $region36
    $region35: #{net_forward.1} parent=5 // pred_region
      // Predicated region
      $region37: #{net_forward.1} parent=35 // pred_check
        %p203 = pneg %p32
      $region38: #{net_forward.1} parent=35 // pred_check_branch
        %205 = sbr.rel (%p203) target = $region40
      $region39: #{net_forward.1} parent=35 // pred_region
        %p206 = scmp.lt.s32.totalorder %s12, 1
        %s207 = scalar_select %p206, %s12, 1
        %s208 = smul.addr %s207, 192
        %s209 = smul.addr %s208, 4
        %s210 = scalar_lea.vmem %s0, %s209
      $region40: #{net_forward.1} parent=35 // pred_fallthru
        _
    $region36: #{net_forward.1} parent=5 // pred_fallthru
      _
    %p211 = scmp.le.s32.totalorder 1, %s12
    %p212 = scmp.lt.s32.totalorder %s12, 3
    %p213 = pnand %p211, %p212
    %p214 = pneg %p213
    // Predicated region
    $region41: #{net_forward.1} parent=5 // pred_check
      _
    $region42: #{net_forward.1} parent=5 // pred_check_branch
      %216 = sbr.rel (%p213) target = $region44
    $region43: #{net_forward.1} parent=5 // pred_region
      %s217 = ssub.s32 %s12, 1
      %p218 = scmp.lt.s32.totalorder %s17, 1
      %s219 = scalar_select %p218, %s17, 1
      %s220 = smul.addr %s219, 192
      %s221 = smul.addr %s220, 4
      %s222 = scalar_lea.vmem %s0, %s221
      %p223 = pneg %p38
      %p224 = pneg %p35
      %p225 = pneg %p59
      %p226 = pneg %p56
      %p227 = pneg %p80
      %p228 = pneg %p77
      %p229 = pneg %p101
      %p230 = pneg %p98
      %p231 = pneg %p122
      %p232 = pneg %p119
      %p233 = pneg %p143
      %p234 = pneg %p140
      %p235 = pneg %p169
      %p236 = pneg %p166
      %s237 = smul.u32 4, %s17
      %p238 = scmp.lt.s32.totalorder %s237, 7
      %s239 = scalar_select %p238, %s237, 7
      %s240 = smul.addr %s239, 8
      %s241 = scalar_lea.vmem %s6, %s240
      %p242 = scmp.lt.s32.totalorder %s17, 1
      %s243 = scalar_select %p242, %s17, 1
      %s244 = smul.addr %s243, 192
      %s245 = smul.addr %s244, 4
      %s246 = scalar_lea.vmem %s0, %s245
      %s247 = smul.u32 4, %s17
      %p248 = scmp.lt.s32.totalorder %s247, 7
      %s249 = scalar_select %p248, %s247, 7
      %s250 = smul.addr %s249, 8
      %s251 = scalar_lea.vmem %s6, %s250
      %s252 = smul.u32 4, %s17
      %v254 = vld [vmem:[%s5] sm:$0x1]
      %v255 = vld [vmem:[%s5 + $0x1] sm:$0x1]
      %v256 = vld [vmem:[%s5 + $0x2] sm:$0x1]
      %v257 = vld [vmem:[%s5 + $0x3] sm:$0x1]
      %v258 = vld [vmem:[%s1] sm:$0xff]
      %v259 = vld [vmem:[%s1 + $0x8] sm:$0xff]
      %v260 = vld [vmem:[%s1 + $0x10] sm:$0xff]
      %v261 = vld [vmem:[%s1 + $0x18] sm:$0xff]
      %v262 = vld [vmem:[%s1 + $0x20] sm:$0xff]
      %v263 = vld [vmem:[%s1 + $0x28] sm:$0xff]
      %v264 = vld [vmem:[%s1 + $0x30] sm:$0xff]
      %v265 = vld [vmem:[%s1 + $0x38] sm:$0xff]
      %v266 = vld [vmem:[%s1 + $0x40] sm:$0xff]
      %v267 = vld [vmem:[%s1 + $0x48] sm:$0xff]
      %v268 = vld [vmem:[%s1 + $0x50] sm:$0xff]
      %v269 = vld [vmem:[%s1 + $0x58] sm:$0xff]
      %v270 = vld [vmem:[%s1 + $0x60] sm:$0xff]
      %v271 = vld [vmem:[%s1 + $0x68] sm:$0xff]
      %v272 = vld [vmem:[%s1 + $0x70] sm:$0xff]
      %v273 = vld [vmem:[%s1 + $0x78] sm:$0xff]
      %v274 = vld [vmem:[%s1 + $0x80] sm:$0xff]
      %v275 = vld [vmem:[%s1 + $0x88] sm:$0x33]
      %v276 = vld [vmem:[%s246] sm:$0xff]
      %v277 = vld [vmem:[%s246 + $0x8] sm:$0xff]
      %v278 = vld [vmem:[%s246 + $0x10] sm:$0xff]
      %v279 = vld [vmem:[%s246 + $0x18] sm:$0xff]
      %v280 = vld [vmem:[%s246 + $0x20] sm:$0xff]
      %v281 = vld [vmem:[%s246 + $0x28] sm:$0xff]
      %v282 = vld [vmem:[%s246 + $0x30] sm:$0xff]
      %v283 = vld [vmem:[%s246 + $0x38] sm:$0xff]
      %v284 = vld [vmem:[%s246 + $0x40] sm:$0xff]
      %v285 = vld [vmem:[%s246 + $0x48] sm:$0xff]
      %v286 = vld [vmem:[%s246 + $0x50] sm:$0xff]
      %v287 = vld [vmem:[%s246 + $0x58] sm:$0xff]
      %v288 = vld [vmem:[%s246 + $0x60] sm:$0xff]
      %v289 = vld [vmem:[%s246 + $0x68] sm:$0xff]
      %v290 = vld [vmem:[%s246 + $0x70] sm:$0xff]
      %v291 = vld [vmem:[%s246 + $0x78] sm:$0xff]
      %v292 = vld [vmem:[%s246 + $0x80] sm:$0xff]
      %v293 = vld [vmem:[%s246 + $0x88] sm:$0xff]
      %v294 = vld [vmem:[%s246 + $0x90] sm:$0xff]
      %v295 = vld [vmem:[%s246 + $0x98] sm:$0xff]
      %v296 = vld [vmem:[%s246 + $0xa0] sm:$0xff]
      %v297 = vld [vmem:[%s246 + $0xa8] sm:$0xff]
      %v298 = vld [vmem:[%s246 + $0xb0] sm:$0xff]
      %v299 = vld [vmem:[%s246 + $0xb8] sm:$0xff]
      %v324 = vunpack.c.l.b16 %v276
      %v325 = vunpack.c.h.b16 %v276
      %v326 = vunpack.c.l.b16 %v277
      %v327 = vunpack.c.h.b16 %v277
      %v328 = vunpack.c.l.b16 %v278
      %v329 = vunpack.c.h.b16 %v278
      %v330 = vunpack.c.l.b16 %v279
      %v331 = vunpack.c.h.b16 %v279
      %v332 = vunpack.c.l.b16 %v280
      %v333 = vunpack.c.h.b16 %v280
      %v334 = vunpack.c.l.b16 %v281
      %v335 = vunpack.c.h.b16 %v281
      %v336 = vunpack.c.l.b16 %v282
      %v337 = vunpack.c.h.b16 %v282
      %v338 = vunpack.c.l.b16 %v283
      %v339 = vunpack.c.h.b16 %v283
      %v340 = vunpack.c.l.b16 %v284
      %v341 = vunpack.c.h.b16 %v284
      %v342 = vunpack.c.l.b16 %v285
      %v343 = vunpack.c.h.b16 %v285
      %v344 = vunpack.c.l.b16 %v286
      %v345 = vunpack.c.h.b16 %v286
      %v346 = vunpack.c.l.b16 %v287
      %v347 = vunpack.c.h.b16 %v287
      %v348 = vunpack.c.l.b16 %v288
      %v349 = vunpack.c.h.b16 %v288
      %v350 = vunpack.c.l.b16 %v289
      %v351 = vunpack.c.h.b16 %v289
      %v352 = vunpack.c.l.b16 %v290
      %v353 = vunpack.c.h.b16 %v290
      %v354 = vunpack.c.l.b16 %v291
      %v355 = vunpack.c.h.b16 %v291
      %v356 = vunpack.c.l.b16 %v292
      %v357 = vunpack.c.h.b16 %v292
      %v358 = vunpack.c.l.b16 %v293
      %v359 = vunpack.c.h.b16 %v293
      %v360 = vunpack.c.l.b16 %v294
      %v361 = vunpack.c.h.b16 %v294
      %v362 = vunpack.c.l.b16 %v295
      %v363 = vunpack.c.h.b16 %v295
      %v364 = vunpack.c.l.b16 %v296
      %v365 = vunpack.c.h.b16 %v296
      %v366 = vunpack.c.l.b16 %v297
      %v367 = vunpack.c.h.b16 %v297
      %v368 = vunpack.c.l.b16 %v298
      %v369 = vunpack.c.h.b16 %v298
      %v370 = vunpack.c.l.b16 %v299
      %v371 = vunpack.c.h.b16 %v299
      %v372 = vpack.c.b16 %v326, %v324
      %v373 = vpack.c.b16 %v327, %v325
      %v374 = vpack.c.b16 %v330, %v328
      %v375 = vpack.c.b16 %v331, %v329
      %v376 = vpack.c.b16 %v334, %v332
      %v377 = vpack.c.b16 %v335, %v333
      %v378 = vpack.c.b16 %v338, %v336
      %v379 = vpack.c.b16 %v339, %v337
      %v380 = vpack.c.b16 %v342, %v340
      %v381 = vpack.c.b16 %v343, %v341
      %v382 = vpack.c.b16 %v346, %v344
      %v383 = vpack.c.b16 %v347, %v345
      %v384 = vpack.c.b16 %v350, %v348
      %v385 = vpack.c.b16 %v351, %v349
      %v386 = vpack.c.b16 %v354, %v352
      %v387 = vpack.c.b16 %v355, %v353
      %v388 = vpack.c.b16 %v358, %v356
      %v389 = vpack.c.b16 %v359, %v357
      %v390 = vpack.c.b16 %v362, %v360
      %v391 = vpack.c.b16 %v363, %v361
      %v392 = vpack.c.b16 %v366, %v364
      %v393 = vpack.c.b16 %v367, %v365
      %v394 = vpack.c.b16 %v370, %v368
      %v395 = vpack.c.b16 %v371, %v369
      %v426 = vunpack.c.l.b16 %v258
      %v427 = vunpack.c.h.b16 %v258
      %v428 = vunpack.c.l.b16 %v259
      %v429 = vunpack.c.h.b16 %v259
      %v430 = vunpack.c.l.b16 %v260
      %v431 = vunpack.c.h.b16 %v260
      %v432 = vunpack.c.l.b16 %v261
      %v433 = vunpack.c.h.b16 %v261
      %v434 = vunpack.c.l.b16 %v262
      %v435 = vunpack.c.h.b16 %v262
      %v436 = vunpack.c.l.b16 %v263
      %v437 = vunpack.c.h.b16 %v263
      %v438 = vunpack.c.l.b16 %v264
      %v439 = vunpack.c.h.b16 %v264
      %v440 = vunpack.c.l.b16 %v265
      %v441 = vunpack.c.h.b16 %v265
      %v442 = vunpack.c.l.b16 %v266
      %v443 = vunpack.c.h.b16 %v266
      %v444 = vunpack.c.l.b16 %v267
      %v445 = vunpack.c.h.b16 %v267
      %v446 = vunpack.c.l.b16 %v268
      %v447 = vunpack.c.h.b16 %v268
      %v448 = vunpack.c.l.b16 %v269
      %v449 = vunpack.c.h.b16 %v269
      %v450 = vunpack.c.l.b16 %v270
      %v451 = vunpack.c.h.b16 %v270
      %v452 = vunpack.c.l.b16 %v271
      %v453 = vunpack.c.h.b16 %v271
      %v454 = vunpack.c.l.b16 %v272
      %v455 = vunpack.c.h.b16 %v272
      %v456 = vunpack.c.l.b16 %v273
      %v457 = vunpack.c.h.b16 %v273
      %v458 = vunpack.c.l.b16 %v274
      %v459 = vunpack.c.h.b16 %v274
      %v460 = vunpack.c.l.b16 %v275
      %v461 = vunpack.c.h.b16 %v275
      %v462 = vpack.c.b16 %v428, %v426
      %v463 = vpack.c.b16 %v429, %v427
      %v464 = vpack.c.b16 %v432, %v430
      %v465 = vpack.c.b16 %v433, %v431
      %v466 = vpack.c.b16 %v436, %v434
      %v467 = vpack.c.b16 %v437, %v435
      %v468 = vpack.c.b16 %v440, %v438
      %v469 = vpack.c.b16 %v441, %v439
      %v470 = vpack.c.b16 %v444, %v442
      %v471 = vpack.c.b16 %v445, %v443
      %v472 = vpack.c.b16 %v448, %v446
      %v473 = vpack.c.b16 %v449, %v447
      %v474 = vpack.c.b16 %v452, %v450
      %v475 = vpack.c.b16 %v453, %v451
      %v476 = vpack.c.b16 %v456, %v454
      %v477 = vpack.c.b16 %v457, %v455
      %v478 = vpack.c.b16 %v460, %v458
      %v479 = vpack.c.b16 %v461, %v459
      %vm496 = vcmask 97280
      %v498 = vsel %vm496, %v373, 0
      %v501 = vsel %vm496, %v375, 0
      %v504 = vsel %vm496, %v377, 0
      %v507 = vsel %vm496, %v379, 0
      %v510 = vsel %vm496, %v381, 0
      %v513 = vsel %vm496, %v383, 0
      %v516 = vsel %vm496, %v385, 0
      %v519 = vsel %vm496, %v387, 0
      %v522 = vsel %vm496, %v389, 0
      %v525 = vsel %vm496, %v391, 0
      %v528 = vsel %vm496, %v393, 0
      %v531 = vsel %vm496, %v395, 0
      %vm533 = vcmask 1045504
      %v535 = vsel %vm533, %v478, 0
      %v538 = vsel %vm533, %v479, 0
      %540 = vmatprep.subr.bf16.mxu0 %v463
      %541 = vmatpush1.bf16.msra.mxu0 %v462
      %542 = vmatprep.subr.bf16.mxu0 %v465
      %543 = vmatpush1.bf16.msra.mxu0 %v464
      %544 = vmatprep.subr.bf16.mxu0 %v467
      %545 = vmatpush1.bf16.msra.mxu0 %v466
      %546 = vmatprep.subr.bf16.mxu0 %v469
      %547 = vmatpush1.bf16.msra.mxu0 %v468
      %548 = vmatprep.subr.bf16.mxu0 %v471
      %549 = vmatpush1.bf16.msra.mxu0 %v470
      %550 = vmatprep.subr.bf16.mxu0 %v473
      %551 = vmatpush1.bf16.msra.mxu0 %v472
      %552 = vmatprep.subr.bf16.mxu0 %v475
      %553 = vmatpush1.bf16.msra.mxu0 %v474
      %554 = vmatprep.subr.bf16.mxu0 %v477
      %555 = vmatpush1.bf16.msra.mxu0 %v476
      %556 = vmatprep.subr.bf16.mxu0 %v538
      %557 = vmatpush1.bf16.msra.mxu0 %v535
      %558 = vmatprep.subr.bf16.mxu0 0
      %559 = vmatpush1.bf16.msra.mxu0 0
      %560 = vmatprep.subr.bf16.mxu0 0
      %561 = vmatpush1.bf16.msra.mxu0 0
      %562 = vmatprep.subr.bf16.mxu0 0
      %563 = vmatpush1.bf16.msra.mxu0 0
      %564 = vmatprep.subr.bf16.mxu0 0
      %565 = vmatpush1.bf16.msra.mxu0 0
      %566 = vmatprep.subr.bf16.mxu0 0
      %567 = vmatpush1.bf16.msra.mxu0 0
      %568 = vmatprep.subr.bf16.mxu0 0
      %569 = vmatpush1.bf16.msra.mxu0 0
      %570 = vmatprep.subr.bf16.mxu0 0
      %571 = vmatpush1.bf16.msra.mxu0 0
      %572 = vmatprep.mubr.bf16.mxu0 %v498
      %573 = vmatmul.mubr.bf16.gmra.mrb[0].mxu0 %v372
      %v574 = vpop.f32.mrb[0].mxu0
      %v575 = vadd.f32 0.0, %v574
      %v576 = vpop.f32.mrb[0].mxu0
      %v577 = vadd.f32 0.0, %v576
      %v578 = vpop.f32.mrb[0].mxu0
      %v579 = vadd.f32 0.0, %v578
      %v580 = vpop.f32.mrb[0].mxu0
      %v581 = vadd.f32 0.0, %v580
      %582 = vmatprep.mubr.bf16.mxu0 %v501
      %583 = vmatmul.mubr.bf16.gmra.mrb[0].mxu0 %v374
      %v584 = vpop.f32.mrb[0].mxu0
      %v585 = vadd.f32 0.0, %v584
      %v586 = vpop.f32.mrb[0].mxu0
      %v587 = vadd.f32 0.0, %v586
      %v588 = vpop.f32.mrb[0].mxu0
      %v589 = vadd.f32 0.0, %v588
      %v590 = vpop.f32.mrb[0].mxu0
      %v591 = vadd.f32 0.0, %v590
      %592 = vmatprep.mubr.bf16.mxu0 %v504
      %593 = vmatmul.mubr.bf16.gmra.mrb[0].mxu0 %v376
      %v594 = vpop.f32.mrb[0].mxu0
      %v595 = vadd.f32 0.0, %v594
      %v596 = vpop.f32.mrb[0].mxu0
      %v597 = vadd.f32 0.0, %v596
      %v598 = vpop.f32.mrb[0].mxu0
      %v599 = vadd.f32 0.0, %v598
      %v600 = vpop.f32.mrb[0].mxu0
      %v601 = vadd.f32 0.0, %v600
      %602 = vmatprep.mubr.bf16.mxu0 %v507
      %603 = vmatmul.mubr.bf16.gmra.mrb[0].mxu0 %v378
      %v604 = vpop.f32.mrb[0].mxu0
      %v605 = vadd.f32 0.0, %v604
      %v606 = vpop.f32.mrb[0].mxu0
      %v607 = vadd.f32 0.0, %v606
      %v608 = vpop.f32.mrb[0].mxu0
      %v609 = vadd.f32 0.0, %v608
      %v610 = vpop.f32.mrb[0].mxu0
      %v611 = vadd.f32 0.0, %v610
      %612 = vmatprep.mubr.bf16.mxu0 %v510
      %613 = vmatmul.mubr.bf16.gmra.mrb[0].mxu0 %v380
      %v614 = vpop.f32.mrb[0].mxu0
      %v615 = vadd.f32 0.0, %v614
      %v616 = vpop.f32.mrb[0].mxu0
      %v617 = vadd.f32 0.0, %v616
      %v618 = vpop.f32.mrb[0].mxu0
      %v619 = vadd.f32 0.0, %v618
      %v620 = vpop.f32.mrb[0].mxu0
      %v621 = vadd.f32 0.0, %v620
      %622 = vmatprep.mubr.bf16.mxu0 %v513
      %623 = vmatmul.mubr.bf16.gmra.mrb[0].mxu0 %v382
      %v624 = vpop.f32.mrb[0].mxu0
      %v625 = vadd.f32 0.0, %v624
      %v626 = vpop.f32.mrb[0].mxu0
      %v627 = vadd.f32 0.0, %v626
      %v628 = vpop.f32.mrb[0].mxu0
      %v629 = vadd.f32 0.0, %v628
      %v630 = vpop.f32.mrb[0].mxu0
      %v631 = vadd.f32 0.0, %v630
      %632 = vmatprep.mubr.bf16.mxu0 %v516
      %633 = vmatmul.mubr.bf16.gmra.mrb[0].mxu0 %v384
      %v634 = vpop.f32.mrb[0].mxu0
      %v635 = vadd.f32 0.0, %v634
      %v636 = vpop.f32.mrb[0].mxu0
      %v637 = vadd.f32 0.0, %v636
      %v638 = vpop.f32.mrb[0].mxu0
      %v639 = vadd.f32 0.0, %v638
      %v640 = vpop.f32.mrb[0].mxu0
      %v641 = vadd.f32 0.0, %v640
      %642 = vmatprep.mubr.bf16.mxu0 %v519
      %643 = vmatmul.mubr.bf16.gmra.mrb[0].mxu0 %v386
      %v644 = vpop.f32.mrb[0].mxu0
      %v645 = vadd.f32 0.0, %v644
      %v646 = vpop.f32.mrb[0].mxu0
      %v647 = vadd.f32 0.0, %v646
      %v648 = vpop.f32.mrb[0].mxu0
      %v649 = vadd.f32 0.0, %v648
      %v650 = vpop.f32.mrb[0].mxu0
      %v651 = vadd.f32 0.0, %v650
      %652 = vmatprep.mubr.bf16.mxu0 %v522
      %653 = vmatmul.mubr.bf16.gmra.mrb[0].mxu0 %v388
      %v654 = vpop.f32.mrb[0].mxu0
      %v655 = vadd.f32 0.0, %v654
      %v656 = vpop.f32.mrb[0].mxu0
      %v657 = vadd.f32 0.0, %v656
      %v658 = vpop.f32.mrb[0].mxu0
      %v659 = vadd.f32 0.0, %v658
      %v660 = vpop.f32.mrb[0].mxu0
      %v661 = vadd.f32 0.0, %v660
      %662 = vmatprep.mubr.bf16.mxu0 %v525
      %663 = vmatmul.mubr.bf16.gmra.mrb[0].mxu0 %v390
      %v664 = vpop.f32.mrb[0].mxu0
      %v665 = vadd.f32 0.0, %v664
      %v666 = vpop.f32.mrb[0].mxu0
      %v667 = vadd.f32 0.0, %v666
      %v668 = vpop.f32.mrb[0].mxu0
      %v669 = vadd.f32 0.0, %v668
      %v670 = vpop.f32.mrb[0].mxu0
      %v671 = vadd.f32 0.0, %v670
      %672 = vmatprep.mubr.bf16.mxu0 %v528
      %673 = vmatmul.mubr.bf16.gmra.mrb[0].mxu0 %v392
      %v674 = vpop.f32.mrb[0].mxu0
      %v675 = vadd.f32 0.0, %v674
      %v676 = vpop.f32.mrb[0].mxu0
      %v677 = vadd.f32 0.0, %v676
      %v678 = vpop.f32.mrb[0].mxu0
      %v679 = vadd.f32 0.0, %v678
      %v680 = vpop.f32.mrb[0].mxu0
      %v681 = vadd.f32 0.0, %v680
      %682 = vmatprep.mubr.bf16.mxu0 %v531
      %683 = vmatmul.mubr.bf16.gmra.mrb[0].mxu0 %v394
      %v684 = vpop.f32.mrb[0].mxu0
      %v685 = vadd.f32 0.0, %v684
      %v686 = vpop.f32.mrb[0].mxu0
      %v687 = vadd.f32 0.0, %v686
      %v688 = vpop.f32.mrb[0].mxu0
      %v689 = vadd.f32 0.0, %v688
      %v690 = vpop.f32.mrb[0].mxu0
      %v691 = vadd.f32 0.0, %v690
      %692 = vdwg.mxu0
      %v693 = vmax.f32 %v575, %v577
      %v694 = vmax.f32 %v579, %v581
      %v695 = vmax.f32 %v585, %v587
      %v696 = vmax.f32 %v589, %v591
      %v697 = vmax.f32 %v595, %v597
      %v698 = vmax.f32 %v599, %v601
      %v699 = vmax.f32 %v605, %v607
      %v700 = vmax.f32 %v609, %v611
      %v701 = vmax.f32 %v615, %v617
      %v702 = vmax.f32 %v619, %v621
      %v703 = vmax.f32 %v625, %v627
      %v704 = vmax.f32 %v629, %v631
      %v705 = vmax.f32 %v635, %v637
      %v706 = vmax.f32 %v639, %v641
      %v707 = vmax.f32 %v645, %v647
      %v708 = vmax.f32 %v649, %v651
      %v709 = vmax.f32 %v655, %v657
      %v710 = vmax.f32 %v659, %v661
      %v711 = vmax.f32 %v665, %v667
      %v712 = vmax.f32 %v669, %v671
      %v713 = vmax.f32 %v675, %v677
      %v714 = vmax.f32 %v679, %v681
      %v715 = vmax.f32 %v685, %v687
      %v716 = vmax.f32 %v689, %v691
      %s717 = scalar_lea.vmem %s246, 192
      %v718 = vld [vmem:[%s717] sm:$0xff]
      %v719 = vld [vmem:[%s717 + $0x8] sm:$0xff]
      %v720 = vld [vmem:[%s717 + $0x10] sm:$0xff]
      %v721 = vld [vmem:[%s717 + $0x18] sm:$0xff]
      %v722 = vld [vmem:[%s717 + $0x20] sm:$0xff]
      %v723 = vld [vmem:[%s717 + $0x28] sm:$0xff]
      %v724 = vld [vmem:[%s717 + $0x30] sm:$0xff]
      %v725 = vld [vmem:[%s717 + $0x38] sm:$0xff]
      %v726 = vld [vmem:[%s717 + $0x40] sm:$0xff]
      %v727 = vld [vmem:[%s717 + $0x48] sm:$0xff]
      %v728 = vld [vmem:[%s717 + $0x50] sm:$0xff]
      %v729 = vld [vmem:[%s717 + $0x58] sm:$0xff]
      %v730 = vld [vmem:[%s717 + $0x60] sm:$0xff]
      %v731 = vld [vmem:[%s717 + $0x68] sm:$0xff]
      %v732 = vld [vmem:[%s717 + $0x70] sm:$0xff]
      %v733 = vld [vmem:[%s717 + $0x78] sm:$0xff]
      %v734 = vld [vmem:[%s717 + $0x80] sm:$0xff]
      %v735 = vld [vmem:[%s717 + $0x88] sm:$0xff]
      %v736 = vld [vmem:[%s717 + $0x90] sm:$0xff]
      %v737 = vld [vmem:[%s717 + $0x98] sm:$0xff]
      %v738 = vld [vmem:[%s717 + $0xa0] sm:$0xff]
      %v739 = vld [vmem:[%s717 + $0xa8] sm:$0xff]
      %v740 = vld [vmem:[%s717 + $0xb0] sm:$0xff]
      %v741 = vld [vmem:[%s717 + $0xb8] sm:$0xff]
      %v766 = vunpack.c.l.b16 %v718
      %v767 = vunpack.c.h.b16 %v718
      %v768 = vunpack.c.l.b16 %v719
      %v769 = vunpack.c.h.b16 %v719
      %v770 = vunpack.c.l.b16 %v720
      %v771 = vunpack.c.h.b16 %v720
      %v772 = vunpack.c.l.b16 %v721
      %v773 = vunpack.c.h.b16 %v721
      %v774 = vunpack.c.l.b16 %v722
      %v775 = vunpack.c.h.b16 %v722
      %v776 = vunpack.c.l.b16 %v723
      %v777 = vunpack.c.h.b16 %v723
      %v778 = vunpack.c.l.b16 %v724
      %v779 = vunpack.c.h.b16 %v724
      %v780 = vunpack.c.l.b16 %v725
      %v781 = vunpack.c.h.b16 %v725
      %v782 = vunpack.c.l.b16 %v726
      %v783 = vunpack.c.h.b16 %v726
      %v784 = vunpack.c.l.b16 %v727
      %v785 = vunpack.c.h.b16 %v727
      %v786 = vunpack.c.l.b16 %v728
      %v787 = vunpack.c.h.b16 %v728
      %v788 = vunpack.c.l.b16 %v729
      %v789 = vunpack.c.h.b16 %v729
      %v790 = vunpack.c.l.b16 %v730
      %v791 = vunpack.c.h.b16 %v730
      %v792 = vunpack.c.l.b16 %v731
      %v793 = vunpack.c.h.b16 %v731
      %v794 = vunpack.c.l.b16 %v732
      %v795 = vunpack.c.h.b16 %v732
      %v796 = vunpack.c.l.b16 %v733
      %v797 = vunpack.c.h.b16 %v733
      %v798 = vunpack.c.l.b16 %v734
      %v799 = vunpack.c.h.b16 %v734
      %v800 = vunpack.c.l.b16 %v735
      %v801 = vunpack.c.h.b16 %v735
      %v802 = vunpack.c.l.b16 %v736
      %v803 = vunpack.c.h.b16 %v736
      %v804 = vunpack.c.l.b16 %v737
      %v805 = vunpack.c.h.b16 %v737
      %v806 = vunpack.c.l.b16 %v738
      %v807 = vunpack.c.h.b16 %v738
      %v808 = vunpack.c.l.b16 %v739
      %v809 = vunpack.c.h.b16 %v739
      %v810 = vunpack.c.l.b16 %v740
      %v811 = vunpack.c.h.b16 %v740
      %v812 = vunpack.c.l.b16 %v741
      %v813 = vunpack.c.h.b16 %v741
      %v814 = vpack.c.b16 %v768, %v766
      %v815 = vpack.c.b16 %v769, %v767
      %v816 = vpack.c.b16 %v772, %v770
      %v817 = vpack.c.b16 %v773, %v771
      %v818 = vpack.c.b16 %v776, %v774
      %v819 = vpack.c.b16 %v777, %v775
      %v820 = vpack.c.b16 %v780, %v778
      %v821 = vpack.c.b16 %v781, %v779
      %v822 = vpack.c.b16 %v784, %v782
      %v823 = vpack.c.b16 %v785, %v783
      %v824 = vpack.c.b16 %v788, %v786
      %v825 = vpack.c.b16 %v789, %v787
      %v826 = vpack.c.b16 %v792, %v790
      %v827 = vpack.c.b16 %v793, %v791
      %v828 = vpack.c.b16 %v796, %v794
      %v829 = vpack.c.b16 %v797, %v795
      %v830 = vpack.c.b16 %v800, %v798
      %v831 = vpack.c.b16 %v801, %v799
      %v832 = vpack.c.b16 %v804, %v802
      %v833 = vpack.c.b16 %v805, %v803
      %v834 = vpack.c.b16 %v808, %v806
      %v835 = vpack.c.b16 %v809, %v807
      %v836 = vpack.c.b16 %v812, %v810
      %v837 = vpack.c.b16 %v813, %v811
      %v851 = vsel %vm496, %v815, 0
      %v854 = vsel %vm496, %v817, 0
      %v857 = vsel %vm496, %v819, 0
      %v860 = vsel %vm496, %v821, 0
      %v863 = vsel %vm496, %v823, 0
      %v866 = vsel %vm496, %v825, 0
      %v869 = vsel %vm496, %v827, 0
      %v872 = vsel %vm496, %v829, 0
      %v875 = vsel %vm496, %v831, 0
      %v878 = vsel %vm496, %v833, 0
      %v881 = vsel %vm496, %v835, 0
      %v884 = vsel %vm496, %v837, 0
      %886 = vmatprep.subr.bf16.mxu0 %v463
      %887 = vmatpush1.bf16.msra.mxu0 %v462
      %888 = vmatprep.subr.bf16.mxu0 %v465
      %889 = vmatpush1.bf16.msra.mxu0 %v464
      %890 = vmatprep.subr.bf16.mxu0 %v467
      %891 = vmatpush1.bf16.msra.mxu0 %v466
      %892 = vmatprep.subr.bf16.mxu0 %v469
      %893 = vmatpush1.bf16.msra.mxu0 %v468
      %894 = vmatprep.subr.bf16.mxu0 %v471
      %895 = vmatpush1.bf16.msra.mxu0 %v470
      %896 = vmatprep.subr.bf16.mxu0 %v473
      %897 = vmatpush1.bf16.msra.mxu0 %v472
      %898 = vmatprep.subr.bf16.mxu0 %v475
      %899 = vmatpush1.bf16.msra.mxu0 %v474
      %900 = vmatprep.subr.bf16.mxu0 %v477
      %901 = vmatpush1.bf16.msra.mxu0 %v476
      %902 = vmatprep.subr.bf16.mxu0 %v538
      %903 = vmatpush1.bf16.msra.mxu0 %v535
      %904 = vmatprep.subr.bf16.mxu0 0
      %905 = vmatpush1.bf16.msra.mxu0 0
      %906 = vmatprep.subr.bf16.mxu0 0
      %907 = vmatpush1.bf16.msra.mxu0 0
      %908 = vmatprep.subr.bf16.mxu0 0
      %909 = vmatpush1.bf16.msra.mxu0 0
      %910 = vmatprep.subr.bf16.mxu0 0
      %911 = vmatpush1.bf16.msra.mxu0 0
      %912 = vmatprep.subr.bf16.mxu0 0
      %913 = vmatpush1.bf16.msra.mxu0 0
      %914 = vmatprep.subr.bf16.mxu0 0
      %915 = vmatpush1.bf16.msra.mxu0 0
      %916 = vmatprep.subr.bf16.mxu0 0
      %917 = vmatpush1.bf16.msra.mxu0 0
      %918 = vmatprep.mubr.bf16.mxu0 %v851
      %919 = vmatmul.mubr.bf16.gmra.mrb[0].mxu0 %v814
      %v920 = vpop.f32.mrb[0].mxu0
      %v921 = vadd.f32 0.0, %v920
      %v922 = vpop.f32.mrb[0].mxu0
      %v923 = vadd.f32 0.0, %v922
      %v924 = vpop.f32.mrb[0].mxu0
      %v925 = vadd.f32 0.0, %v924
      %v926 = vpop.f32.mrb[0].mxu0
      %v927 = vadd.f32 0.0, %v926
      %928 = vmatprep.mubr.bf16.mxu0 %v854
      %929 = vmatmul.mubr.bf16.gmra.mrb[0].mxu0 %v816
      %v930 = vpop.f32.mrb[0].mxu0
      %v931 = vadd.f32 0.0, %v930
      %v932 = vpop.f32.mrb[0].mxu0
      %v933 = vadd.f32 0.0, %v932
      %v934 = vpop.f32.mrb[0].mxu0
      %v935 = vadd.f32 0.0, %v934
      %v936 = vpop.f32.mrb[0].mxu0
      %v937 = vadd.f32 0.0, %v936
      %938 = vmatprep.mubr.bf16.mxu0 %v857
      %939 = vmatmul.mubr.bf16.gmra.mrb[0].mxu0 %v818
      %v940 = vpop.f32.mrb[0].mxu0
      %v941 = vadd.f32 0.0, %v940
      %v942 = vpop.f32.mrb[0].mxu0
      %v943 = vadd.f32 0.0, %v942
      %v944 = vpop.f32.mrb[0].mxu0
      %v945 = vadd.f32 0.0, %v944
      %v946 = vpop.f32.mrb[0].mxu0
      %v947 = vadd.f32 0.0, %v946
      %948 = vmatprep.mubr.bf16.mxu0 %v860
      %949 = vmatmul.mubr.bf16.gmra.mrb[0].mxu0 %v820
      %v950 = vpop.f32.mrb[0].mxu0
      %v951 = vadd.f32 0.0, %v950
      %v952 = vpop.f32.mrb[0].mxu0
      %v953 = vadd.f32 0.0, %v952
      %v954 = vpop.f32.mrb[0].mxu0
      %v955 = vadd.f32 0.0, %v954
      %v956 = vpop.f32.mrb[0].mxu0
      %v957 = vadd.f32 0.0, %v956
      %958 = vmatprep.mubr.bf16.mxu0 %v863
      %959 = vmatmul.mubr.bf16.gmra.mrb[0].mxu0 %v822
      %v960 = vpop.f32.mrb[0].mxu0
      %v961 = vadd.f32 0.0, %v960
      %v962 = vpop.f32.mrb[0].mxu0
      %v963 = vadd.f32 0.0, %v962
      %v964 = vpop.f32.mrb[0].mxu0
      %v965 = vadd.f32 0.0, %v964
      %v966 = vpop.f32.mrb[0].mxu0
      %v967 = vadd.f32 0.0, %v966
      %968 = vmatprep.mubr.bf16.mxu0 %v866
      %969 = vmatmul.mubr.bf16.gmra.mrb[0].mxu0 %v824
      %v970 = vpop.f32.mrb[0].mxu0
      %v971 = vadd.f32 0.0, %v970
      %v972 = vpop.f32.mrb[0].mxu0
      %v973 = vadd.f32 0.0, %v972
      %v974 = vpop.f32.mrb[0].mxu0
      %v975 = vadd.f32 0.0, %v974
      %v976 = vpop.f32.mrb[0].mxu0
      %v977 = vadd.f32 0.0, %v976
      %978 = vmatprep.mubr.bf16.mxu0 %v869
      %979 = vmatmul.mubr.bf16.gmra.mrb[0].mxu0 %v826
      %v980 = vpop.f32.mrb[0].mxu0
      %v981 = vadd.f32 0.0, %v980
      %v982 = vpop.f32.mrb[0].mxu0
      %v983 = vadd.f32 0.0, %v982
      %v984 = vpop.f32.mrb[0].mxu0
      %v985 = vadd.f32 0.0, %v984
      %v986 = vpop.f32.mrb[0].mxu0
      %v987 = vadd.f32 0.0, %v986
      %988 = vmatprep.mubr.bf16.mxu0 %v872
      %989 = vmatmul.mubr.bf16.gmra.mrb[0].mxu0 %v828
      %v990 = vpop.f32.mrb[0].mxu0
      %v991 = vadd.f32 0.0, %v990
      %v992 = vpop.f32.mrb[0].mxu0
      %v993 = vadd.f32 0.0, %v992
      %v994 = vpop.f32.mrb[0].mxu0
      %v995 = vadd.f32 0.0, %v994
      %v996 = vpop.f32.mrb[0].mxu0
      %v997 = vadd.f32 0.0, %v996
      %998 = vmatprep.mubr.bf16.mxu0 %v875
      %999 = vmatmul.mubr.bf16.gmra.mrb[0].mxu0 %v830
      %v1000 = vpop.f32.mrb[0].mxu0
      %v1001 = vadd.f32 0.0, %v1000
      %v1002 = vpop.f32.mrb[0].mxu0
      %v1003 = vadd.f32 0.0, %v1002
      %v1004 = vpop.f32.mrb[0].mxu0
      %v1005 = vadd.f32 0.0, %v1004
      %v1006 = vpop.f32.mrb[0].mxu0
      %v1007 = vadd.f32 0.0, %v1006
      %1008 = vmatprep.mubr.bf16.mxu0 %v878
      %1009 = vmatmul.mubr.bf16.gmra.mrb[0].mxu0 %v832
      %v1010 = vpop.f32.mrb[0].mxu0
      %v1011 = vadd.f32 0.0, %v1010
      %v1012 = vpop.f32.mrb[0].mxu0
      %v1013 = vadd.f32 0.0, %v1012
      %v1014 = vpop.f32.mrb[0].mxu0
      %v1015 = vadd.f32 0.0, %v1014
      %v1016 = vpop.f32.mrb[0].mxu0
      %v1017 = vadd.f32 0.0, %v1016
      %1018 = vmatprep.mubr.bf16.mxu0 %v881
      %1019 = vmatmul.mubr.bf16.gmra.mrb[0].mxu0 %v834
      %v1020 = vpop.f32.mrb[0].mxu0
      %v1021 = vadd.f32 0.0, %v1020
      %v1022 = vpop.f32.mrb[0].mxu0
      %v1023 = vadd.f32 0.0, %v1022
      %v1024 = vpop.f32.mrb[0].mxu0
      %v1025 = vadd.f32 0.0, %v1024
      %v1026 = vpop.f32.mrb[0].mxu0
      %v1027 = vadd.f32 0.0, %v1026
      %1028 = vmatprep.mubr.bf16.mxu0 %v884
      %1029 = vmatmul.mubr.bf16.gmra.mrb[0].mxu0 %v836
      %v1030 = vpop.f32.mrb[0].mxu0
      %v1031 = vadd.f32 0.0, %v1030
      %v1032 = vpop.f32.mrb[0].mxu0
      %v1033 = vadd.f32 0.0, %v1032
      %v1034 = vpop.f32.mrb[0].mxu0
      %v1035 = vadd.f32 0.0, %v1034
      %v1036 = vpop.f32.mrb[0].mxu0
      %v1037 = vadd.f32 0.0, %v1036
      %1038 = vdwg.mxu0
      %v1039 = vmax.f32 %v921, %v923
      %v1040 = vmax.f32 %v925, %v927
      %v1041 = vmax.f32 %v931, %v933
      %v1042 = vmax.f32 %v935, %v937
      %v1043 = vmax.f32 %v941, %v943
      %v1044 = vmax.f32 %v945, %v947
      %v1045 = vmax.f32 %v951, %v953
      %v1046 = vmax.f32 %v955, %v957
      %v1047 = vmax.f32 %v961, %v963
      %v1048 = vmax.f32 %v965, %v967
      %v1049 = vmax.f32 %v971, %v973
      %v1050 = vmax.f32 %v975, %v977
      %v1051 = vmax.f32 %v981, %v983
      %v1052 = vmax.f32 %v985, %v987
      %v1053 = vmax.f32 %v991, %v993
      %v1054 = vmax.f32 %v995, %v997
      %v1055 = vmax.f32 %v1001, %v1003
      %v1056 = vmax.f32 %v1005, %v1007
      %v1057 = vmax.f32 %v1011, %v1013
      %v1058 = vmax.f32 %v1015, %v1017
      %v1059 = vmax.f32 %v1021, %v1023
      %v1060 = vmax.f32 %v1025, %v1027
      %v1061 = vmax.f32 %v1031, %v1033
      %v1062 = vmax.f32 %v1035, %v1037
      %v1063 = vmax.f32 %v693, %v1039
      %v1064 = vmax.f32 %v694, %v1040
      %v1065 = vmax.f32 %v695, %v1041
      %v1066 = vmax.f32 %v696, %v1042
      %v1067 = vmax.f32 %v697, %v1043
      %v1068 = vmax.f32 %v698, %v1044
      %v1069 = vmax.f32 %v699, %v1045
      %v1070 = vmax.f32 %v700, %v1046
      %v1071 = vmax.f32 %v701, %v1047
      %v1072 = vmax.f32 %v702, %v1048
      %v1073 = vmax.f32 %v703, %v1049
      %v1074 = vmax.f32 %v704, %v1050
      %v1075 = vmax.f32 %v705, %v1051
      %v1076 = vmax.f32 %v706, %v1052
      %v1077 = vmax.f32 %v707, %v1053
      %v1078 = vmax.f32 %v708, %v1054
      %v1079 = vmax.f32 %v709, %v1055
      %v1080 = vmax.f32 %v710, %v1056
      %v1081 = vmax.f32 %v711, %v1057
      %v1082 = vmax.f32 %v712, %v1058
      %v1083 = vmax.f32 %v713, %v1059
      %v1084 = vmax.f32 %v714, %v1060
      %v1085 = vmax.f32 %v715, %v1061
      %v1086 = vmax.f32 %v716, %v1062
      %v1087 = vlaneseq
      %v1088 = vshrl.u32 %v1087, 7
      %v1089 = vsub.s32 0, %v1088
      %v1090 = vrot.slane %v254, %v1089
      %v1091 = vadd.f32 %v1063, %v1090
      %v1092 = vadd.f32 %v1064, %v1090
      %v1093 = vadd.f32 %v1065, %v1090
      %v1094 = vadd.f32 %v1066, %v1090
      %v1095 = vadd.f32 %v1067, %v1090
      %v1096 = vadd.f32 %v1068, %v1090
      %v1097 = vadd.f32 %v1069, %v1090
      %v1098 = vadd.f32 %v1070, %v1090
      %v1099 = vadd.f32 %v1071, %v1090
      %v1100 = vadd.f32 %v1072, %v1090
      %v1101 = vadd.f32 %v1073, %v1090
      %v1102 = vadd.f32 %v1074, %v1090
      %v1103 = vadd.f32 %v1075, %v1090
      %v1104 = vadd.f32 %v1076, %v1090
      %v1105 = vadd.f32 %v1077, %v1090
      %v1106 = vadd.f32 %v1078, %v1090
      %v1107 = vadd.f32 %v1079, %v1090
      %v1108 = vadd.f32 %v1080, %v1090
      %v1109 = vadd.f32 %v1081, %v1090
      %v1110 = vadd.f32 %v1082, %v1090
      %v1111 = vadd.f32 %v1083, %v1090
      %v1112 = vadd.f32 %v1084, %v1090
      %v1113 = vadd.f32 %v1085, %v1090
      %v1114 = vadd.f32 %v1086, %v1090
      %v1115 = vmax.f32 %v1091, 0.0
      %v1116 = vmax.f32 %v1092, 0.0
      %v1117 = vmax.f32 %v1093, 0.0
      %v1118 = vmax.f32 %v1094, 0.0
      %v1119 = vmax.f32 %v1095, 0.0
      %v1120 = vmax.f32 %v1096, 0.0
      %v1121 = vmax.f32 %v1097, 0.0
      %v1122 = vmax.f32 %v1098, 0.0
      %v1123 = vmax.f32 %v1099, 0.0
      %v1124 = vmax.f32 %v1100, 0.0
      %v1125 = vmax.f32 %v1101, 0.0
      %v1126 = vmax.f32 %v1102, 0.0
      %v1127 = vmax.f32 %v1103, 0.0
      %v1128 = vmax.f32 %v1104, 0.0
      %v1129 = vmax.f32 %v1105, 0.0
      %v1130 = vmax.f32 %v1106, 0.0
      %v1131 = vmax.f32 %v1107, 0.0
      %v1132 = vmax.f32 %v1108, 0.0
      %v1133 = vmax.f32 %v1109, 0.0
      %v1134 = vmax.f32 %v1110, 0.0
      %v1135 = vmax.f32 %v1111, 0.0
      %v1136 = vmax.f32 %v1112, 0.0
      %v1137 = vmax.f32 %v1113, 0.0
      %v1138 = vmax.f32 %v1114, 0.0
      %v1139 = vpack.c.bf16 %v1116, %v1115
      %v1140 = vpack.c.bf16 %v1118, %v1117
      %v1141 = vpack.c.bf16 %v1120, %v1119
      %v1142 = vpack.c.bf16 %v1122, %v1121
      %v1143 = vpack.c.bf16 %v1124, %v1123
      %v1144 = vpack.c.bf16 %v1126, %v1125
      %v1145 = vpack.c.bf16 %v1128, %v1127
      %v1146 = vpack.c.bf16 %v1130, %v1129
      %v1147 = vpack.c.bf16 %v1132, %v1131
      %v1148 = vpack.c.bf16 %v1134, %v1133
      %v1149 = vpack.c.bf16 %v1136, %v1135
      %v1150 = vpack.c.bf16 %v1138, %v1137
      %1151 = vst [vmem:[#allocation2] sm:$0xff] %v1139
      %1152 = vst [vmem:[#allocation2 + $0x8] sm:$0xff] %v1140
      %1153 = vst [vmem:[#allocation2 + $0x10] sm:$0xff] %v1141
      %1154 = vst [vmem:[#allocation2 + $0x18] sm:$0xff] %v1142
      %1155 = vst [vmem:[#allocation2 + $0x20] sm:$0xff] %v1143
      %1156 = vst [vmem:[#allocation2 + $0x28] sm:$0xff] %v1144
      %1157 = vst [vmem:[#allocation2 + $0x30] sm:$0xff] %v1145
      %1158 = vst [vmem:[#allocation2 + $0x38] sm:$0xff] %v1146
      %1159 = vst [vmem:[#allocation2 + $0x40] sm:$0xff] %v1147
      %1160 = vst [vmem:[#allocation2 + $0x48] sm:$0xff] %v1148
      %1161 = vst [vmem:[#allocation2 + $0x50] sm:$0xff] %v1149
      %1162 = vst [vmem:[#allocation2 + $0x58] sm:$0xff] %v1150
      %s1163 = scalar_lea.vmem %s246, 384
      %v1164 = vld [vmem:[%s1163] sm:$0xff]
      %v1165 = vld [vmem:[%s1163 + $0x8] sm:$0xff]
      %v1166 = vld [vmem:[%s1163 + $0x10] sm:$0xff]
      %v1167 = vld [vmem:[%s1163 + $0x18] sm:$0xff]
      %v1168 = vld [vmem:[%s1163 + $0x20] sm:$0xff]
      %v1169 = vld [vmem:[%s1163 + $0x28] sm:$0xff]
      %v1170 = vld [vmem:[%s1163 + $0x30] sm:$0xff]
      %v1171 = vld [vmem:[%s1163 + $0x38] sm:$0xff]
      %v1172 = vld [vmem:[%s1163 + $0x40] sm:$0xff]
      %v1173 = vld [vmem:[%s1163 + $0x48] sm:$0xff]
      %v1174 = vld [vmem:[%s1163 + $0x50] sm:$0xff]
      %v1175 = vld [vmem:[%s1163 + $0x58] sm:$0xff]
      %v1176 = vld [vmem:[%s1163 + $0x60] sm:$0xff]
      %v1177 = vld [vmem:[%s1163 + $0x68] sm:$0xff]
      %v1178 = vld [vmem:[%s1163 + $0x70] sm:$0xff]
      %v1179 = vld [vmem:[%s1163 + $0x78] sm:$0xff]
      %v1180 = vld [vmem:[%s1163 + $0x80] sm:$0xff]
      %v1181 = vld [vmem:[%s1163 + $0x88] sm:$0xff]
      %v1182 = vld [vmem:[%s1163 + $0x90] sm:$0xff]
      %v1183 = vld [vmem:[%s1163 + $0x98] sm:$0xff]
      %v1184 = vld [vmem:[%s1163 + $0xa0] sm:$0xff]
      %v1185 = vld [vmem:[%s1163 + $0xa8] sm:$0xff]
      %v1186 = vld [vmem:[%s1163 + $0xb0] sm:$0xff]
      %v1187 = vld [vmem:[%s1163 + $0xb8] sm:$0xff]
      %v1212 = vunpack.c.l.b16 %v1164
      %v1213 = vunpack.c.h.b16 %v1164
      %v1214 = vunpack.c.l.b16 %v1165
      %v1215 = vunpack.c.h.b16 %v1165
      %v1216 = vunpack.c.l.b16 %v1166
      %v1217 = vunpack.c.h.b16 %v1166
      %v1218 = vunpack.c.l.b16 %v1167
      %v1219 = vunpack.c.h.b16 %v1167
      %v1220 = vunpack.c.l.b16 %v1168
      %v1221 = vunpack.c.h.b16 %v1168
      %v1222 = vunpack.c.l.b16 %v1169
      %v1223 = vunpack.c.h.b16 %v1169
      %v1224 = vunpack.c.l.b16 %v1170
      %v1225 = vunpack.c.h.b16 %v1170
      %v1226 = vunpack.c.l.b16 %v1171
      %v1227 = vunpack.c.h.b16 %v1171
      %v1228 = vunpack.c.l.b16 %v1172
      %v1229 = vunpack.c.h.b16 %v1172
      %v1230 = vunpack.c.l.b16 %v1173
      %v1231 = vunpack.c.h.b16 %v1173
      %v1232 = vunpack.c.l.b16 %v1174
      %v1233 = vunpack.c.h.b16 %v1174
      %v1234 = vunpack.c.l.b16 %v1175
      %v1235 = vunpack.c.h.b16 %v1175
      %v1236 = vunpack.c.l.b16 %v1176
      %v1237 = vunpack.c.h.b16 %v1176
      %v1238 = vunpack.c.l.b16 %v1177
      %v1239 = vunpack.c.h.b16 %v1177
      %v1240 = vunpack.c.l.b16 %v1178
      %v1241 = vunpack.c.h.b16 %v1178
      %v1242 = vunpack.c.l.b16 %v1179
      %v1243 = vunpack.c.h.b16 %v1179
      %v1244 = vunpack.c.l.b16 %v1180
      %v1245 = vunpack.c.h.b16 %v1180
      %v1246 = vunpack.c.l.b16 %v1181
      %v1247 = vunpack.c.h.b16 %v1181
      %v1248 = vunpack.c.l.b16 %v1182
      %v1249 = vunpack.c.h.b16 %v1182
      %v1250 = vunpack.c.l.b16 %v1183
      %v1251 = vunpack.c.h.b16 %v1183
      %v1252 = vunpack.c.l.b16 %v1184
      %v1253 = vunpack.c.h.b16 %v1184
      %v1254 = vunpack.c.l.b16 %v1185
      %v1255 = vunpack.c.h.b16 %v1185
      %v1256 = vunpack.c.l.b16 %v1186
      %v1257 = vunpack.c.h.b16 %v1186
      %v1258 = vunpack.c.l.b16 %v1187
      %v1259 = vunpack.c.h.b16 %v1187
      %v1260 = vpack.c.b16 %v1214, %v1212
      %v1261 = vpack.c.b16 %v1215, %v1213
      %v1262 = vpack.c.b16 %v1218, %v1216
      %v1263 = vpack.c.b16 %v1219, %v1217
      %v1264 = vpack.c.b16 %v1222, %v1220
      %v1265 = vpack.c.b16 %v1223, %v1221
      %v1266 = vpack.c.b16 %v1226, %v1224
      %v1267 = vpack.c.b16 %v1227, %v1225
      %v1268 = vpack.c.b16 %v1230, %v1228
      %v1269 = vpack.c.b16 %v1231, %v1229
      %v1270 = vpack.c.b16 %v1234, %v1232
      %v1271 = vpack.c.b16 %v1235, %v1233
      %v1272 = vpack.c.b16 %v1238, %v1236
      %v1273 = vpack.c.b16 %v1239, %v1237
      %v1274 = vpack.c.b16 %v1242, %v1240
      %v1275 = vpack.c.b16 %v1243, %v1241
      %v1276 = vpack.c.b16 %v1246, %v1244
      %v1277 = vpack.c.b16 %v1247, %v1245
      %v1278 = vpack.c.b16 %v1250, %v1248
      %v1279 = vpack.c.b16 %v1251, %v1249
      %v1280 = vpack.c.b16 %v1254, %v1252
      %v1281 = vpack.c.b16 %v1255, %v1253
      %v1282 = vpack.c.b16 %v1258, %v1256
      %v1283 = vpack.c.b16 %v1259, %v1257
      %v1297 = vsel %vm496, %v1261, 0
      %v1300 = vsel %vm496, %v1263, 0
      %v1303 = vsel %vm496, %v1265, 0
      %v1306 = vsel %vm496, %v1267, 0
      %v1309 = vsel %vm496, %v1269, 0
      %v1312 = vsel %vm496, %v1271, 0
      %v1315 = vsel %vm496, %v1273, 0
      %v1318 = vsel %vm496, %v1275, 0
      %v1321 = vsel %vm496, %v1277, 0
      %v1324 = vsel %vm496, %v1279, 0
      %v1327 = vsel %vm496, %v1281, 0
      %v1330 = vsel %vm496, %v1283, 0
      %1332 = vmatprep.subr.bf16.mxu0 %v463
      %1333 = vmatpush1.bf16.msra.mxu0 %v462
      %1334 = vmatprep.subr.bf16.mxu0 %v465
      %1335 = vmatpush1.bf16.msra.mxu0 %v464
      %1336 = vmatprep.subr.bf16.mxu0 %v467
      %1337 = vmatpush1.bf16.msra.mxu0 %v466
      %1338 = vmatprep.subr.bf16.mxu0 %v469
      %1339 = vmatpush1.bf16.msra.mxu0 %v468
      %1340 = vmatprep.subr.bf16.mxu0 %v471
      %1341 = vmatpush1.bf16.msra.mxu0 %v470
      %1342 = vmatprep.subr.bf16.mxu0 %v473
      %1343 = vmatpush1.bf16.msra.mxu0 %v472
      %1344 = vmatprep.subr.bf16.mxu0 %v475
      %1345 = vmatpush1.bf16.msra.mxu0 %v474
      %1346 = vmatprep.subr.bf16.mxu0 %v477
      %1347 = vmatpush1.bf16.msra.mxu0 %v476
      %1348 = vmatprep.subr.bf16.mxu0 %v538
      %1349 = vmatpush1.bf16.msra.mxu0 %v535
      %1350 = vmatprep.subr.bf16.mxu0 0
      %1351 = vmatpush1.bf16.msra.mxu0 0
      %1352 = vmatprep.subr.bf16.mxu0 0
      %1353 = vmatpush1.bf16.msra.mxu0 0
      %1354 = vmatprep.subr.bf16.mxu0 0
      %1355 = vmatpush1.bf16.msra.mxu0 0
      %1356 = vmatprep.subr.bf16.mxu0 0
      %1357 = vmatpush1.bf16.msra.mxu0 0
      %1358 = vmatprep.subr.bf16.mxu0 0
      %1359 = vmatpush1.bf16.msra.mxu0 0
      %1360 = vmatprep.subr.bf16.mxu0 0
      %1361 = vmatpush1.bf16.msra.mxu0 0
      %1362 = vmatprep.subr.bf16.mxu0 0
      %1363 = vmatpush1.bf16.msra.mxu0 0
      %1364 = vmatprep.mubr.bf16.mxu0 %v1297
      %1365 = vmatmul.mubr.bf16.gmra.mrb[0].mxu0 %v1260
      %v1366 = vpop.f32.mrb[0].mxu0
      %v1367 = vadd.f32 0.0, %v1366
      %v1368 = vpop.f32.mrb[0].mxu0
      %v1369 = vadd.f32 0.0, %v1368
      %v1370 = vpop.f32.mrb[0].mxu0
      %v1371 = vadd.f32 0.0, %v1370
      %v1372 = vpop.f32.mrb[0].mxu0
      %v1373 = vadd.f32 0.0, %v1372
      %1374 = vmatprep.mubr.bf16.mxu0 %v1300
      %1375 = vmatmul.mubr.bf16.gmra.mrb[0].mxu0 %v1262
      %v1376 = vpop.f32.mrb[0].mxu0
      %v1377 = vadd.f32 0.0, %v1376
      %v1378 = vpop.f32.mrb[0].mxu0
      %v1379 = vadd.f32 0.0, %v1378
      %v1380 = vpop.f32.mrb[0].mxu0
      %v1381 = vadd.f32 0.0, %v1380
      %v1382 = vpop.f32.mrb[0].mxu0
      %v1383 = vadd.f32 0.0, %v1382
      %1384 = vmatprep.mubr.bf16.mxu0 %v1303
      %1385 = vmatmul.mubr.bf16.gmra.mrb[0].mxu0 %v1264
      %v1386 = vpop.f32.mrb[0].mxu0
      %v1387 = vadd.f32 0.0, %v1386
      %v1388 = vpop.f32.mrb[0].mxu0
      %v1389 = vadd.f32 0.0, %v1388
      %v1390 = vpop.f32.mrb[0].mxu0
      %v1391 = vadd.f32 0.0, %v1390
      %v1392 = vpop.f32.mrb[0].mxu0
      %v1393 = vadd.f32 0.0, %v1392
      %1394 = vmatprep.mubr.bf16.mxu0 %v1306
      %1395 = vmatmul.mubr.bf16.gmra.mrb[0].mxu0 %v1266
      %v1396 = vpop.f32.mrb[0].mxu0
      %v1397 = vadd.f32 0.0, %v1396
      %v1398 = vpop.f32.mrb[0].mxu0
      %v1399 = vadd.f32 0.0, %v1398
      %v1400 = vpop.f32.mrb[0].mxu0
      %v1401 = vadd.f32 0.0, %v1400
      %v1402 = vpop.f32.mrb[0].mxu0
      %v1403 = vadd.f32 0.0, %v1402
      %1404 = vmatprep.mubr.bf16.mxu0 %v1309
      %1405 = vmatmul.mubr.bf16.gmra.mrb[0].mxu0 %v1268
      %v1406 = vpop.f32.mrb[0].mxu0
      %v1407 = vadd.f32 0.0, %v1406
      %v1408 = vpop.f32.mrb[0].mxu0
      %v1409 = vadd.f32 0.0, %v1408
      %v1410 = vpop.f32.mrb[0].mxu0
      %v1411 = vadd.f32 0.0, %v1410
      %v1412 = vpop.f32.mrb[0].mxu0
      %v1413 = vadd.f32 0.0, %v1412
      %1414 = vmatprep.mubr.bf16.mxu0 %v1312
      %1415 = vmatmul.mubr.bf16.gmra.mrb[0].mxu0 %v1270
      %v1416 = vpop.f32.mrb[0].mxu0
      %v1417 = vadd.f32 0.0, %v1416
      %v1418 = vpop.f32.mrb[0].mxu0
      %v1419 = vadd.f32 0.0, %v1418
      %v1420 = vpop.f32.mrb[0].mxu0
      %v1421 = vadd.f32 0.0, %v1420
      %v1422 = vpop.f32.mrb[0].mxu0
      %v1423 = vadd.f32 0.0, %v1422
      %1424 = vmatprep.mubr.bf16.mxu0 %v1315
      %1425 = vmatmul.mubr.bf16.gmra.mrb[0].mxu0 %v1272
      %v1426 = vpop.f32.mrb[0].mxu0
      %v1427 = vadd.f32 0.0, %v1426
      %v1428 = vpop.f32.mrb[0].mxu0
      %v1429 = vadd.f32 0.0, %v1428
      %v1430 = vpop.f32.mrb[0].mxu0
      %v1431 = vadd.f32 0.0, %v1430
      %v1432 = vpop.f32.mrb[0].mxu0
      %v1433 = vadd.f32 0.0, %v1432
      %1434 = vmatprep.mubr.bf16.mxu0 %v1318
      %1435 = vmatmul.mubr.bf16.gmra.mrb[0].mxu0 %v1274
      %v1436 = vpop.f32.mrb[0].mxu0
      %v1437 = vadd.f32 0.0, %v1436
      %v1438 = vpop.f32.mrb[0].mxu0
      %v1439 = vadd.f32 0.0, %v1438
      %v1440 = vpop.f32.mrb[0].mxu0
      %v1441 = vadd.f32 0.0, %v1440
      %v1442 = vpop.f32.mrb[0].mxu0
      %v1443 = vadd.f32 0.0, %v1442
      %1444 = vmatprep.mubr.bf16.mxu0 %v1321
      %1445 = vmatmul.mubr.bf16.gmra.mrb[0].mxu0 %v1276
      %v1446 = vpop.f32.mrb[0].mxu0
      %v1447 = vadd.f32 0.0, %v1446
      %v1448 = vpop.f32.mrb[0].mxu0
      %v1449 = vadd.f32 0.0, %v1448
      %v1450 = vpop.f32.mrb[0].mxu0
      %v1451 = vadd.f32 0.0, %v1450
      %v1452 = vpop.f32.mrb[0].mxu0
      %v1453 = vadd.f32 0.0, %v1452
      %1454 = vmatprep.mubr.bf16.mxu0 %v1324
      %1455 = vmatmul.mubr.bf16.gmra.mrb[0].mxu0 %v1278
      %v1456 = vpop.f32.mrb[0].mxu0
      %v1457 = vadd.f32 0.0, %v1456
      %v1458 = vpop.f32.mrb[0].mxu0
      %v1459 = vadd.f32 0.0, %v1458
      %v1460 = vpop.f32.mrb[0].mxu0
      %v1461 = vadd.f32 0.0, %v1460
      %v1462 = vpop.f32.mrb[0].mxu0
      %v1463 = vadd.f32 0.0, %v1462
      %1464 = vmatprep.mubr.bf16.mxu0 %v1327
      %1465 = vmatmul.mubr.bf16.gmra.mrb[0].mxu0 %v1280
      %v1466 = vpop.f32.mrb[0].mxu0
      %v1467 = vadd.f32 0.0, %v1466
      %v1468 = vpop.f32.mrb[0].mxu0
      %v1469 = vadd.f32 0.0, %v1468
      %v1470 = vpop.f32.mrb[0].mxu0
      %v1471 = vadd.f32 0.0, %v1470
      %v1472 = vpop.f32.mrb[0].mxu0
      %v1473 = vadd.f32 0.0, %v1472
      %1474 = vmatprep.mubr.bf16.mxu0 %v1330
      %1475 = vmatmul.mubr.bf16.gmra.mrb[0].mxu0 %v1282
      %v1476 = vpop.f32.mrb[0].mxu0
      %v1477 = vadd.f32 0.0, %v1476
      %v1478 = vpop.f32.mrb[0].mxu0
      %v1479 = vadd.f32 0.0, %v1478
      %v1480 = vpop.f32.mrb[0].mxu0
      %v1481 = vadd.f32 0.0, %v1480
      %v1482 = vpop.f32.mrb[0].mxu0
      %v1483 = vadd.f32 0.0, %v1482
      %1484 = vdwg.mxu0
      %v1485 = vmax.f32 %v1367, %v1369
      %v1486 = vmax.f32 %v1371, %v1373
      %v1487 = vmax.f32 %v1377, %v1379
      %v1488 = vmax.f32 %v1381, %v1383
      %v1489 = vmax.f32 %v1387, %v1389
      %v1490 = vmax.f32 %v1391, %v1393
      %v1491 = vmax.f32 %v1397, %v1399
      %v1492 = vmax.f32 %v1401, %v1403
      %v1493 = vmax.f32 %v1407, %v1409
      %v1494 = vmax.f32 %v1411, %v1413
      %v1495 = vmax.f32 %v1417, %v1419
      %v1496 = vmax.f32 %v1421, %v1423
      %v1497 = vmax.f32 %v1427, %v1429
      %v1498 = vmax.f32 %v1431, %v1433
      %v1499 = vmax.f32 %v1437, %v1439
      %v1500 = vmax.f32 %v1441, %v1443
      %v1501 = vmax.f32 %v1447, %v1449
      %v1502 = vmax.f32 %v1451, %v1453
      %v1503 = vmax.f32 %v1457, %v1459
      %v1504 = vmax.f32 %v1461, %v1463
      %v1505 = vmax.f32 %v1467, %v1469
      %v1506 = vmax.f32 %v1471, %v1473
      %v1507 = vmax.f32 %v1477, %v1479
      %v1508 = vmax.f32 %v1481, %v1483
      %s1509 = scalar_lea.vmem %s246, 576
      %v1510 = vld [vmem:[%s1509] sm:$0xff]
      %v1511 = vld [vmem:[%s1509 + $0x8] sm:$0xff]
      %v1512 = vld [vmem:[%s1509 + $0x10] sm:$0xff]
      %v1513 = vld [vmem:[%s1509 + $0x18] sm:$0xff]
      %v1514 = vld [vmem:[%s1509 + $0x20] sm:$0xff]
      %v1515 = vld [vmem:[%s1509 + $0x28] sm:$0xff]
      %v1516 = vld [vmem:[%s1509 + $0x30] sm:$0xff]
      %v1517 = vld [vmem:[%s1509 + $0x38] sm:$0xff]
      %v1518 = vld [vmem:[%s1509 + $0x40] sm:$0xff]
      %v1519 = vld [vmem:[%s1509 + $0x48] sm:$0xff]
      %v1520 = vld [vmem:[%s1509 + $0x50] sm:$0xff]
      %v1521 = vld [vmem:[%s1509 + $0x58] sm:$0xff]
      %v1522 = vld [vmem:[%s1509 + $0x60] sm:$0xff]
      %v1523 = vld [vmem:[%s1509 + $0x68] sm:$0xff]
      %v1524 = vld [vmem:[%s1509 + $0x70] sm:$0xff]
      %v1525 = vld [vmem:[%s1509 + $0x78] sm:$0xff]
      %v1526 = vld [vmem:[%s1509 + $0x80] sm:$0xff]
      %v1527 = vld [vmem:[%s1509 + $0x88] sm:$0xff]
      %v1528 = vld [vmem:[%s1509 + $0x90] sm:$0xff]
      %v1529 = vld [vmem:[%s1509 + $0x98] sm:$0xff]
      %v1530 = vld [vmem:[%s1509 + $0xa0] sm:$0xff]
      %v1531 = vld [vmem:[%s1509 + $0xa8] sm:$0xff]
      %v1532 = vld [vmem:[%s1509 + $0xb0] sm:$0xff]
      %v1533 = vld [vmem:[%s1509 + $0xb8] sm:$0xff]
      %v1558 = vunpack.c.l.b16 %v1510
      %v1559 = vunpack.c.h.b16 %v1510
      %v1560 = vunpack.c.l.b16 %v1511
      %v1561 = vunpack.c.h.b16 %v1511
      %v1562 = vunpack.c.l.b16 %v1512
      %v1563 = vunpack.c.h.b16 %v1512
      %v1564 = vunpack.c.l.b16 %v1513
      %v1565 = vunpack.c.h.b16 %v1513
      %v1566 = vunpack.c.l.b16 %v1514
      %v1567 = vunpack.c.h.b16 %v1514
      %v1568 = vunpack.c.l.b16 %v1515
      %v1569 = vunpack.c.h.b16 %v1515
      %v1570 = vunpack.c.l.b16 %v1516
      %v1571 = vunpack.c.h.b16 %v1516
      %v1572 = vunpack.c.l.b16 %v1517
      %v1573 = vunpack.c.h.b16 %v1517
      %v1574 = vunpack.c.l.b16 %v1518
      %v1575 = vunpack.c.h.b16 %v1518
      %v1576 = vunpack.c.l.b16 %v1519
      %v1577 = vunpack.c.h.b16 %v1519
      %v1578 = vunpack.c.l.b16 %v1520
      %v1579 = vunpack.c.h.b16 %v1520
      %v1580 = vunpack.c.l.b16 %v1521
      %v1581 = vunpack.c.h.b16 %v1521
      %v1582 = vunpack.c.l.b16 %v1522
      %v1583 = vunpack.c.h.b16 %v1522
      %v1584 = vunpack.c.l.b16 %v1523
      %v1585 = vunpack.c.h.b16 %v1523
      %v1586 = vunpack.c.l.b16 %v1524
      %v1587 = vunpack.c.h.b16 %v1524
      %v1588 = vunpack.c.l.b16 %v1525
      %v1589 = vunpack.c.h.b16 %v1525
      %v1590 = vunpack.c.l.b16 %v1526
      %v1591 = vunpack.c.h.b16 %v1526
      %v1592 = vunpack.c.l.b16 %v1527
      %v1593 = vunpack.c.h.b16 %v1527
      %v1594 = vunpack.c.l.b16 %v1528
      %v1595 = vunpack.c.h.b16 %v1528
      %v1596 = vunpack.c.l.b16 %v1529
      %v1597 = vunpack.c.h.b16 %v1529
      %v1598 = vunpack.c.l.b16 %v1530
      %v1599 = vunpack.c.h.b16 %v1530
      %v1600 = vunpack.c.l.b16 %v1531
      %v1601 = vunpack.c.h.b16 %v1531
      %v1602 = vunpack.c.l.b16 %v1532
      %v1603 = vunpack.c.h.b16 %v1532
      %v1604 = vunpack.c.l.b16 %v1533
      %v1605 = vunpack.c.h.b16 %v1533
      %v1606 = vpack.c.b16 %v1560, %v1558
      %v1607 = vpack.c.b16 %v1561, %v1559
      %v1608 = vpack.c.b16 %v1564, %v1562
      %v1609 = vpack.c.b16 %v1565, %v1563
      %v1610 = vpack.c.b16 %v1568, %v1566
      %v1611 = vpack.c.b16 %v1569, %v1567
      %v1612 = vpack.c.b16 %v1572, %v1570
      %v1613 = vpack.c.b16 %v1573, %v1571
      %v1614 = vpack.c.b16 %v1576, %v1574
      %v1615 = vpack.c.b16 %v1577, %v1575
      %v1616 = vpack.c.b16 %v1580, %v1578
      %v1617 = vpack.c.b16 %v1581, %v1579
      %v1618 = vpack.c.b16 %v1584, %v1582
      %v1619 = vpack.c.b16 %v1585, %v1583
      %v1620 = vpack.c.b16 %v1588, %v1586
      %v1621 = vpack.c.b16 %v1589, %v1587
      %v1622 = vpack.c.b16 %v1592, %v1590
      %v1623 = vpack.c.b16 %v1593, %v1591
      %v1624 = vpack.c.b16 %v1596, %v1594
      %v1625 = vpack.c.b16 %v1597, %v1595
      %v1626 = vpack.c.b16 %v1600, %v1598
      %v1627 = vpack.c.b16 %v1601, %v1599
      %v1628 = vpack.c.b16 %v1604, %v1602
      %v1629 = vpack.c.b16 %v1605, %v1603
      %v1643 = vsel %vm496, %v1607, 0
      %v1646 = vsel %vm496, %v1609, 0
      %v1649 = vsel %vm496, %v1611, 0
      %v1652 = vsel %vm496, %v1613, 0
      %v1655 = vsel %vm496, %v1615, 0
      %v1658 = vsel %vm496, %v1617, 0
      %v1661 = vsel %vm496, %v1619, 0
      %v1664 = vsel %vm496, %v1621, 0
      %v1667 = vsel %vm496, %v1623, 0
      %v1670 = vsel %vm496, %v1625, 0
      %v1673 = vsel %vm496, %v1627, 0
      %v1676 = vsel %vm496, %v1629, 0
      %1678 = vmatprep.subr.bf16.mxu0 %v463
      %1679 = vmatpush1.bf16.msra.mxu0 %v462
      %1680 = vmatprep.subr.bf16.mxu0 %v465
      %1681 = vmatpush1.bf16.msra.mxu0 %v464
      %1682 = vmatprep.subr.bf16.mxu0 %v467
      %1683 = vmatpush1.bf16.msra.mxu0 %v466
      %1684 = vmatprep.subr.bf16.mxu0 %v469
      %1685 = vmatpush1.bf16.msra.mxu0 %v468
      %1686 = vmatprep.subr.bf16.mxu0 %v471
      %1687 = vmatpush1.bf16.msra.mxu0 %v470
      %1688 = vmatprep.subr.bf16.mxu0 %v473
      %1689 = vmatpush1.bf16.msra.mxu0 %v472
      %1690 = vmatprep.subr.bf16.mxu0 %v475
      %1691 = vmatpush1.bf16.msra.mxu0 %v474
      %1692 = vmatprep.subr.bf16.mxu0 %v477
      %1693 = vmatpush1.bf16.msra.mxu0 %v476
      %1694 = vmatprep.subr.bf16.mxu0 %v538
      %1695 = vmatpush1.bf16.msra.mxu0 %v535
      %1696 = vmatprep.subr.bf16.mxu0 0
      %1697 = vmatpush1.bf16.msra.mxu0 0
      %1698 = vmatprep.subr.bf16.mxu0 0
      %1699 = vmatpush1.bf16.msra.mxu0 0
      %1700 = vmatprep.subr.bf16.mxu0 0
      %1701 = vmatpush1.bf16.msra.mxu0 0
      %1702 = vmatprep.subr.bf16.mxu0 0
      %1703 = vmatpush1.bf16.msra.mxu0 0
      %1704 = vmatprep.subr.bf16.mxu0 0
      %1705 = vmatpush1.bf16.msra.mxu0 0
      %1706 = vmatprep.subr.bf16.mxu0 0
      %1707 = vmatpush1.bf16.msra.mxu0 0
      %1708 = vmatprep.subr.bf16.mxu0 0
      %1709 = vmatpush1.bf16.msra.mxu0 0
      %1710 = vmatprep.mubr.bf16.mxu0 %v1643
      %1711 = vmatmul.mubr.bf16.gmra.mrb[0].mxu0 %v1606
      %v1712 = vpop.f32.mrb[0].mxu0
      %v1713 = vadd.f32 0.0, %v1712
      %v1714 = vpop.f32.mrb[0].mxu0
      %v1715 = vadd.f32 0.0, %v1714
      %v1716 = vpop.f32.mrb[0].mxu0
      %v1717 = vadd.f32 0.0, %v1716
      %v1718 = vpop.f32.mrb[0].mxu0
      %v1719 = vadd.f32 0.0, %v1718
      %1720 = vmatprep.mubr.bf16.mxu0 %v1646
      %1721 = vmatmul.mubr.bf16.gmra.mrb[0].mxu0 %v1608
      %v1722 = vpop.f32.mrb[0].mxu0
      %v1723 = vadd.f32 0.0, %v1722
      %v1724 = vpop.f32.mrb[0].mxu0
      %v1725 = vadd.f32 0.0, %v1724
      %v1726 = vpop.f32.mrb[0].mxu0
      %v1727 = vadd.f32 0.0, %v1726
      %v1728 = vpop.f32.mrb[0].mxu0
      %v1729 = vadd.f32 0.0, %v1728
      %1730 = vmatprep.mubr.bf16.mxu0 %v1649
      %1731 = vmatmul.mubr.bf16.gmra.mrb[0].mxu0 %v1610
      %v1732 = vpop.f32.mrb[0].mxu0
      %v1733 = vadd.f32 0.0, %v1732
      %v1734 = vpop.f32.mrb[0].mxu0
      %v1735 = vadd.f32 0.0, %v1734
      %v1736 = vpop.f32.mrb[0].mxu0
      %v1737 = vadd.f32 0.0, %v1736
      %v1738 = vpop.f32.mrb[0].mxu0
      %v1739 = vadd.f32 0.0, %v1738
      %1740 = vmatprep.mubr.bf16.mxu0 %v1652
      %1741 = vmatmul.mubr.bf16.gmra.mrb[0].mxu0 %v1612
      %v1742 = vpop.f32.mrb[0].mxu0
      %v1743 = vadd.f32 0.0, %v1742
      %v1744 = vpop.f32.mrb[0].mxu0
      %v1745 = vadd.f32 0.0, %v1744
      %v1746 = vpop.f32.mrb[0].mxu0
      %v1747 = vadd.f32 0.0, %v1746
      %v1748 = vpop.f32.mrb[0].mxu0
      %v1749 = vadd.f32 0.0, %v1748
      %1750 = vmatprep.mubr.bf16.mxu0 %v1655
      %1751 = vmatmul.mubr.bf16.gmra.mrb[0].mxu0 %v1614
      %v1752 = vpop.f32.mrb[0].mxu0
      %v1753 = vadd.f32 0.0, %v1752
      %v1754 = vpop.f32.mrb[0].mxu0
      %v1755 = vadd.f32 0.0, %v1754
      %v1756 = vpop.f32.mrb[0].mxu0
      %v1757 = vadd.f32 0.0, %v1756
      %v1758 = vpop.f32.mrb[0].mxu0
      %v1759 = vadd.f32 0.0, %v1758
      %1760 = vmatprep.mubr.bf16.mxu0 %v1658
      %1761 = vmatmul.mubr.bf16.gmra.mrb[0].mxu0 %v1616
      %v1762 = vpop.f32.mrb[0].mxu0
      %v1763 = vadd.f32 0.0, %v1762
      %v1764 = vpop.f32.mrb[0].mxu0
      %v1765 = vadd.f32 0.0, %v1764
      %v1766 = vpop.f32.mrb[0].mxu0
      %v1767 = vadd.f32 0.0, %v1766
      %v1768 = vpop.f32.mrb[0].mxu0
      %v1769 = vadd.f32 0.0, %v1768
      %1770 = vmatprep.mubr.bf16.mxu0 %v1661
      %1771 = vmatmul.mubr.bf16.gmra.mrb[0].mxu0 %v1618
      %v1772 = vpop.f32.mrb[0].mxu0
      %v1773 = vadd.f32 0.0, %v1772
      %v1774 = vpop.f32.mrb[0].mxu0
      %v1775 = vadd.f32 0.0, %v1774
      %v1776 = vpop.f32.mrb[0].mxu0
      %v1777 = vadd.f32 0.0, %v1776
      %v1778 = vpop.f32.mrb[0].mxu0
      %v1779 = vadd.f32 0.0, %v1778
      %1780 = vmatprep.mubr.bf16.mxu0 %v1664
      %1781 = vmatmul.mubr.bf16.gmra.mrb[0].mxu0 %v1620
      %v1782 = vpop.f32.mrb[0].mxu0
      %v1783 = vadd.f32 0.0, %v1782
      %v1784 = vpop.f32.mrb[0].mxu0
      %v1785 = vadd.f32 0.0, %v1784
      %v1786 = vpop.f32.mrb[0].mxu0
      %v1787 = vadd.f32 0.0, %v1786
      %v1788 = vpop.f32.mrb[0].mxu0
      %v1789 = vadd.f32 0.0, %v1788
      %1790 = vmatprep.mubr.bf16.mxu0 %v1667
      %1791 = vmatmul.mubr.bf16.gmra.mrb[0].mxu0 %v1622
      %v1792 = vpop.f32.mrb[0].mxu0
      %v1793 = vadd.f32 0.0, %v1792
      %v1794 = vpop.f32.mrb[0].mxu0
      %v1795 = vadd.f32 0.0, %v1794
      %v1796 = vpop.f32.mrb[0].mxu0
      %v1797 = vadd.f32 0.0, %v1796
      %v1798 = vpop.f32.mrb[0].mxu0
      %v1799 = vadd.f32 0.0, %v1798
      %1800 = vmatprep.mubr.bf16.mxu0 %v1670
      %1801 = vmatmul.mubr.bf16.gmra.mrb[0].mxu0 %v1624
      %v1802 = vpop.f32.mrb[0].mxu0
      %v1803 = vadd.f32 0.0, %v1802
      %v1804 = vpop.f32.mrb[0].mxu0
      %v1805 = vadd.f32 0.0, %v1804
      %v1806 = vpop.f32.mrb[0].mxu0
      %v1807 = vadd.f32 0.0, %v1806
      %v1808 = vpop.f32.mrb[0].mxu0
      %v1809 = vadd.f32 0.0, %v1808
      %1810 = vmatprep.mubr.bf16.mxu0 %v1673
      %1811 = vmatmul.mubr.bf16.gmra.mrb[0].mxu0 %v1626
      %v1812 = vpop.f32.mrb[0].mxu0
      %v1813 = vadd.f32 0.0, %v1812
      %v1814 = vpop.f32.mrb[0].mxu0
      %v1815 = vadd.f32 0.0, %v1814
      %v1816 = vpop.f32.mrb[0].mxu0
      %v1817 = vadd.f32 0.0, %v1816
      %v1818 = vpop.f32.mrb[0].mxu0
      %v1819 = vadd.f32 0.0, %v1818
      %1820 = vmatprep.mubr.bf16.mxu0 %v1676
      %1821 = vmatmul.mubr.bf16.gmra.mrb[0].mxu0 %v1628
      %v1822 = vpop.f32.mrb[0].mxu0
      %v1823 = vadd.f32 0.0, %v1822
      %v1824 = vpop.f32.mrb[0].mxu0
      %v1825 = vadd.f32 0.0, %v1824
      %v1826 = vpop.f32.mrb[0].mxu0
      %v1827 = vadd.f32 0.0, %v1826
      %v1828 = vpop.f32.mrb[0].mxu0
      %v1829 = vadd.f32 0.0, %v1828
      %1830 = vdwg.mxu0
      %v1831 = vmax.f32 %v1713, %v1715
      %v1832 = vmax.f32 %v1717, %v1719
      %v1833 = vmax.f32 %v1723, %v1725
      %v1834 = vmax.f32 %v1727, %v1729
      %v1835 = vmax.f32 %v1733, %v1735
      %v1836 = vmax.f32 %v1737, %v1739
      %v1837 = vmax.f32 %v1743, %v1745
      %v1838 = vmax.f32 %v1747, %v1749
      %v1839 = vmax.f32 %v1753, %v1755
      %v1840 = vmax.f32 %v1757, %v1759
      %v1841 = vmax.f32 %v1763, %v1765
      %v1842 = vmax.f32 %v1767, %v1769
      %v1843 = vmax.f32 %v1773, %v1775
      %v1844 = vmax.f32 %v1777, %v1779
      %v1845 = vmax.f32 %v1783, %v1785
      %v1846 = vmax.f32 %v1787, %v1789
      %v1847 = vmax.f32 %v1793, %v1795
      %v1848 = vmax.f32 %v1797, %v1799
      %v1849 = vmax.f32 %v1803, %v1805
      %v1850 = vmax.f32 %v1807, %v1809
      %v1851 = vmax.f32 %v1813, %v1815
      %v1852 = vmax.f32 %v1817, %v1819
      %v1853 = vmax.f32 %v1823, %v1825
      %v1854 = vmax.f32 %v1827, %v1829
      %v1855 = vmax.f32 %v1485, %v1831
      %v1856 = vmax.f32 %v1486, %v1832
      %v1857 = vmax.f32 %v1487, %v1833
      %v1858 = vmax.f32 %v1488, %v1834
      %v1859 = vmax.f32 %v1489, %v1835
      %v1860 = vmax.f32 %v1490, %v1836
      %v1861 = vmax.f32 %v1491, %v1837
      %v1862 = vmax.f32 %v1492, %v1838
      %v1863 = vmax.f32 %v1493, %v1839
      %v1864 = vmax.f32 %v1494, %v1840
      %v1865 = vmax.f32 %v1495, %v1841
      %v1866 = vmax.f32 %v1496, %v1842
      %v1867 = vmax.f32 %v1497, %v1843
      %v1868 = vmax.f32 %v1498, %v1844
      %v1869 = vmax.f32 %v1499, %v1845
      %v1870 = vmax.f32 %v1500, %v1846
      %v1871 = vmax.f32 %v1501, %v1847
      %v1872 = vmax.f32 %v1502, %v1848
      %v1873 = vmax.f32 %v1503, %v1849
      %v1874 = vmax.f32 %v1504, %v1850
      %v1875 = vmax.f32 %v1505, %v1851
      %v1876 = vmax.f32 %v1506, %v1852
      %v1877 = vmax.f32 %v1507, %v1853
      %v1878 = vmax.f32 %v1508, %v1854
      %v1879 = vadd.f32 %v1855, %v1090
      %v1880 = vadd.f32 %v1856, %v1090
      %v1881 = vadd.f32 %v1857, %v1090
      %v1882 = vadd.f32 %v1858, %v1090
      %v1883 = vadd.f32 %v1859, %v1090
      %v1884 = vadd.f32 %v1860, %v1090
      %v1885 = vadd.f32 %v1861, %v1090
      %v1886 = vadd.f32 %v1862, %v1090
      %v1887 = vadd.f32 %v1863, %v1090
      %v1888 = vadd.f32 %v1864, %v1090
      %v1889 = vadd.f32 %v1865, %v1090
      %v1890 = vadd.f32 %v1866, %v1090
      %v1891 = vadd.f32 %v1867, %v1090
      %v1892 = vadd.f32 %v1868, %v1090
      %v1893 = vadd.f32 %v1869, %v1090
      %v1894 = vadd.f32 %v1870, %v1090
      %v1895 = vadd.f32 %v1871, %v1090
      %v1896 = vadd.f32 %v1872, %v1090
      %v1897 = vadd.f32 %v1873, %v1090
      %v1898 = vadd.f32 %v1874, %v1090
      %v1899 = vadd.f32 %v1875, %v1090
      %v1900 = vadd.f32 %v1876, %v1090
      %v1901 = vadd.f32 %v1877, %v1090
      %v1902 = vadd.f32 %v1878, %v1090
      %v1903 = vmax.f32 %v1879, 0.0
      %v1904 = vmax.f32 %v1880, 0.0
      %v1905 = vmax.f32 %v1881, 0.0
      %v1906 = vmax.f32 %v1882, 0.0
      %v1907 = vmax.f32 %v1883, 0.0
      %v1908 = vmax.f32 %v1884, 0.0
      %v1909 = vmax.f32 %v1885, 0.0
      %v1910 = vmax.f32 %v1886, 0.0
      %v1911 = vmax.f32 %v1887, 0.0
      %v1912 = vmax.f32 %v1888, 0.0
      %v1913 = vmax.f32 %v1889, 0.0
      %v1914 = vmax.f32 %v1890, 0.0
      %v1915 = vmax.f32 %v1891, 0.0
      %v1916 = vmax.f32 %v1892, 0.0
      %v1917 = vmax.f32 %v1893, 0.0
      %v1918 = vmax.f32 %v1894, 0.0
      %v1919 = vmax.f32 %v1895, 0.0
      %v1920 = vmax.f32 %v1896, 0.0
      %v1921 = vmax.f32 %v1897, 0.0
      %v1922 = vmax.f32 %v1898, 0.0
      %v1923 = vmax.f32 %v1899, 0.0
      %v1924 = vmax.f32 %v1900, 0.0
      %v1925 = vmax.f32 %v1901, 0.0
      %v1926 = vmax.f32 %v1902, 0.0
      %v1927 = vpack.c.bf16 %v1904, %v1903
      %v1928 = vpack.c.bf16 %v1906, %v1905
      %v1929 = vpack.c.bf16 %v1908, %v1907
      %v1930 = vpack.c.bf16 %v1910, %v1909
      %v1931 = vpack.c.bf16 %v1912, %v1911
      %v1932 = vpack.c.bf16 %v1914, %v1913
      %v1933 = vpack.c.bf16 %v1916, %v1915
      %v1934 = vpack.c.bf16 %v1918, %v1917
      %v1935 = vpack.c.bf16 %v1920, %v1919
      %v1936 = vpack.c.bf16 %v1922, %v1921
      %v1937 = vpack.c.bf16 %v1924, %v1923
      %v1938 = vpack.c.bf16 %v1926, %v1925
      %s1939 = scalar_lea.vmem [#allocation2], 96
      %1940 = vst [vmem:[%s1939] sm:$0xff] %v1927
      %1941 = vst [vmem:[%s1939 + $0x8] sm:$0xff] %v1928
      %1942 = vst [vmem:[%s1939 + $0x10] sm:$0xff] %v1929
      %1943 = vst [vmem:[%s1939 + $0x18] sm:$0xff] %v1930
      %1944 = vst [vmem:[%s1939 + $0x20] sm:$0xff] %v1931
      %1945 = vst [vmem:[%s1939 + $0x28] sm:$0xff] %v1932
      %1946 = vst [vmem:[%s1939 + $0x30] sm:$0xff] %v1933
      %1947 = vst [vmem:[%s1939 + $0x38] sm:$0xff] %v1934
      %1948 = vst [vmem:[%s1939 + $0x40] sm:$0xff] %v1935
      %1949 = vst [vmem:[%s1939 + $0x48] sm:$0xff] %v1936
      %1950 = vst [vmem:[%s1939 + $0x50] sm:$0xff] %v1937
      %1951 = vst [vmem:[%s1939 + $0x58] sm:$0xff] %v1938
      %v1952 = vld [vmem:[#allocation2] sm:$0xff]
      %v1953 = vld [vmem:[#allocation2 + $0x8] sm:$0xff]
      %v1954 = vld [vmem:[#allocation2 + $0x10] sm:$0xff]
      %v1955 = vld [vmem:[#allocation2 + $0x18] sm:$0xff]
      %v1956 = vld [vmem:[#allocation2 + $0x20] sm:$0xff]
      %v1957 = vld [vmem:[#allocation2 + $0x28] sm:$0xff]
      %v1958 = vld [vmem:[#allocation2 + $0x30] sm:$0xff]
      %v1959 = vld [vmem:[#allocation2 + $0x38] sm:$0xff]
      %v1960 = vld [vmem:[%s2] sm:$0xff]
      %v1961 = vld [vmem:[%s2 + $0x8] sm:$0xff]
      %v1962 = vld [vmem:[%s2 + $0x10] sm:$0xff]
      %v1963 = vld [vmem:[%s2 + $0x18] sm:$0xff]
      %v1964 = vld [vmem:[%s2 + $0x20] sm:$0xff]
      %v1965 = vld [vmem:[%s2 + $0x28] sm:$0xff]
      %v1966 = vld [vmem:[%s2 + $0x30] sm:$0xff]
      %v1967 = vld [vmem:[%s2 + $0x38] sm:$0xff]
      %v1968 = vld [vmem:[%s2 + $0x40] sm:$0xff]
      %v1969 = vld [vmem:[%s2 + $0x48] sm:$0xff]
      %v1970 = vld [vmem:[%s2 + $0x50] sm:$0xff]
      %v1971 = vld [vmem:[%s2 + $0x58] sm:$0xff]
      %v1972 = vld [vmem:[%s2 + $0x60] sm:$0xff]
      %v1973 = vld [vmem:[%s2 + $0x68] sm:$0xff]
      %v1974 = vld [vmem:[%s2 + $0x70] sm:$0xff]
      %v1975 = vld [vmem:[%s2 + $0x78] sm:$0xff]
      %v1976 = vld [vmem:[%s1939] sm:$0xff]
      %v1977 = vld [vmem:[%s1939 + $0x8] sm:$0xff]
      %v1978 = vld [vmem:[%s1939 + $0x10] sm:$0xff]
      %v1979 = vld [vmem:[%s1939 + $0x18] sm:$0xff]
      %v1980 = vld [vmem:[%s1939 + $0x20] sm:$0xff]
      %v1981 = vld [vmem:[%s1939 + $0x28] sm:$0xff]
      %v1982 = vld [vmem:[%s1939 + $0x30] sm:$0xff]
      %v1983 = vld [vmem:[%s1939 + $0x38] sm:$0xff]
      %s1984 = scalar_lea.vmem %s2, 128
      %v1985 = vld [vmem:[%s1984] sm:$0xff]
      %v1986 = vld [vmem:[%s1984 + $0x8] sm:$0xff]
      %v1987 = vld [vmem:[%s1984 + $0x10] sm:$0xff]
      %v1988 = vld [vmem:[%s1984 + $0x18] sm:$0xff]
      %v1989 = vld [vmem:[%s1984 + $0x20] sm:$0xff]
      %v1990 = vld [vmem:[%s1984 + $0x28] sm:$0xff]
      %v1991 = vld [vmem:[%s1984 + $0x30] sm:$0xff]
      %v1992 = vld [vmem:[%s1984 + $0x38] sm:$0xff]
      %v1993 = vld [vmem:[%s1984 + $0x40] sm:$0xff]
      %v1994 = vld [vmem:[%s1984 + $0x48] sm:$0xff]
      %v1995 = vld [vmem:[%s1984 + $0x50] sm:$0xff]
      %v1996 = vld [vmem:[%s1984 + $0x58] sm:$0xff]
      %v1997 = vld [vmem:[%s1984 + $0x60] sm:$0xff]
      %v1998 = vld [vmem:[%s1984 + $0x68] sm:$0xff]
      %v1999 = vld [vmem:[%s1984 + $0x70] sm:$0xff]
      %v2000 = vld [vmem:[%s1984 + $0x78] sm:$0xff]
      %v2017 = vunpack.c.l.b16 %v1985
      %v2018 = vunpack.c.h.b16 %v1985
      %v2019 = vunpack.c.l.b16 %v1986
      %v2020 = vunpack.c.h.b16 %v1986
      %v2021 = vunpack.c.l.b16 %v1987
      %v2022 = vunpack.c.h.b16 %v1987
      %v2023 = vunpack.c.l.b16 %v1988
      %v2024 = vunpack.c.h.b16 %v1988
      %v2025 = vunpack.c.l.b16 %v1989
      %v2026 = vunpack.c.h.b16 %v1989
      %v2027 = vunpack.c.l.b16 %v1990
      %v2028 = vunpack.c.h.b16 %v1990
      %v2029 = vunpack.c.l.b16 %v1991
      %v2030 = vunpack.c.h.b16 %v1991
      %v2031 = vunpack.c.l.b16 %v1992
      %v2032 = vunpack.c.h.b16 %v1992
      %v2033 = vunpack.c.l.b16 %v1993
      %v2034 = vunpack.c.h.b16 %v1993
      %v2035 = vunpack.c.l.b16 %v1994
      %v2036 = vunpack.c.h.b16 %v1994
      %v2037 = vunpack.c.l.b16 %v1995
      %v2038 = vunpack.c.h.b16 %v1995
      %v2039 = vunpack.c.l.b16 %v1996
      %v2040 = vunpack.c.h.b16 %v1996
      %v2041 = vunpack.c.l.b16 %v1997
      %v2042 = vunpack.c.h.b16 %v1997
      %v2043 = vunpack.c.l.b16 %v1998
      %v2044 = vunpack.c.h.b16 %v1998
      %v2045 = vunpack.c.l.b16 %v1999
      %v2046 = vunpack.c.h.b16 %v1999
      %v2047 = vunpack.c.l.b16 %v2000
      %v2048 = vunpack.c.h.b16 %v2000
      %v2049 = vpack.c.b16 %v2019, %v2017
      %v2050 = vpack.c.b16 %v2020, %v2018
      %v2051 = vpack.c.b16 %v2023, %v2021
      %v2052 = vpack.c.b16 %v2024, %v2022
      %v2053 = vpack.c.b16 %v2027, %v2025
      %v2054 = vpack.c.b16 %v2028, %v2026
      %v2055 = vpack.c.b16 %v2031, %v2029
      %v2056 = vpack.c.b16 %v2032, %v2030
      %v2057 = vpack.c.b16 %v2035, %v2033
      %v2058 = vpack.c.b16 %v2036, %v2034
      %v2059 = vpack.c.b16 %v2039, %v2037
      %v2060 = vpack.c.b16 %v2040, %v2038
      %v2061 = vpack.c.b16 %v2043, %v2041
      %v2062 = vpack.c.b16 %v2044, %v2042
      %v2063 = vpack.c.b16 %v2047, %v2045
      %v2064 = vpack.c.b16 %v2048, %v2046
      %2081 = vmatprep.subr.bf16.mxu0 %v2050
      %2082 = vmatpush1.bf16.msra.mxu0 %v2049
      %2083 = vmatprep.subr.bf16.mxu0 %v2052
      %2084 = vmatpush1.bf16.msra.mxu0 %v2051
      %2085 = vmatprep.subr.bf16.mxu0 %v2054
      %2086 = vmatpush1.bf16.msra.mxu0 %v2053
      %2087 = vmatprep.subr.bf16.mxu0 %v2056
      %2088 = vmatpush1.bf16.msra.mxu0 %v2055
      %2089 = vmatprep.subr.bf16.mxu0 %v2058
      %2090 = vmatpush1.bf16.msra.mxu0 %v2057
      %2091 = vmatprep.subr.bf16.mxu0 %v2060
      %2092 = vmatpush1.bf16.msra.mxu0 %v2059
      %2093 = vmatprep.subr.bf16.mxu0 %v2062
      %2094 = vmatpush1.bf16.msra.mxu0 %v2061
      %2095 = vmatprep.subr.bf16.mxu0 %v2064
      %2096 = vmatpush1.bf16.msra.mxu0 %v2063
      %2097 = vmatprep.subr.bf16.mxu0 0
      %2098 = vmatpush1.bf16.msra.mxu0 0
      %2099 = vmatprep.subr.bf16.mxu0 0
      %2100 = vmatpush1.bf16.msra.mxu0 0
      %2101 = vmatprep.subr.bf16.mxu0 0
      %2102 = vmatpush1.bf16.msra.mxu0 0
      %2103 = vmatprep.subr.bf16.mxu0 0
      %2104 = vmatpush1.bf16.msra.mxu0 0
      %2105 = vmatprep.subr.bf16.mxu0 0
      %2106 = vmatpush1.bf16.msra.mxu0 0
      %2107 = vmatprep.subr.bf16.mxu0 0
      %2108 = vmatpush1.bf16.msra.mxu0 0
      %2109 = vmatprep.subr.bf16.mxu0 0
      %2110 = vmatpush1.bf16.msra.mxu0 0
      %2111 = vmatprep.subr.bf16.mxu0 0
      %2112 = vmatpush1.bf16.msra.mxu0 0
      %2113 = vmatprep.mubr.bf16.mxu0 0
      %2114 = vmatmul.mubr.bf16.gmra.mrb[0].mxu0 %v1976
      %v2115 = vpop.f32.mrb[0].mxu0
      %v2116 = vadd.f32 0.0, %v2115
      %v2117 = vpop.f32.mrb[0].mxu0
      %v2118 = vadd.f32 0.0, %v2117
      %v2119 = vpop.f32.mrb[0].mxu0
      %v2120 = vadd.f32 0.0, %v2119
      %v2121 = vpop.f32.mrb[0].mxu0
      %v2122 = vadd.f32 0.0, %v2121
      %2123 = vmatprep.mubr.bf16.mxu0 0
      %2124 = vmatmul.mubr.bf16.gmra.mrb[0].mxu0 %v1977
      %v2125 = vpop.f32.mrb[0].mxu0
      %v2126 = vadd.f32 0.0, %v2125
      %v2127 = vpop.f32.mrb[0].mxu0
      %v2128 = vadd.f32 0.0, %v2127
      %v2129 = vpop.f32.mrb[0].mxu0
      %v2130 = vadd.f32 0.0, %v2129
      %v2131 = vpop.f32.mrb[0].mxu0
      %v2132 = vadd.f32 0.0, %v2131
      %2133 = vmatprep.mubr.bf16.mxu0 0
      %2134 = vmatmul.mubr.bf16.gmra.mrb[0].mxu0 %v1978
      %v2135 = vpop.f32.mrb[0].mxu0
      %v2136 = vadd.f32 0.0, %v2135
      %v2137 = vpop.f32.mrb[0].mxu0
      %v2138 = vadd.f32 0.0, %v2137
      %v2139 = vpop.f32.mrb[0].mxu0
      %v2140 = vadd.f32 0.0, %v2139
      %v2141 = vpop.f32.mrb[0].mxu0
      %v2142 = vadd.f32 0.0, %v2141
      %2143 = vmatprep.mubr.bf16.mxu0 0
      %2144 = vmatmul.mubr.bf16.gmra.mrb[0].mxu0 %v1979
      %v2145 = vpop.f32.mrb[0].mxu0
      %v2146 = vadd.f32 0.0, %v2145
      %v2147 = vpop.f32.mrb[0].mxu0
      %v2148 = vadd.f32 0.0, %v2147
      %v2149 = vpop.f32.mrb[0].mxu0
      %v2150 = vadd.f32 0.0, %v2149
      %v2151 = vpop.f32.mrb[0].mxu0
      %v2152 = vadd.f32 0.0, %v2151
      %2153 = vmatprep.mubr.bf16.mxu0 0
      %2154 = vmatmul.mubr.bf16.gmra.mrb[0].mxu0 %v1980
      %v2155 = vpop.f32.mrb[0].mxu0
      %v2156 = vadd.f32 0.0, %v2155
      %v2157 = vpop.f32.mrb[0].mxu0
      %v2158 = vadd.f32 0.0, %v2157
      %v2159 = vpop.f32.mrb[0].mxu0
      %v2160 = vadd.f32 0.0, %v2159
      %v2161 = vpop.f32.mrb[0].mxu0
      %v2162 = vadd.f32 0.0, %v2161
      %2163 = vmatprep.mubr.bf16.mxu0 0
      %2164 = vmatmul.mubr.bf16.gmra.mrb[0].mxu0 %v1981
      %v2165 = vpop.f32.mrb[0].mxu0
      %v2166 = vadd.f32 0.0, %v2165
      %v2167 = vpop.f32.mrb[0].mxu0
      %v2168 = vadd.f32 0.0, %v2167
      %v2169 = vpop.f32.mrb[0].mxu0
      %v2170 = vadd.f32 0.0, %v2169
      %v2171 = vpop.f32.mrb[0].mxu0
      %v2172 = vadd.f32 0.0, %v2171
      %2173 = vmatprep.mubr.bf16.mxu0 0
      %2174 = vmatmul.mubr.bf16.gmra.mrb[0].mxu0 %v1982
      %v2175 = vpop.f32.mrb[0].mxu0
      %v2176 = vadd.f32 0.0, %v2175
      %v2177 = vpop.f32.mrb[0].mxu0
      %v2178 = vadd.f32 0.0, %v2177
      %v2179 = vpop.f32.mrb[0].mxu0
      %v2180 = vadd.f32 0.0, %v2179
      %v2181 = vpop.f32.mrb[0].mxu0
      %v2182 = vadd.f32 0.0, %v2181
      %2183 = vmatprep.mubr.bf16.mxu0 0
      %2184 = vmatmul.mubr.bf16.gmra.mrb[0].mxu0 %v1983
      %v2185 = vpop.f32.mrb[0].mxu0
      %v2186 = vadd.f32 0.0, %v2185
      %v2187 = vpop.f32.mrb[0].mxu0
      %v2188 = vadd.f32 0.0, %v2187
      %v2189 = vpop.f32.mrb[0].mxu0
      %v2190 = vadd.f32 0.0, %v2189
      %v2191 = vpop.f32.mrb[0].mxu0
      %v2192 = vadd.f32 0.0, %v2191
      %2193 = vdwg.mxu0
      %v2210 = vunpack.c.l.b16 %v1960
      %v2211 = vunpack.c.h.b16 %v1960
      %v2212 = vunpack.c.l.b16 %v1961
      %v2213 = vunpack.c.h.b16 %v1961
      %v2214 = vunpack.c.l.b16 %v1962
      %v2215 = vunpack.c.h.b16 %v1962
      %v2216 = vunpack.c.l.b16 %v1963
      %v2217 = vunpack.c.h.b16 %v1963
      %v2218 = vunpack.c.l.b16 %v1964
      %v2219 = vunpack.c.h.b16 %v1964
      %v2220 = vunpack.c.l.b16 %v1965
      %v2221 = vunpack.c.h.b16 %v1965
      %v2222 = vunpack.c.l.b16 %v1966
      %v2223 = vunpack.c.h.b16 %v1966
      %v2224 = vunpack.c.l.b16 %v1967
      %v2225 = vunpack.c.h.b16 %v1967
      %v2226 = vunpack.c.l.b16 %v1968
      %v2227 = vunpack.c.h.b16 %v1968
      %v2228 = vunpack.c.l.b16 %v1969
      %v2229 = vunpack.c.h.b16 %v1969
      %v2230 = vunpack.c.l.b16 %v1970
      %v2231 = vunpack.c.h.b16 %v1970
      %v2232 = vunpack.c.l.b16 %v1971
      %v2233 = vunpack.c.h.b16 %v1971
      %v2234 = vunpack.c.l.b16 %v1972
      %v2235 = vunpack.c.h.b16 %v1972
      %v2236 = vunpack.c.l.b16 %v1973
      %v2237 = vunpack.c.h.b16 %v1973
      %v2238 = vunpack.c.l.b16 %v1974
      %v2239 = vunpack.c.h.b16 %v1974
      %v2240 = vunpack.c.l.b16 %v1975
      %v2241 = vunpack.c.h.b16 %v1975
      %v2242 = vpack.c.b16 %v2212, %v2210
      %v2243 = vpack.c.b16 %v2213, %v2211
      %v2244 = vpack.c.b16 %v2216, %v2214
      %v2245 = vpack.c.b16 %v2217, %v2215
      %v2246 = vpack.c.b16 %v2220, %v2218
      %v2247 = vpack.c.b16 %v2221, %v2219
      %v2248 = vpack.c.b16 %v2224, %v2222
      %v2249 = vpack.c.b16 %v2225, %v2223
      %v2250 = vpack.c.b16 %v2228, %v2226
      %v2251 = vpack.c.b16 %v2229, %v2227
      %v2252 = vpack.c.b16 %v2232, %v2230
      %v2253 = vpack.c.b16 %v2233, %v2231
      %v2254 = vpack.c.b16 %v2236, %v2234
      %v2255 = vpack.c.b16 %v2237, %v2235
      %v2256 = vpack.c.b16 %v2240, %v2238
      %v2257 = vpack.c.b16 %v2241, %v2239
      %2274 = vmatprep.subr.bf16.mxu0 %v2243
      %2275 = vmatpush1.bf16.msra.mxu0 %v2242
      %2276 = vmatprep.subr.bf16.mxu0 %v2245
      %2277 = vmatpush1.bf16.msra.mxu0 %v2244
      %2278 = vmatprep.subr.bf16.mxu0 %v2247
      %2279 = vmatpush1.bf16.msra.mxu0 %v2246
      %2280 = vmatprep.subr.bf16.mxu0 %v2249
      %2281 = vmatpush1.bf16.msra.mxu0 %v2248
      %2282 = vmatprep.subr.bf16.mxu0 %v2251
      %2283 = vmatpush1.bf16.msra.mxu0 %v2250
      %2284 = vmatprep.subr.bf16.mxu0 %v2253
      %2285 = vmatpush1.bf16.msra.mxu0 %v2252
      %2286 = vmatprep.subr.bf16.mxu0 %v2255
      %2287 = vmatpush1.bf16.msra.mxu0 %v2254
      %2288 = vmatprep.subr.bf16.mxu0 %v2257
      %2289 = vmatpush1.bf16.msra.mxu0 %v2256
      %2290 = vmatprep.subr.bf16.mxu0 0
      %2291 = vmatpush1.bf16.msra.mxu0 0
      %2292 = vmatprep.subr.bf16.mxu0 0
      %2293 = vmatpush1.bf16.msra.mxu0 0
      %2294 = vmatprep.subr.bf16.mxu0 0
      %2295 = vmatpush1.bf16.msra.mxu0 0
      %2296 = vmatprep.subr.bf16.mxu0 0
      %2297 = vmatpush1.bf16.msra.mxu0 0
      %2298 = vmatprep.subr.bf16.mxu0 0
      %2299 = vmatpush1.bf16.msra.mxu0 0
      %2300 = vmatprep.subr.bf16.mxu0 0
      %2301 = vmatpush1.bf16.msra.mxu0 0
      %2302 = vmatprep.subr.bf16.mxu0 0
      %2303 = vmatpush1.bf16.msra.mxu0 0
      %2304 = vmatprep.subr.bf16.mxu0 0
      %2305 = vmatpush1.bf16.msra.mxu0 0
      %2306 = vmatprep.mubr.bf16.mxu0 0
      %2307 = vmatmul.mubr.bf16.gmra.mrb[0].mxu0 %v1952
      %v2308 = vpop.f32.mrb[0].mxu0
      %v2309 = vadd.f32 %v2116, %v2308
      %v2310 = vpop.f32.mrb[0].mxu0
      %v2311 = vadd.f32 %v2118, %v2310
      %v2312 = vpop.f32.mrb[0].mxu0
      %v2313 = vadd.f32 %v2120, %v2312
      %v2314 = vpop.f32.mrb[0].mxu0
      %v2315 = vadd.f32 %v2122, %v2314
      %2316 = vmatprep.mubr.bf16.mxu0 0
      %2317 = vmatmul.mubr.bf16.gmra.mrb[0].mxu0 %v1953
      %v2318 = vpop.f32.mrb[0].mxu0
      %v2319 = vadd.f32 %v2126, %v2318
      %v2320 = vpop.f32.mrb[0].mxu0
      %v2321 = vadd.f32 %v2128, %v2320
      %v2322 = vpop.f32.mrb[0].mxu0
      %v2323 = vadd.f32 %v2130, %v2322
      %v2324 = vpop.f32.mrb[0].mxu0
      %v2325 = vadd.f32 %v2132, %v2324
      %2326 = vmatprep.mubr.bf16.mxu0 0
      %2327 = vmatmul.mubr.bf16.gmra.mrb[0].mxu0 %v1954
      %v2328 = vpop.f32.mrb[0].mxu0
      %v2329 = vadd.f32 %v2136, %v2328
      %v2330 = vpop.f32.mrb[0].mxu0
      %v2331 = vadd.f32 %v2138, %v2330
      %v2332 = vpop.f32.mrb[0].mxu0
      %v2333 = vadd.f32 %v2140, %v2332
      %v2334 = vpop.f32.mrb[0].mxu0
      %v2335 = vadd.f32 %v2142, %v2334
      %2336 = vmatprep.mubr.bf16.mxu0 0
      %2337 = vmatmul.mubr.bf16.gmra.mrb[0].mxu0 %v1955
      %v2338 = vpop.f32.mrb[0].mxu0
      %v2339 = vadd.f32 %v2146, %v2338
      %v2340 = vpop.f32.mrb[0].mxu0
      %v2341 = vadd.f32 %v2148, %v2340
      %v2342 = vpop.f32.mrb[0].mxu0
      %v2343 = vadd.f32 %v2150, %v2342
      %v2344 = vpop.f32.mrb[0].mxu0
      %v2345 = vadd.f32 %v2152, %v2344
      %2346 = vmatprep.mubr.bf16.mxu0 0
      %2347 = vmatmul.mubr.bf16.gmra.mrb[0].mxu0 %v1956
      %v2348 = vpop.f32.mrb[0].mxu0
      %v2349 = vadd.f32 %v2156, %v2348
      %v2350 = vpop.f32.mrb[0].mxu0
      %v2351 = vadd.f32 %v2158, %v2350
      %v2352 = vpop.f32.mrb[0].mxu0
      %v2353 = vadd.f32 %v2160, %v2352
      %v2354 = vpop.f32.mrb[0].mxu0
      %v2355 = vadd.f32 %v2162, %v2354
      %2356 = vmatprep.mubr.bf16.mxu0 0
      %2357 = vmatmul.mubr.bf16.gmra.mrb[0].mxu0 %v1957
      %v2358 = vpop.f32.mrb[0].mxu0
      %v2359 = vadd.f32 %v2166, %v2358
      %v2360 = vpop.f32.mrb[0].mxu0
      %v2361 = vadd.f32 %v2168, %v2360
      %v2362 = vpop.f32.mrb[0].mxu0
      %v2363 = vadd.f32 %v2170, %v2362
      %v2364 = vpop.f32.mrb[0].mxu0
      %v2365 = vadd.f32 %v2172, %v2364
      %2366 = vmatprep.mubr.bf16.mxu0 0
      %2367 = vmatmul.mubr.bf16.gmra.mrb[0].mxu0 %v1958
      %v2368 = vpop.f32.mrb[0].mxu0
      %v2369 = vadd.f32 %v2176, %v2368
      %v2370 = vpop.f32.mrb[0].mxu0
      %v2371 = vadd.f32 %v2178, %v2370
      %v2372 = vpop.f32.mrb[0].mxu0
      %v2373 = vadd.f32 %v2180, %v2372
      %v2374 = vpop.f32.mrb[0].mxu0
      %v2375 = vadd.f32 %v2182, %v2374
      %2376 = vmatprep.mubr.bf16.mxu0 0
      %2377 = vmatmul.mubr.bf16.gmra.mrb[0].mxu0 %v1959
      %v2378 = vpop.f32.mrb[0].mxu0
      %v2379 = vadd.f32 %v2186, %v2378
      %v2380 = vpop.f32.mrb[0].mxu0
      %v2381 = vadd.f32 %v2188, %v2380
      %v2382 = vpop.f32.mrb[0].mxu0
      %v2383 = vadd.f32 %v2190, %v2382
      %v2384 = vpop.f32.mrb[0].mxu0
      %v2385 = vadd.f32 %v2192, %v2384
      %2386 = vdwg.mxu0
      %s2387 = scalar_lea.vmem [#allocation2], 16
      %v2388 = vld [vmem:[%s2387] sm:$0xff]
      %v2389 = vld [vmem:[%s2387 + $0x8] sm:$0xff]
      %v2390 = vld [vmem:[%s2387 + $0x10] sm:$0xff]
      %v2391 = vld [vmem:[%s2387 + $0x18] sm:$0xff]
      %v2392 = vld [vmem:[%s2387 + $0x20] sm:$0xff]
      %v2393 = vld [vmem:[%s2387 + $0x28] sm:$0xff]
      %v2394 = vld [vmem:[%s2387 + $0x30] sm:$0xff]
      %v2395 = vld [vmem:[%s2387 + $0x38] sm:$0xff]
      %s2396 = scalar_lea.vmem %s2, 256
      %v2397 = vld [vmem:[%s2396] sm:$0xff]
      %v2398 = vld [vmem:[%s2396 + $0x8] sm:$0xff]
      %v2399 = vld [vmem:[%s2396 + $0x10] sm:$0xff]
      %v2400 = vld [vmem:[%s2396 + $0x18] sm:$0xff]
      %v2401 = vld [vmem:[%s2396 + $0x20] sm:$0xff]
      %v2402 = vld [vmem:[%s2396 + $0x28] sm:$0xff]
      %v2403 = vld [vmem:[%s2396 + $0x30] sm:$0xff]
      %v2404 = vld [vmem:[%s2396 + $0x38] sm:$0xff]
      %v2405 = vld [vmem:[%s2396 + $0x40] sm:$0xff]
      %v2406 = vld [vmem:[%s2396 + $0x48] sm:$0xff]
      %v2407 = vld [vmem:[%s2396 + $0x50] sm:$0xff]
      %v2408 = vld [vmem:[%s2396 + $0x58] sm:$0xff]
      %v2409 = vld [vmem:[%s2396 + $0x60] sm:$0xff]
      %v2410 = vld [vmem:[%s2396 + $0x68] sm:$0xff]
      %v2411 = vld [vmem:[%s2396 + $0x70] sm:$0xff]
      %v2412 = vld [vmem:[%s2396 + $0x78] sm:$0xff]
      %v2429 = vunpack.c.l.b16 %v2397
      %v2430 = vunpack.c.h.b16 %v2397
      %v2431 = vunpack.c.l.b16 %v2398
      %v2432 = vunpack.c.h.b16 %v2398
      %v2433 = vunpack.c.l.b16 %v2399
      %v2434 = vunpack.c.h.b16 %v2399
      %v2435 = vunpack.c.l.b16 %v2400
      %v2436 = vunpack.c.h.b16 %v2400
      %v2437 = vunpack.c.l.b16 %v2401
      %v2438 = vunpack.c.h.b16 %v2401
      %v2439 = vunpack.c.l.b16 %v2402
      %v2440 = vunpack.c.h.b16 %v2402
      %v2441 = vunpack.c.l.b16 %v2403
      %v2442 = vunpack.c.h.b16 %v2403
      %v2443 = vunpack.c.l.b16 %v2404
      %v2444 = vunpack.c.h.b16 %v2404
      %v2445 = vunpack.c.l.b16 %v2405
      %v2446 = vunpack.c.h.b16 %v2405
      %v2447 = vunpack.c.l.b16 %v2406
      %v2448 = vunpack.c.h.b16 %v2406
      %v2449 = vunpack.c.l.b16 %v2407
      %v2450 = vunpack.c.h.b16 %v2407
      %v2451 = vunpack.c.l.b16 %v2408
      %v2452 = vunpack.c.h.b16 %v2408
      %v2453 = vunpack.c.l.b16 %v2409
      %v2454 = vunpack.c.h.b16 %v2409
      %v2455 = vunpack.c.l.b16 %v2410
      %v2456 = vunpack.c.h.b16 %v2410
      %v2457 = vunpack.c.l.b16 %v2411
      %v2458 = vunpack.c.h.b16 %v2411
      %v2459 = vunpack.c.l.b16 %v2412
      %v2460 = vunpack.c.h.b16 %v2412
      %v2461 = vpack.c.b16 %v2431, %v2429
      %v2462 = vpack.c.b16 %v2432, %v2430
      %v2463 = vpack.c.b16 %v2435, %v2433
      %v2464 = vpack.c.b16 %v2436, %v2434
      %v2465 = vpack.c.b16 %v2439, %v2437
      %v2466 = vpack.c.b16 %v2440, %v2438
      %v2467 = vpack.c.b16 %v2443, %v2441
      %v2468 = vpack.c.b16 %v2444, %v2442
      %v2469 = vpack.c.b16 %v2447, %v2445
      %v2470 = vpack.c.b16 %v2448, %v2446
      %v2471 = vpack.c.b16 %v2451, %v2449
      %v2472 = vpack.c.b16 %v2452, %v2450
      %v2473 = vpack.c.b16 %v2455, %v2453
      %v2474 = vpack.c.b16 %v2456, %v2454
      %v2475 = vpack.c.b16 %v2459, %v2457
      %v2476 = vpack.c.b16 %v2460, %v2458
      %2493 = vmatprep.subr.bf16.mxu0 %v2462
      %2494 = vmatpush1.bf16.msra.mxu0 %v2461
      %2495 = vmatprep.subr.bf16.mxu0 %v2464
      %2496 = vmatpush1.bf16.msra.mxu0 %v2463
      %2497 = vmatprep.subr.bf16.mxu0 %v2466
      %2498 = vmatpush1.bf16.msra.mxu0 %v2465
      %2499 = vmatprep.subr.bf16.mxu0 %v2468
      %2500 = vmatpush1.bf16.msra.mxu0 %v2467
      %2501 = vmatprep.subr.bf16.mxu0 %v2470
      %2502 = vmatpush1.bf16.msra.mxu0 %v2469
      %2503 = vmatprep.subr.bf16.mxu0 %v2472
      %2504 = vmatpush1.bf16.msra.mxu0 %v2471
      %2505 = vmatprep.subr.bf16.mxu0 %v2474
      %2506 = vmatpush1.bf16.msra.mxu0 %v2473
      %2507 = vmatprep.subr.bf16.mxu0 %v2476
      %2508 = vmatpush1.bf16.msra.mxu0 %v2475
      %2509 = vmatprep.subr.bf16.mxu0 0
      %2510 = vmatpush1.bf16.msra.mxu0 0
      %2511 = vmatprep.subr.bf16.mxu0 0
      %2512 = vmatpush1.bf16.msra.mxu0 0
      %2513 = vmatprep.subr.bf16.mxu0 0
      %2514 = vmatpush1.bf16.msra.mxu0 0
      %2515 = vmatprep.subr.bf16.mxu0 0
      %2516 = vmatpush1.bf16.msra.mxu0 0
      %2517 = vmatprep.subr.bf16.mxu0 0
      %2518 = vmatpush1.bf16.msra.mxu0 0
      %2519 = vmatprep.subr.bf16.mxu0 0
      %2520 = vmatpush1.bf16.msra.mxu0 0
      %2521 = vmatprep.subr.bf16.mxu0 0
      %2522 = vmatpush1.bf16.msra.mxu0 0
      %2523 = vmatprep.subr.bf16.mxu0 0
      %2524 = vmatpush1.bf16.msra.mxu0 0
      %2525 = vmatprep.mubr.bf16.mxu0 0
      %2526 = vmatmul.mubr.bf16.gmra.mrb[0].mxu0 %v2388
      %v2527 = vpop.f32.mrb[0].mxu0
      %v2528 = vadd.f32 0.0, %v2527
      %v2529 = vpop.f32.mrb[0].mxu0
      %v2530 = vadd.f32 0.0, %v2529
      %v2531 = vpop.f32.mrb[0].mxu0
      %v2532 = vadd.f32 0.0, %v2531
      %v2533 = vpop.f32.mrb[0].mxu0
      %v2534 = vadd.f32 0.0, %v2533
      %2535 = vmatprep.mubr.bf16.mxu0 0
      %2536 = vmatmul.mubr.bf16.gmra.mrb[0].mxu0 %v2389
      %v2537 = vpop.f32.mrb[0].mxu0
      %v2538 = vadd.f32 0.0, %v2537
      %v2539 = vpop.f32.mrb[0].mxu0
      %v2540 = vadd.f32 0.0, %v2539
      %v2541 = vpop.f32.mrb[0].mxu0
      %v2542 = vadd.f32 0.0, %v2541
      %v2543 = vpop.f32.mrb[0].mxu0
      %v2544 = vadd.f32 0.0, %v2543
      %2545 = vmatprep.mubr.bf16.mxu0 0
      %2546 = vmatmul.mubr.bf16.gmra.mrb[0].mxu0 %v2390
      %v2547 = vpop.f32.mrb[0].mxu0
      %v2548 = vadd.f32 0.0, %v2547
      %v2549 = vpop.f32.mrb[0].mxu0
      %v2550 = vadd.f32 0.0, %v2549
      %v2551 = vpop.f32.mrb[0].mxu0
      %v2552 = vadd.f32 0.0, %v2551
      %v2553 = vpop.f32.mrb[0].mxu0
      %v2554 = vadd.f32 0.0, %v2553
      %2555 = vmatprep.mubr.bf16.mxu0 0
      %2556 = vmatmul.mubr.bf16.gmra.mrb[0].mxu0 %v2391
      %v2557 = vpop.f32.mrb[0].mxu0
      %v2558 = vadd.f32 0.0, %v2557
      %v2559 = vpop.f32.mrb[0].mxu0
      %v2560 = vadd.f32 0.0, %v2559
      %v2561 = vpop.f32.mrb[0].mxu0
      %v2562 = vadd.f32 0.0, %v2561
      %v2563 = vpop.f32.mrb[0].mxu0
      %v2564 = vadd.f32 0.0, %v2563
      %2565 = vmatprep.mubr.bf16.mxu0 0
      %2566 = vmatmul.mubr.bf16.gmra.mrb[0].mxu0 %v2392
      %v2567 = vpop.f32.mrb[0].mxu0
      %v2568 = vadd.f32 0.0, %v2567
      %v2569 = vpop.f32.mrb[0].mxu0
      %v2570 = vadd.f32 0.0, %v2569
      %v2571 = vpop.f32.mrb[0].mxu0
      %v2572 = vadd.f32 0.0, %v2571
      %v2573 = vpop.f32.mrb[0].mxu0
      %v2574 = vadd.f32 0.0, %v2573
      %2575 = vmatprep.mubr.bf16.mxu0 0
      %2576 = vmatmul.mubr.bf16.gmra.mrb[0].mxu0 %v2393
      %v2577 = vpop.f32.mrb[0].mxu0
      %v2578 = vadd.f32 0.0, %v2577
      %v2579 = vpop.f32.mrb[0].mxu0
      %v2580 = vadd.f32 0.0, %v2579
      %v2581 = vpop.f32.mrb[0].mxu0
      %v2582 = vadd.f32 0.0, %v2581
      %v2583 = vpop.f32.mrb[0].mxu0
      %v2584 = vadd.f32 0.0, %v2583
      %2585 = vmatprep.mubr.bf16.mxu0 0
      %2586 = vmatmul.mubr.bf16.gmra.mrb[0].mxu0 %v2394
      %v2587 = vpop.f32.mrb[0].mxu0
      %v2588 = vadd.f32 0.0, %v2587
      %v2589 = vpop.f32.mrb[0].mxu0
      %v2590 = vadd.f32 0.0, %v2589
      %v2591 = vpop.f32.mrb[0].mxu0
      %v2592 = vadd.f32 0.0, %v2591
      %v2593 = vpop.f32.mrb[0].mxu0
      %v2594 = vadd.f32 0.0, %v2593
      %2595 = vmatprep.mubr.bf16.mxu0 0
      %2596 = vmatmul.mubr.bf16.gmra.mrb[0].mxu0 %v2395
      %v2597 = vpop.f32.mrb[0].mxu0
      %v2598 = vadd.f32 0.0, %v2597
      %v2599 = vpop.f32.mrb[0].mxu0
      %v2600 = vadd.f32 0.0, %v2599
      %v2601 = vpop.f32.mrb[0].mxu0
      %v2602 = vadd.f32 0.0, %v2601
      %v2603 = vpop.f32.mrb[0].mxu0
      %v2604 = vadd.f32 0.0, %v2603
      %2605 = vdwg.mxu0
      %v2606 = vadd.f32 %v2309, %v2528
      %v2607 = vadd.f32 %v2311, %v2530
      %v2608 = vadd.f32 %v2313, %v2532
      %v2609 = vadd.f32 %v2315, %v2534
      %v2610 = vadd.f32 %v2319, %v2538
      %v2611 = vadd.f32 %v2321, %v2540
      %v2612 = vadd.f32 %v2323, %v2542
      %v2613 = vadd.f32 %v2325, %v2544
      %v2614 = vadd.f32 %v2329, %v2548
      %v2615 = vadd.f32 %v2331, %v2550
      %v2616 = vadd.f32 %v2333, %v2552
      %v2617 = vadd.f32 %v2335, %v2554
      %v2618 = vadd.f32 %v2339, %v2558
      %v2619 = vadd.f32 %v2341, %v2560
      %v2620 = vadd.f32 %v2343, %v2562
      %v2621 = vadd.f32 %v2345, %v2564
      %v2622 = vadd.f32 %v2349, %v2568
      %v2623 = vadd.f32 %v2351, %v2570
      %v2624 = vadd.f32 %v2353, %v2572
      %v2625 = vadd.f32 %v2355, %v2574
      %v2626 = vadd.f32 %v2359, %v2578
      %v2627 = vadd.f32 %v2361, %v2580
      %v2628 = vadd.f32 %v2363, %v2582
      %v2629 = vadd.f32 %v2365, %v2584
      %v2630 = vadd.f32 %v2369, %v2588
      %v2631 = vadd.f32 %v2371, %v2590
      %v2632 = vadd.f32 %v2373, %v2592
      %v2633 = vadd.f32 %v2375, %v2594
      %v2634 = vadd.f32 %v2379, %v2598
      %v2635 = vadd.f32 %v2381, %v2600
      %v2636 = vadd.f32 %v2383, %v2602
      %v2637 = vadd.f32 %v2385, %v2604
      %s2638 = scalar_lea.vmem [#allocation2], 112
      %v2639 = vld [vmem:[%s2638] sm:$0xff]
      %v2640 = vld [vmem:[%s2638 + $0x8] sm:$0xff]
      %v2641 = vld [vmem:[%s2638 + $0x10] sm:$0xff]
      %v2642 = vld [vmem:[%s2638 + $0x18] sm:$0xff]
      %v2643 = vld [vmem:[%s2638 + $0x20] sm:$0xff]
      %v2644 = vld [vmem:[%s2638 + $0x28] sm:$0xff]
      %v2645 = vld [vmem:[%s2638 + $0x30] sm:$0xff]
      %v2646 = vld [vmem:[%s2638 + $0x38] sm:$0xff]
      %s2647 = scalar_lea.vmem %s2, 384
      %v2648 = vld [vmem:[%s2647] sm:$0xff]
      %v2649 = vld [vmem:[%s2647 + $0x8] sm:$0xff]
      %v2650 = vld [vmem:[%s2647 + $0x10] sm:$0xff]
      %v2651 = vld [vmem:[%s2647 + $0x18] sm:$0xff]
      %v2652 = vld [vmem:[%s2647 + $0x20] sm:$0xff]
      %v2653 = vld [vmem:[%s2647 + $0x28] sm:$0xff]
      %v2654 = vld [vmem:[%s2647 + $0x30] sm:$0xff]
      %v2655 = vld [vmem:[%s2647 + $0x38] sm:$0xff]
      %v2656 = vld [vmem:[%s2647 + $0x40] sm:$0xff]
      %v2657 = vld [vmem:[%s2647 + $0x48] sm:$0xff]
      %v2658 = vld [vmem:[%s2647 + $0x50] sm:$0xff]
      %v2659 = vld [vmem:[%s2647 + $0x58] sm:$0xff]
      %v2660 = vld [vmem:[%s2647 + $0x60] sm:$0xff]
      %v2661 = vld [vmem:[%s2647 + $0x68] sm:$0xff]
      %v2662 = vld [vmem:[%s2647 + $0x70] sm:$0xff]
      %v2663 = vld [vmem:[%s2647 + $0x78] sm:$0xff]
      %v2680 = vunpack.c.l.b16 %v2648
      %v2681 = vunpack.c.h.b16 %v2648
      %v2682 = vunpack.c.l.b16 %v2649
      %v2683 = vunpack.c.h.b16 %v2649
      %v2684 = vunpack.c.l.b16 %v2650
      %v2685 = vunpack.c.h.b16 %v2650
      %v2686 = vunpack.c.l.b16 %v2651
      %v2687 = vunpack.c.h.b16 %v2651
      %v2688 = vunpack.c.l.b16 %v2652
      %v2689 = vunpack.c.h.b16 %v2652
      %v2690 = vunpack.c.l.b16 %v2653
      %v2691 = vunpack.c.h.b16 %v2653
      %v2692 = vunpack.c.l.b16 %v2654
      %v2693 = vunpack.c.h.b16 %v2654
      %v2694 = vunpack.c.l.b16 %v2655
      %v2695 = vunpack.c.h.b16 %v2655
      %v2696 = vunpack.c.l.b16 %v2656
      %v2697 = vunpack.c.h.b16 %v2656
      %v2698 = vunpack.c.l.b16 %v2657
      %v2699 = vunpack.c.h.b16 %v2657
      %v2700 = vunpack.c.l.b16 %v2658
      %v2701 = vunpack.c.h.b16 %v2658
      %v2702 = vunpack.c.l.b16 %v2659
      %v2703 = vunpack.c.h.b16 %v2659
      %v2704 = vunpack.c.l.b16 %v2660
      %v2705 = vunpack.c.h.b16 %v2660
      %v2706 = vunpack.c.l.b16 %v2661
      %v2707 = vunpack.c.h.b16 %v2661
      %v2708 = vunpack.c.l.b16 %v2662
      %v2709 = vunpack.c.h.b16 %v2662
      %v2710 = vunpack.c.l.b16 %v2663
      %v2711 = vunpack.c.h.b16 %v2663
      %v2712 = vpack.c.b16 %v2682, %v2680
      %v2713 = vpack.c.b16 %v2683, %v2681
      %v2714 = vpack.c.b16 %v2686, %v2684
      %v2715 = vpack.c.b16 %v2687, %v2685
      %v2716 = vpack.c.b16 %v2690, %v2688
      %v2717 = vpack.c.b16 %v2691, %v2689
      %v2718 = vpack.c.b16 %v2694, %v2692
      %v2719 = vpack.c.b16 %v2695, %v2693
      %v2720 = vpack.c.b16 %v2698, %v2696
      %v2721 = vpack.c.b16 %v2699, %v2697
      %v2722 = vpack.c.b16 %v2702, %v2700
      %v2723 = vpack.c.b16 %v2703, %v2701
      %v2724 = vpack.c.b16 %v2706, %v2704
      %v2725 = vpack.c.b16 %v2707, %v2705
      %v2726 = vpack.c.b16 %v2710, %v2708
      %v2727 = vpack.c.b16 %v2711, %v2709
      %2744 = vmatprep.subr.bf16.mxu0 %v2713
      %2745 = vmatpush1.bf16.msra.mxu0 %v2712
      %2746 = vmatprep.subr.bf16.mxu0 %v2715
      %2747 = vmatpush1.bf16.msra.mxu0 %v2714
      %2748 = vmatprep.subr.bf16.mxu0 %v2717
      %2749 = vmatpush1.bf16.msra.mxu0 %v2716
      %2750 = vmatprep.subr.bf16.mxu0 %v2719
      %2751 = vmatpush1.bf16.msra.mxu0 %v2718
      %2752 = vmatprep.subr.bf16.mxu0 %v2721
      %2753 = vmatpush1.bf16.msra.mxu0 %v2720
      %2754 = vmatprep.subr.bf16.mxu0 %v2723
      %2755 = vmatpush1.bf16.msra.mxu0 %v2722
      %2756 = vmatprep.subr.bf16.mxu0 %v2725
      %2757 = vmatpush1.bf16.msra.mxu0 %v2724
      %2758 = vmatprep.subr.bf16.mxu0 %v2727
      %2759 = vmatpush1.bf16.msra.mxu0 %v2726
      %2760 = vmatprep.subr.bf16.mxu0 0
      %2761 = vmatpush1.bf16.msra.mxu0 0
      %2762 = vmatprep.subr.bf16.mxu0 0
      %2763 = vmatpush1.bf16.msra.mxu0 0
      %2764 = vmatprep.subr.bf16.mxu0 0
      %2765 = vmatpush1.bf16.msra.mxu0 0
      %2766 = vmatprep.subr.bf16.mxu0 0
      %2767 = vmatpush1.bf16.msra.mxu0 0
      %2768 = vmatprep.subr.bf16.mxu0 0
      %2769 = vmatpush1.bf16.msra.mxu0 0
      %2770 = vmatprep.subr.bf16.mxu0 0
      %2771 = vmatpush1.bf16.msra.mxu0 0
      %2772 = vmatprep.subr.bf16.mxu0 0
      %2773 = vmatpush1.bf16.msra.mxu0 0
      %2774 = vmatprep.subr.bf16.mxu0 0
      %2775 = vmatpush1.bf16.msra.mxu0 0
      %2776 = vmatprep.mubr.bf16.mxu0 0
      %2777 = vmatmul.mubr.bf16.gmra.mrb[0].mxu0 %v2639
      %v2778 = vpop.f32.mrb[0].mxu0
      %v2779 = vadd.f32 0.0, %v2778
      %v2780 = vpop.f32.mrb[0].mxu0
      %v2781 = vadd.f32 0.0, %v2780
      %v2782 = vpop.f32.mrb[0].mxu0
      %v2783 = vadd.f32 0.0, %v2782
      %v2784 = vpop.f32.mrb[0].mxu0
      %v2785 = vadd.f32 0.0, %v2784
      %2786 = vmatprep.mubr.bf16.mxu0 0
      %2787 = vmatmul.mubr.bf16.gmra.mrb[0].mxu0 %v2640
      %v2788 = vpop.f32.mrb[0].mxu0
      %v2789 = vadd.f32 0.0, %v2788
      %v2790 = vpop.f32.mrb[0].mxu0
      %v2791 = vadd.f32 0.0, %v2790
      %v2792 = vpop.f32.mrb[0].mxu0
      %v2793 = vadd.f32 0.0, %v2792
      %v2794 = vpop.f32.mrb[0].mxu0
      %v2795 = vadd.f32 0.0, %v2794
      %2796 = vmatprep.mubr.bf16.mxu0 0
      %2797 = vmatmul.mubr.bf16.gmra.mrb[0].mxu0 %v2641
      %v2798 = vpop.f32.mrb[0].mxu0
      %v2799 = vadd.f32 0.0, %v2798
      %v2800 = vpop.f32.mrb[0].mxu0
      %v2801 = vadd.f32 0.0, %v2800
      %v2802 = vpop.f32.mrb[0].mxu0
      %v2803 = vadd.f32 0.0, %v2802
      %v2804 = vpop.f32.mrb[0].mxu0
      %v2805 = vadd.f32 0.0, %v2804
      %2806 = vmatprep.mubr.bf16.mxu0 0
      %2807 = vmatmul.mubr.bf16.gmra.mrb[0].mxu0 %v2642
      %v2808 = vpop.f32.mrb[0].mxu0
      %v2809 = vadd.f32 0.0, %v2808
      %v2810 = vpop.f32.mrb[0].mxu0
      %v2811 = vadd.f32 0.0, %v2810
      %v2812 = vpop.f32.mrb[0].mxu0
      %v2813 = vadd.f32 0.0, %v2812
      %v2814 = vpop.f32.mrb[0].mxu0
      %v2815 = vadd.f32 0.0, %v2814
      %2816 = vmatprep.mubr.bf16.mxu0 0
      %2817 = vmatmul.mubr.bf16.gmra.mrb[0].mxu0 %v2643
      %v2818 = vpop.f32.mrb[0].mxu0
      %v2819 = vadd.f32 0.0, %v2818
      %v2820 = vpop.f32.mrb[0].mxu0
      %v2821 = vadd.f32 0.0, %v2820
      %v2822 = vpop.f32.mrb[0].mxu0
      %v2823 = vadd.f32 0.0, %v2822
      %v2824 = vpop.f32.mrb[0].mxu0
      %v2825 = vadd.f32 0.0, %v2824
      %2826 = vmatprep.mubr.bf16.mxu0 0
      %2827 = vmatmul.mubr.bf16.gmra.mrb[0].mxu0 %v2644
      %v2828 = vpop.f32.mrb[0].mxu0
      %v2829 = vadd.f32 0.0, %v2828
      %v2830 = vpop.f32.mrb[0].mxu0
      %v2831 = vadd.f32 0.0, %v2830
      %v2832 = vpop.f32.mrb[0].mxu0
      %v2833 = vadd.f32 0.0, %v2832
      %v2834 = vpop.f32.mrb[0].mxu0
      %v2835 = vadd.f32 0.0, %v2834
      %2836 = vmatprep.mubr.bf16.mxu0 0
      %2837 = vmatmul.mubr.bf16.gmra.mrb[0].mxu0 %v2645
      %v2838 = vpop.f32.mrb[0].mxu0
      %v2839 = vadd.f32 0.0, %v2838
      %v2840 = vpop.f32.mrb[0].mxu0
      %v2841 = vadd.f32 0.0, %v2840
      %v2842 = vpop.f32.mrb[0].mxu0
      %v2843 = vadd.f32 0.0, %v2842
      %v2844 = vpop.f32.mrb[0].mxu0
      %v2845 = vadd.f32 0.0, %v2844
      %2846 = vmatprep.mubr.bf16.mxu0 0
      %2847 = vmatmul.mubr.bf16.gmra.mrb[0].mxu0 %v2646
      %v2848 = vpop.f32.mrb[0].mxu0
      %v2849 = vadd.f32 0.0, %v2848
      %v2850 = vpop.f32.mrb[0].mxu0
      %v2851 = vadd.f32 0.0, %v2850
      %v2852 = vpop.f32.mrb[0].mxu0
      %v2853 = vadd.f32 0.0, %v2852
      %v2854 = vpop.f32.mrb[0].mxu0
      %v2855 = vadd.f32 0.0, %v2854
      %2856 = vdwg.mxu0
      %v2857 = vadd.f32 %v2606, %v2779
      %v2858 = vadd.f32 %v2607, %v2781
      %v2859 = vadd.f32 %v2608, %v2783
      %v2860 = vadd.f32 %v2609, %v2785
      %v2861 = vadd.f32 %v2610, %v2789
      %v2862 = vadd.f32 %v2611, %v2791
      %v2863 = vadd.f32 %v2612, %v2793
      %v2864 = vadd.f32 %v2613, %v2795
      %v2865 = vadd.f32 %v2614, %v2799
      %v2866 = vadd.f32 %v2615, %v2801
      %v2867 = vadd.f32 %v2616, %v2803
      %v2868 = vadd.f32 %v2617, %v2805
      %v2869 = vadd.f32 %v2618, %v2809
      %v2870 = vadd.f32 %v2619, %v2811
      %v2871 = vadd.f32 %v2620, %v2813
      %v2872 = vadd.f32 %v2621, %v2815
      %v2873 = vadd.f32 %v2622, %v2819
      %v2874 = vadd.f32 %v2623, %v2821
      %v2875 = vadd.f32 %v2624, %v2823
      %v2876 = vadd.f32 %v2625, %v2825
      %v2877 = vadd.f32 %v2626, %v2829
      %v2878 = vadd.f32 %v2627, %v2831
      %v2879 = vadd.f32 %v2628, %v2833
      %v2880 = vadd.f32 %v2629, %v2835
      %v2881 = vadd.f32 %v2630, %v2839
      %v2882 = vadd.f32 %v2631, %v2841
      %v2883 = vadd.f32 %v2632, %v2843
      %v2884 = vadd.f32 %v2633, %v2845
      %v2885 = vadd.f32 %v2634, %v2849
      %v2886 = vadd.f32 %v2635, %v2851
      %v2887 = vadd.f32 %v2636, %v2853
      %v2888 = vadd.f32 %v2637, %v2855
      %s2889 = scalar_lea.vmem [#allocation2], 32
      %v2890 = vld [vmem:[%s2889] sm:$0xff]
      %v2891 = vld [vmem:[%s2889 + $0x8] sm:$0xff]
      %v2892 = vld [vmem:[%s2889 + $0x10] sm:$0xff]
      %v2893 = vld [vmem:[%s2889 + $0x18] sm:$0xff]
      %v2894 = vld [vmem:[%s2889 + $0x20] sm:$0xff]
      %v2895 = vld [vmem:[%s2889 + $0x28] sm:$0xff]
      %v2896 = vld [vmem:[%s2889 + $0x30] sm:$0xff]
      %v2897 = vld [vmem:[%s2889 + $0x38] sm:$0xff]
      %s2898 = scalar_lea.vmem %s2, 512
      %v2899 = vld [vmem:[%s2898] sm:$0xff]
      %v2900 = vld [vmem:[%s2898 + $0x8] sm:$0xff]
      %v2901 = vld [vmem:[%s2898 + $0x10] sm:$0xff]
      %v2902 = vld [vmem:[%s2898 + $0x18] sm:$0xff]
      %v2903 = vld [vmem:[%s2898 + $0x20] sm:$0xff]
      %v2904 = vld [vmem:[%s2898 + $0x28] sm:$0xff]
      %v2905 = vld [vmem:[%s2898 + $0x30] sm:$0xff]
      %v2906 = vld [vmem:[%s2898 + $0x38] sm:$0xff]
      %v2907 = vld [vmem:[%s2898 + $0x40] sm:$0xff]
      %v2908 = vld [vmem:[%s2898 + $0x48] sm:$0xff]
      %v2909 = vld [vmem:[%s2898 + $0x50] sm:$0xff]
      %v2910 = vld [vmem:[%s2898 + $0x58] sm:$0xff]
      %v2911 = vld [vmem:[%s2898 + $0x60] sm:$0xff]
      %v2912 = vld [vmem:[%s2898 + $0x68] sm:$0xff]
      %v2913 = vld [vmem:[%s2898 + $0x70] sm:$0xff]
      %v2914 = vld [vmem:[%s2898 + $0x78] sm:$0xff]
      %v2931 = vunpack.c.l.b16 %v2899
      %v2932 = vunpack.c.h.b16 %v2899
      %v2933 = vunpack.c.l.b16 %v2900
      %v2934 = vunpack.c.h.b16 %v2900
      %v2935 = vunpack.c.l.b16 %v2901
      %v2936 = vunpack.c.h.b16 %v2901
      %v2937 = vunpack.c.l.b16 %v2902
      %v2938 = vunpack.c.h.b16 %v2902
      %v2939 = vunpack.c.l.b16 %v2903
      %v2940 = vunpack.c.h.b16 %v2903
      %v2941 = vunpack.c.l.b16 %v2904
      %v2942 = vunpack.c.h.b16 %v2904
      %v2943 = vunpack.c.l.b16 %v2905
      %v2944 = vunpack.c.h.b16 %v2905
      %v2945 = vunpack.c.l.b16 %v2906
      %v2946 = vunpack.c.h.b16 %v2906
      %v2947 = vunpack.c.l.b16 %v2907
      %v2948 = vunpack.c.h.b16 %v2907
      %v2949 = vunpack.c.l.b16 %v2908
      %v2950 = vunpack.c.h.b16 %v2908
      %v2951 = vunpack.c.l.b16 %v2909
      %v2952 = vunpack.c.h.b16 %v2909
      %v2953 = vunpack.c.l.b16 %v2910
      %v2954 = vunpack.c.h.b16 %v2910
      %v2955 = vunpack.c.l.b16 %v2911
      %v2956 = vunpack.c.h.b16 %v2911
      %v2957 = vunpack.c.l.b16 %v2912
      %v2958 = vunpack.c.h.b16 %v2912
      %v2959 = vunpack.c.l.b16 %v2913
      %v2960 = vunpack.c.h.b16 %v2913
      %v2961 = vunpack.c.l.b16 %v2914
      %v2962 = vunpack.c.h.b16 %v2914
      %v2963 = vpack.c.b16 %v2933, %v2931
      %v2964 = vpack.c.b16 %v2934, %v2932
      %v2965 = vpack.c.b16 %v2937, %v2935
      %v2966 = vpack.c.b16 %v2938, %v2936
      %v2967 = vpack.c.b16 %v2941, %v2939
      %v2968 = vpack.c.b16 %v2942, %v2940
      %v2969 = vpack.c.b16 %v2945, %v2943
      %v2970 = vpack.c.b16 %v2946, %v2944
      %v2971 = vpack.c.b16 %v2949, %v2947
      %v2972 = vpack.c.b16 %v2950, %v2948
      %v2973 = vpack.c.b16 %v2953, %v2951
      %v2974 = vpack.c.b16 %v2954, %v2952
      %v2975 = vpack.c.b16 %v2957, %v2955
      %v2976 = vpack.c.b16 %v2958, %v2956
      %v2977 = vpack.c.b16 %v2961, %v2959
      %v2978 = vpack.c.b16 %v2962, %v2960
      %2995 = vmatprep.subr.bf16.mxu0 %v2964
      %2996 = vmatpush1.bf16.msra.mxu0 %v2963
      %2997 = vmatprep.subr.bf16.mxu0 %v2966
      %2998 = vmatpush1.bf16.msra.mxu0 %v2965
      %2999 = vmatprep.subr.bf16.mxu0 %v2968
      %3000 = vmatpush1.bf16.msra.mxu0 %v2967
      %3001 = vmatprep.subr.bf16.mxu0 %v2970
      %3002 = vmatpush1.bf16.msra.mxu0 %v2969
      %3003 = vmatprep.subr.bf16.mxu0 %v2972
      %3004 = vmatpush1.bf16.msra.mxu0 %v2971
      %3005 = vmatprep.subr.bf16.mxu0 %v2974
      %3006 = vmatpush1.bf16.msra.mxu0 %v2973
      %3007 = vmatprep.subr.bf16.mxu0 %v2976
      %3008 = vmatpush1.bf16.msra.mxu0 %v2975
      %3009 = vmatprep.subr.bf16.mxu0 %v2978
      %3010 = vmatpush1.bf16.msra.mxu0 %v2977
      %3011 = vmatprep.subr.bf16.mxu0 0
      %3012 = vmatpush1.bf16.msra.mxu0 0
      %3013 = vmatprep.subr.bf16.mxu0 0
      %3014 = vmatpush1.bf16.msra.mxu0 0
      %3015 = vmatprep.subr.bf16.mxu0 0
      %3016 = vmatpush1.bf16.msra.mxu0 0
      %3017 = vmatprep.subr.bf16.mxu0 0
      %3018 = vmatpush1.bf16.msra.mxu0 0
      %3019 = vmatprep.subr.bf16.mxu0 0
      %3020 = vmatpush1.bf16.msra.mxu0 0
      %3021 = vmatprep.subr.bf16.mxu0 0
      %3022 = vmatpush1.bf16.msra.mxu0 0
      %3023 = vmatprep.subr.bf16.mxu0 0
      %3024 = vmatpush1.bf16.msra.mxu0 0
      %3025 = vmatprep.subr.bf16.mxu0 0
      %3026 = vmatpush1.bf16.msra.mxu0 0
      %3027 = vmatprep.mubr.bf16.mxu0 0
      %3028 = vmatmul.mubr.bf16.gmra.mrb[0].mxu0 %v2890
      %v3029 = vpop.f32.mrb[0].mxu0
      %v3030 = vadd.f32 0.0, %v3029
      %v3031 = vpop.f32.mrb[0].mxu0
      %v3032 = vadd.f32 0.0, %v3031
      %v3033 = vpop.f32.mrb[0].mxu0
      %v3034 = vadd.f32 0.0, %v3033
      %v3035 = vpop.f32.mrb[0].mxu0
      %v3036 = vadd.f32 0.0, %v3035
      %3037 = vmatprep.mubr.bf16.mxu0 0
      %3038 = vmatmul.mubr.bf16.gmra.mrb[0].mxu0 %v2891
      %v3039 = vpop.f32.mrb[0].mxu0
      %v3040 = vadd.f32 0.0, %v3039
      %v3041 = vpop.f32.mrb[0].mxu0
      %v3042 = vadd.f32 0.0, %v3041
      %v3043 = vpop.f32.mrb[0].mxu0
      %v3044 = vadd.f32 0.0, %v3043
      %v3045 = vpop.f32.mrb[0].mxu0
      %v3046 = vadd.f32 0.0, %v3045
      %3047 = vmatprep.mubr.bf16.mxu0 0
      %3048 = vmatmul.mubr.bf16.gmra.mrb[0].mxu0 %v2892
      %v3049 = vpop.f32.mrb[0].mxu0
      %v3050 = vadd.f32 0.0, %v3049
      %v3051 = vpop.f32.mrb[0].mxu0
      %v3052 = vadd.f32 0.0, %v3051
      %v3053 = vpop.f32.mrb[0].mxu0
      %v3054 = vadd.f32 0.0, %v3053
      %v3055 = vpop.f32.mrb[0].mxu0
      %v3056 = vadd.f32 0.0, %v3055
      %3057 = vmatprep.mubr.bf16.mxu0 0
      %3058 = vmatmul.mubr.bf16.gmra.mrb[0].mxu0 %v2893
      %v3059 = vpop.f32.mrb[0].mxu0
      %v3060 = vadd.f32 0.0, %v3059
      %v3061 = vpop.f32.mrb[0].mxu0
      %v3062 = vadd.f32 0.0, %v3061
      %v3063 = vpop.f32.mrb[0].mxu0
      %v3064 = vadd.f32 0.0, %v3063
      %v3065 = vpop.f32.mrb[0].mxu0
      %v3066 = vadd.f32 0.0, %v3065
      %3067 = vmatprep.mubr.bf16.mxu0 0
      %3068 = vmatmul.mubr.bf16.gmra.mrb[0].mxu0 %v2894
      %v3069 = vpop.f32.mrb[0].mxu0
      %v3070 = vadd.f32 0.0, %v3069
      %v3071 = vpop.f32.mrb[0].mxu0
      %v3072 = vadd.f32 0.0, %v3071
      %v3073 = vpop.f32.mrb[0].mxu0
      %v3074 = vadd.f32 0.0, %v3073
      %v3075 = vpop.f32.mrb[0].mxu0
      %v3076 = vadd.f32 0.0, %v3075
      %3077 = vmatprep.mubr.bf16.mxu0 0
      %3078 = vmatmul.mubr.bf16.gmra.mrb[0].mxu0 %v2895
      %v3079 = vpop.f32.mrb[0].mxu0
      %v3080 = vadd.f32 0.0, %v3079
      %v3081 = vpop.f32.mrb[0].mxu0
      %v3082 = vadd.f32 0.0, %v3081
      %v3083 = vpop.f32.mrb[0].mxu0
      %v3084 = vadd.f32 0.0, %v3083
      %v3085 = vpop.f32.mrb[0].mxu0
      %v3086 = vadd.f32 0.0, %v3085
      %3087 = vmatprep.mubr.bf16.mxu0 0
      %3088 = vmatmul.mubr.bf16.gmra.mrb[0].mxu0 %v2896
      %v3089 = vpop.f32.mrb[0].mxu0
      %v3090 = vadd.f32 0.0, %v3089
      %v3091 = vpop.f32.mrb[0].mxu0
      %v3092 = vadd.f32 0.0, %v3091
      %v3093 = vpop.f32.mrb[0].mxu0
      %v3094 = vadd.f32 0.0, %v3093
      %v3095 = vpop.f32.mrb[0].mxu0
      %v3096 = vadd.f32 0.0, %v3095
      %3097 = vmatprep.mubr.bf16.mxu0 0
      %3098 = vmatmul.mubr.bf16.gmra.mrb[0].mxu0 %v2897
      %v3099 = vpop.f32.mrb[0].mxu0
      %v3100 = vadd.f32 0.0, %v3099
      %v3101 = vpop.f32.mrb[0].mxu0
      %v3102 = vadd.f32 0.0, %v3101
      %v3103 = vpop.f32.mrb[0].mxu0
      %v3104 = vadd.f32 0.0, %v3103
      %v3105 = vpop.f32.mrb[0].mxu0
      %v3106 = vadd.f32 0.0, %v3105
      %3107 = vdwg.mxu0
      %v3108 = vadd.f32 %v2857, %v3030
      %v3109 = vadd.f32 %v2858, %v3032
      %v3110 = vadd.f32 %v2859, %v3034
      %v3111 = vadd.f32 %v2860, %v3036
      %v3112 = vadd.f32 %v2861, %v3040
      %v3113 = vadd.f32 %v2862, %v3042
      %v3114 = vadd.f32 %v2863, %v3044
      %v3115 = vadd.f32 %v2864, %v3046
      %v3116 = vadd.f32 %v2865, %v3050
      %v3117 = vadd.f32 %v2866, %v3052
      %v3118 = vadd.f32 %v2867, %v3054
      %v3119 = vadd.f32 %v2868, %v3056
      %v3120 = vadd.f32 %v2869, %v3060
      %v3121 = vadd.f32 %v2870, %v3062
      %v3122 = vadd.f32 %v2871, %v3064
      %v3123 = vadd.f32 %v2872, %v3066
      %v3124 = vadd.f32 %v2873, %v3070
      %v3125 = vadd.f32 %v2874, %v3072
      %v3126 = vadd.f32 %v2875, %v3074
      %v3127 = vadd.f32 %v2876, %v3076
      %v3128 = vadd.f32 %v2877, %v3080
      %v3129 = vadd.f32 %v2878, %v3082
      %v3130 = vadd.f32 %v2879, %v3084
      %v3131 = vadd.f32 %v2880, %v3086
      %v3132 = vadd.f32 %v2881, %v3090
      %v3133 = vadd.f32 %v2882, %v3092
      %v3134 = vadd.f32 %v2883, %v3094
      %v3135 = vadd.f32 %v2884, %v3096
      %v3136 = vadd.f32 %v2885, %v3100
      %v3137 = vadd.f32 %v2886, %v3102
      %v3138 = vadd.f32 %v2887, %v3104
      %v3139 = vadd.f32 %v2888, %v3106
      %v3140 = vmax.f32 %v3108, %v3109
      %v3141 = vmax.f32 %v3110, %v3111
      %v3142 = vmax.f32 %v3112, %v3113
      %v3143 = vmax.f32 %v3114, %v3115
      %v3144 = vmax.f32 %v3116, %v3117
      %v3145 = vmax.f32 %v3118, %v3119
      %v3146 = vmax.f32 %v3120, %v3121
      %v3147 = vmax.f32 %v3122, %v3123
      %v3148 = vmax.f32 %v3124, %v3125
      %v3149 = vmax.f32 %v3126, %v3127
      %v3150 = vmax.f32 %v3128, %v3129
      %v3151 = vmax.f32 %v3130, %v3131
      %v3152 = vmax.f32 %v3132, %v3133
      %v3153 = vmax.f32 %v3134, %v3135
      %v3154 = vmax.f32 %v3136, %v3137
      %v3155 = vmax.f32 %v3138, %v3139
      %3156 = vmatprep.subr.bf16.mxu0 %v2050
      %3157 = vmatpush1.bf16.msra.mxu0 %v2049
      %3158 = vmatprep.subr.bf16.mxu0 %v2052
      %3159 = vmatpush1.bf16.msra.mxu0 %v2051
      %3160 = vmatprep.subr.bf16.mxu0 %v2054
      %3161 = vmatpush1.bf16.msra.mxu0 %v2053
      %3162 = vmatprep.subr.bf16.mxu0 %v2056
      %3163 = vmatpush1.bf16.msra.mxu0 %v2055
      %3164 = vmatprep.subr.bf16.mxu0 %v2058
      %3165 = vmatpush1.bf16.msra.mxu0 %v2057
      %3166 = vmatprep.subr.bf16.mxu0 %v2060
      %3167 = vmatpush1.bf16.msra.mxu0 %v2059
      %3168 = vmatprep.subr.bf16.mxu0 %v2062
      %3169 = vmatpush1.bf16.msra.mxu0 %v2061
      %3170 = vmatprep.subr.bf16.mxu0 %v2064
      %3171 = vmatpush1.bf16.msra.mxu0 %v2063
      %3172 = vmatprep.subr.bf16.mxu0 0
      %3173 = vmatpush1.bf16.msra.mxu0 0
      %3174 = vmatprep.subr.bf16.mxu0 0
      %3175 = vmatpush1.bf16.msra.mxu0 0
      %3176 = vmatprep.subr.bf16.mxu0 0
      %3177 = vmatpush1.bf16.msra.mxu0 0
      %3178 = vmatprep.subr.bf16.mxu0 0
      %3179 = vmatpush1.bf16.msra.mxu0 0
      %3180 = vmatprep.subr.bf16.mxu0 0
      %3181 = vmatpush1.bf16.msra.mxu0 0
      %3182 = vmatprep.subr.bf16.mxu0 0
      %3183 = vmatpush1.bf16.msra.mxu0 0
      %3184 = vmatprep.subr.bf16.mxu0 0
      %3185 = vmatpush1.bf16.msra.mxu0 0
      %3186 = vmatprep.subr.bf16.mxu0 0
      %3187 = vmatpush1.bf16.msra.mxu0 0
      %3188 = vmatprep.mubr.bf16.mxu0 0
      %3189 = vmatmul.mubr.bf16.gmra.mrb[0].mxu0 %v2388
      %v3190 = vpop.f32.mrb[0].mxu0
      %v3191 = vadd.f32 0.0, %v3190
      %v3192 = vpop.f32.mrb[0].mxu0
      %v3193 = vadd.f32 0.0, %v3192
      %v3194 = vpop.f32.mrb[0].mxu0
      %v3195 = vadd.f32 0.0, %v3194
      %v3196 = vpop.f32.mrb[0].mxu0
      %v3197 = vadd.f32 0.0, %v3196
      %3198 = vmatprep.mubr.bf16.mxu0 0
      %3199 = vmatmul.mubr.bf16.gmra.mrb[0].mxu0 %v2389
      %v3200 = vpop.f32.mrb[0].mxu0
      %v3201 = vadd.f32 0.0, %v3200
      %v3202 = vpop.f32.mrb[0].mxu0
      %v3203 = vadd.f32 0.0, %v3202
      %v3204 = vpop.f32.mrb[0].mxu0
      %v3205 = vadd.f32 0.0, %v3204
      %v3206 = vpop.f32.mrb[0].mxu0
      %v3207 = vadd.f32 0.0, %v3206
      %3208 = vmatprep.mubr.bf16.mxu0 0
      %3209 = vmatmul.mubr.bf16.gmra.mrb[0].mxu0 %v2390
      %v3210 = vpop.f32.mrb[0].mxu0
      %v3211 = vadd.f32 0.0, %v3210
      %v3212 = vpop.f32.mrb[0].mxu0
      %v3213 = vadd.f32 0.0, %v3212
      %v3214 = vpop.f32.mrb[0].mxu0
      %v3215 = vadd.f32 0.0, %v3214
      %v3216 = vpop.f32.mrb[0].mxu0
      %v3217 = vadd.f32 0.0, %v3216
      %3218 = vmatprep.mubr.bf16.mxu0 0
      %3219 = vmatmul.mubr.bf16.gmra.mrb[0].mxu0 %v2391
      %v3220 = vpop.f32.mrb[0].mxu0
      %v3221 = vadd.f32 0.0, %v3220
      %v3222 = vpop.f32.mrb[0].mxu0
      %v3223 = vadd.f32 0.0, %v3222
      %v3224 = vpop.f32.mrb[0].mxu0
      %v3225 = vadd.f32 0.0, %v3224
      %v3226 = vpop.f32.mrb[0].mxu0
      %v3227 = vadd.f32 0.0, %v3226
      %3228 = vmatprep.mubr.bf16.mxu0 0
      %3229 = vmatmul.mubr.bf16.gmra.mrb[0].mxu0 %v2392
      %v3230 = vpop.f32.mrb[0].mxu0
      %v3231 = vadd.f32 0.0, %v3230
      %v3232 = vpop.f32.mrb[0].mxu0
      %v3233 = vadd.f32 0.0, %v3232
      %v3234 = vpop.f32.mrb[0].mxu0
      %v3235 = vadd.f32 0.0, %v3234
      %v3236 = vpop.f32.mrb[0].mxu0
      %v3237 = vadd.f32 0.0, %v3236
      %3238 = vmatprep.mubr.bf16.mxu0 0
      %3239 = vmatmul.mubr.bf16.gmra.mrb[0].mxu0 %v2393
      %v3240 = vpop.f32.mrb[0].mxu0
      %v3241 = vadd.f32 0.0, %v3240
      %v3242 = vpop.f32.mrb[0].mxu0
      %v3243 = vadd.f32 0.0, %v3242
      %v3244 = vpop.f32.mrb[0].mxu0
      %v3245 = vadd.f32 0.0, %v3244
      %v3246 = vpop.f32.mrb[0].mxu0
      %v3247 = vadd.f32 0.0, %v3246
      %3248 = vmatprep.mubr.bf16.mxu0 0
      %3249 = vmatmul.mubr.bf16.gmra.mrb[0].mxu0 %v2394
      %v3250 = vpop.f32.mrb[0].mxu0
      %v3251 = vadd.f32 0.0, %v3250
      %v3252 = vpop.f32.mrb[0].mxu0
      %v3253 = vadd.f32 0.0, %v3252
      %v3254 = vpop.f32.mrb[0].mxu0
      %v3255 = vadd.f32 0.0, %v3254
      %v3256 = vpop.f32.mrb[0].mxu0
      %v3257 = vadd.f32 0.0, %v3256
      %3258 = vmatprep.mubr.bf16.mxu0 0
      %3259 = vmatmul.mubr.bf16.gmra.mrb[0].mxu0 %v2395
      %v3260 = vpop.f32.mrb[0].mxu0
      %v3261 = vadd.f32 0.0, %v3260
      %v3262 = vpop.f32.mrb[0].mxu0
      %v3263 = vadd.f32 0.0, %v3262
      %v3264 = vpop.f32.mrb[0].mxu0
      %v3265 = vadd.f32 0.0, %v3264
      %v3266 = vpop.f32.mrb[0].mxu0
      %v3267 = vadd.f32 0.0, %v3266
      %3268 = vdwg.mxu0
      %3269 = vmatprep.subr.bf16.mxu0 %v2243
      %3270 = vmatpush1.bf16.msra.mxu0 %v2242
      %3271 = vmatprep.subr.bf16.mxu0 %v2245
      %3272 = vmatpush1.bf16.msra.mxu0 %v2244
      %3273 = vmatprep.subr.bf16.mxu0 %v2247
      %3274 = vmatpush1.bf16.msra.mxu0 %v2246
      %3275 = vmatprep.subr.bf16.mxu0 %v2249
      %3276 = vmatpush1.bf16.msra.mxu0 %v2248
      %3277 = vmatprep.subr.bf16.mxu0 %v2251
      %3278 = vmatpush1.bf16.msra.mxu0 %v2250
      %3279 = vmatprep.subr.bf16.mxu0 %v2253
      %3280 = vmatpush1.bf16.msra.mxu0 %v2252
      %3281 = vmatprep.subr.bf16.mxu0 %v2255
      %3282 = vmatpush1.bf16.msra.mxu0 %v2254
      %3283 = vmatprep.subr.bf16.mxu0 %v2257
      %3284 = vmatpush1.bf16.msra.mxu0 %v2256
      %3285 = vmatprep.subr.bf16.mxu0 0
      %3286 = vmatpush1.bf16.msra.mxu0 0
      %3287 = vmatprep.subr.bf16.mxu0 0
      %3288 = vmatpush1.bf16.msra.mxu0 0
      %3289 = vmatprep.subr.bf16.mxu0 0
      %3290 = vmatpush1.bf16.msra.mxu0 0
      %3291 = vmatprep.subr.bf16.mxu0 0
      %3292 = vmatpush1.bf16.msra.mxu0 0
      %3293 = vmatprep.subr.bf16.mxu0 0
      %3294 = vmatpush1.bf16.msra.mxu0 0
      %3295 = vmatprep.subr.bf16.mxu0 0
      %3296 = vmatpush1.bf16.msra.mxu0 0
      %3297 = vmatprep.subr.bf16.mxu0 0
      %3298 = vmatpush1.bf16.msra.mxu0 0
      %3299 = vmatprep.subr.bf16.mxu0 0
      %3300 = vmatpush1.bf16.msra.mxu0 0
      %3301 = vmatprep.mubr.bf16.mxu0 0
      %3302 = vmatmul.mubr.bf16.gmra.mrb[0].mxu0 %v1976
      %v3303 = vpop.f32.mrb[0].mxu0
      %v3304 = vadd.f32 %v3191, %v3303
      %v3305 = vpop.f32.mrb[0].mxu0
      %v3306 = vadd.f32 %v3193, %v3305
      %v3307 = vpop.f32.mrb[0].mxu0
      %v3308 = vadd.f32 %v3195, %v3307
      %v3309 = vpop.f32.mrb[0].mxu0
      %v3310 = vadd.f32 %v3197, %v3309
      %3311 = vmatprep.mubr.bf16.mxu0 0
      %3312 = vmatmul.mubr.bf16.gmra.mrb[0].mxu0 %v1977
      %v3313 = vpop.f32.mrb[0].mxu0
      %v3314 = vadd.f32 %v3201, %v3313
      %v3315 = vpop.f32.mrb[0].mxu0
      %v3316 = vadd.f32 %v3203, %v3315
      %v3317 = vpop.f32.mrb[0].mxu0
      %v3318 = vadd.f32 %v3205, %v3317
      %v3319 = vpop.f32.mrb[0].mxu0
      %v3320 = vadd.f32 %v3207, %v3319
      %3321 = vmatprep.mubr.bf16.mxu0 0
      %3322 = vmatmul.mubr.bf16.gmra.mrb[0].mxu0 %v1978
      %v3323 = vpop.f32.mrb[0].mxu0
      %v3324 = vadd.f32 %v3211, %v3323
      %v3325 = vpop.f32.mrb[0].mxu0
      %v3326 = vadd.f32 %v3213, %v3325
      %v3327 = vpop.f32.mrb[0].mxu0
      %v3328 = vadd.f32 %v3215, %v3327
      %v3329 = vpop.f32.mrb[0].mxu0
      %v3330 = vadd.f32 %v3217, %v3329
      %3331 = vmatprep.mubr.bf16.mxu0 0
      %3332 = vmatmul.mubr.bf16.gmra.mrb[0].mxu0 %v1979
      %v3333 = vpop.f32.mrb[0].mxu0
      %v3334 = vadd.f32 %v3221, %v3333
      %v3335 = vpop.f32.mrb[0].mxu0
      %v3336 = vadd.f32 %v3223, %v3335
      %v3337 = vpop.f32.mrb[0].mxu0
      %v3338 = vadd.f32 %v3225, %v3337
      %v3339 = vpop.f32.mrb[0].mxu0
      %v3340 = vadd.f32 %v3227, %v3339
      %3341 = vmatprep.mubr.bf16.mxu0 0
      %3342 = vmatmul.mubr.bf16.gmra.mrb[0].mxu0 %v1980
      %v3343 = vpop.f32.mrb[0].mxu0
      %v3344 = vadd.f32 %v3231, %v3343
      %v3345 = vpop.f32.mrb[0].mxu0
      %v3346 = vadd.f32 %v3233, %v3345
      %v3347 = vpop.f32.mrb[0].mxu0
      %v3348 = vadd.f32 %v3235, %v3347
      %v3349 = vpop.f32.mrb[0].mxu0
      %v3350 = vadd.f32 %v3237, %v3349
      %3351 = vmatprep.mubr.bf16.mxu0 0
      %3352 = vmatmul.mubr.bf16.gmra.mrb[0].mxu0 %v1981
      %v3353 = vpop.f32.mrb[0].mxu0
      %v3354 = vadd.f32 %v3241, %v3353
      %v3355 = vpop.f32.mrb[0].mxu0
      %v3356 = vadd.f32 %v3243, %v3355
      %v3357 = vpop.f32.mrb[0].mxu0
      %v3358 = vadd.f32 %v3245, %v3357
      %v3359 = vpop.f32.mrb[0].mxu0
      %v3360 = vadd.f32 %v3247, %v3359
      %3361 = vmatprep.mubr.bf16.mxu0 0
      %3362 = vmatmul.mubr.bf16.gmra.mrb[0].mxu0 %v1982
      %v3363 = vpop.f32.mrb[0].mxu0
      %v3364 = vadd.f32 %v3251, %v3363
      %v3365 = vpop.f32.mrb[0].mxu0
      %v3366 = vadd.f32 %v3253, %v3365
      %v3367 = vpop.f32.mrb[0].mxu0
      %v3368 = vadd.f32 %v3255, %v3367
      %v3369 = vpop.f32.mrb[0].mxu0
      %v3370 = vadd.f32 %v3257, %v3369
      %3371 = vmatprep.mubr.bf16.mxu0 0
      %3372 = vmatmul.mubr.bf16.gmra.mrb[0].mxu0 %v1983
      %v3373 = vpop.f32.mrb[0].mxu0
      %v3374 = vadd.f32 %v3261, %v3373
      %v3375 = vpop.f32.mrb[0].mxu0
      %v3376 = vadd.f32 %v3263, %v3375
      %v3377 = vpop.f32.mrb[0].mxu0
      %v3378 = vadd.f32 %v3265, %v3377
      %v3379 = vpop.f32.mrb[0].mxu0
      %v3380 = vadd.f32 %v3267, %v3379
      %3381 = vdwg.mxu0
      %3382 = vmatprep.subr.bf16.mxu0 %v2462
      %3383 = vmatpush1.bf16.msra.mxu0 %v2461
      %3384 = vmatprep.subr.bf16.mxu0 %v2464
      %3385 = vmatpush1.bf16.msra.mxu0 %v2463
      %3386 = vmatprep.subr.bf16.mxu0 %v2466
      %3387 = vmatpush1.bf16.msra.mxu0 %v2465
      %3388 = vmatprep.subr.bf16.mxu0 %v2468
      %3389 = vmatpush1.bf16.msra.mxu0 %v2467
      %3390 = vmatprep.subr.bf16.mxu0 %v2470
      %3391 = vmatpush1.bf16.msra.mxu0 %v2469
      %3392 = vmatprep.subr.bf16.mxu0 %v2472
      %3393 = vmatpush1.bf16.msra.mxu0 %v2471
      %3394 = vmatprep.subr.bf16.mxu0 %v2474
      %3395 = vmatpush1.bf16.msra.mxu0 %v2473
      %3396 = vmatprep.subr.bf16.mxu0 %v2476
      %3397 = vmatpush1.bf16.msra.mxu0 %v2475
      %3398 = vmatprep.subr.bf16.mxu0 0
      %3399 = vmatpush1.bf16.msra.mxu0 0
      %3400 = vmatprep.subr.bf16.mxu0 0
      %3401 = vmatpush1.bf16.msra.mxu0 0
      %3402 = vmatprep.subr.bf16.mxu0 0
      %3403 = vmatpush1.bf16.msra.mxu0 0
      %3404 = vmatprep.subr.bf16.mxu0 0
      %3405 = vmatpush1.bf16.msra.mxu0 0
      %3406 = vmatprep.subr.bf16.mxu0 0
      %3407 = vmatpush1.bf16.msra.mxu0 0
      %3408 = vmatprep.subr.bf16.mxu0 0
      %3409 = vmatpush1.bf16.msra.mxu0 0
      %3410 = vmatprep.subr.bf16.mxu0 0
      %3411 = vmatpush1.bf16.msra.mxu0 0
      %3412 = vmatprep.subr.bf16.mxu0 0
      %3413 = vmatpush1.bf16.msra.mxu0 0
      %3414 = vmatprep.mubr.bf16.mxu0 0
      %3415 = vmatmul.mubr.bf16.gmra.mrb[0].mxu0 %v2639
      %v3416 = vpop.f32.mrb[0].mxu0
      %v3417 = vadd.f32 0.0, %v3416
      %v3418 = vpop.f32.mrb[0].mxu0
      %v3419 = vadd.f32 0.0, %v3418
      %v3420 = vpop.f32.mrb[0].mxu0
      %v3421 = vadd.f32 0.0, %v3420
      %v3422 = vpop.f32.mrb[0].mxu0
      %v3423 = vadd.f32 0.0, %v3422
      %3424 = vmatprep.mubr.bf16.mxu0 0
      %3425 = vmatmul.mubr.bf16.gmra.mrb[0].mxu0 %v2640
      %v3426 = vpop.f32.mrb[0].mxu0
      %v3427 = vadd.f32 0.0, %v3426
      %v3428 = vpop.f32.mrb[0].mxu0
      %v3429 = vadd.f32 0.0, %v3428
      %v3430 = vpop.f32.mrb[0].mxu0
      %v3431 = vadd.f32 0.0, %v3430
      %v3432 = vpop.f32.mrb[0].mxu0
      %v3433 = vadd.f32 0.0, %v3432
      %3434 = vmatprep.mubr.bf16.mxu0 0
      %3435 = vmatmul.mubr.bf16.gmra.mrb[0].mxu0 %v2641
      %v3436 = vpop.f32.mrb[0].mxu0
      %v3437 = vadd.f32 0.0, %v3436
      %v3438 = vpop.f32.mrb[0].mxu0
      %v3439 = vadd.f32 0.0, %v3438
      %v3440 = vpop.f32.mrb[0].mxu0
      %v3441 = vadd.f32 0.0, %v3440
      %v3442 = vpop.f32.mrb[0].mxu0
      %v3443 = vadd.f32 0.0, %v3442
      %3444 = vmatprep.mubr.bf16.mxu0 0
      %3445 = vmatmul.mubr.bf16.gmra.mrb[0].mxu0 %v2642
      %v3446 = vpop.f32.mrb[0].mxu0
      %v3447 = vadd.f32 0.0, %v3446
      %v3448 = vpop.f32.mrb[0].mxu0
      %v3449 = vadd.f32 0.0, %v3448
      %v3450 = vpop.f32.mrb[0].mxu0
      %v3451 = vadd.f32 0.0, %v3450
      %v3452 = vpop.f32.mrb[0].mxu0
      %v3453 = vadd.f32 0.0, %v3452
      %3454 = vmatprep.mubr.bf16.mxu0 0
      %3455 = vmatmul.mubr.bf16.gmra.mrb[0].mxu0 %v2643
      %v3456 = vpop.f32.mrb[0].mxu0
      %v3457 = vadd.f32 0.0, %v3456
      %v3458 = vpop.f32.mrb[0].mxu0
      %v3459 = vadd.f32 0.0, %v3458
      %v3460 = vpop.f32.mrb[0].mxu0
      %v3461 = vadd.f32 0.0, %v3460
      %v3462 = vpop.f32.mrb[0].mxu0
      %v3463 = vadd.f32 0.0, %v3462
      %3464 = vmatprep.mubr.bf16.mxu0 0
      %3465 = vmatmul.mubr.bf16.gmra.mrb[0].mxu0 %v2644
      %v3466 = vpop.f32.mrb[0].mxu0
      %v3467 = vadd.f32 0.0, %v3466
      %v3468 = vpop.f32.mrb[0].mxu0
      %v3469 = vadd.f32 0.0, %v3468
      %v3470 = vpop.f32.mrb[0].mxu0
      %v3471 = vadd.f32 0.0, %v3470
      %v3472 = vpop.f32.mrb[0].mxu0
      %v3473 = vadd.f32 0.0, %v3472
      %3474 = vmatprep.mubr.bf16.mxu0 0
      %3475 = vmatmul.mubr.bf16.gmra.mrb[0].mxu0 %v2645
      %v3476 = vpop.f32.mrb[0].mxu0
      %v3477 = vadd.f32 0.0, %v3476
      %v3478 = vpop.f32.mrb[0].mxu0
      %v3479 = vadd.f32 0.0, %v3478
      %v3480 = vpop.f32.mrb[0].mxu0
      %v3481 = vadd.f32 0.0, %v3480
      %v3482 = vpop.f32.mrb[0].mxu0
      %v3483 = vadd.f32 0.0, %v3482
      %3484 = vmatprep.mubr.bf16.mxu0 0
      %3485 = vmatmul.mubr.bf16.gmra.mrb[0].mxu0 %v2646
      %v3486 = vpop.f32.mrb[0].mxu0
      %v3487 = vadd.f32 0.0, %v3486
      %v3488 = vpop.f32.mrb[0].mxu0
      %v3489 = vadd.f32 0.0, %v3488
      %v3490 = vpop.f32.mrb[0].mxu0
      %v3491 = vadd.f32 0.0, %v3490
      %v3492 = vpop.f32.mrb[0].mxu0
      %v3493 = vadd.f32 0.0, %v3492
      %3494 = vdwg.mxu0
      %v3495 = vadd.f32 %v3304, %v3417
      %v3496 = vadd.f32 %v3306, %v3419
      %v3497 = vadd.f32 %v3308, %v3421
      %v3498 = vadd.f32 %v3310, %v3423
      %v3499 = vadd.f32 %v3314, %v3427
      %v3500 = vadd.f32 %v3316, %v3429
      %v3501 = vadd.f32 %v3318, %v3431
      %v3502 = vadd.f32 %v3320, %v3433
      %v3503 = vadd.f32 %v3324, %v3437
      %v3504 = vadd.f32 %v3326, %v3439
      %v3505 = vadd.f32 %v3328, %v3441
      %v3506 = vadd.f32 %v3330, %v3443
      %v3507 = vadd.f32 %v3334, %v3447
      %v3508 = vadd.f32 %v3336, %v3449
      %v3509 = vadd.f32 %v3338, %v3451
      %v3510 = vadd.f32 %v3340, %v3453
      %v3511 = vadd.f32 %v3344, %v3457
      %v3512 = vadd.f32 %v3346, %v3459
      %v3513 = vadd.f32 %v3348, %v3461
      %v3514 = vadd.f32 %v3350, %v3463
      %v3515 = vadd.f32 %v3354, %v3467
      %v3516 = vadd.f32 %v3356, %v3469
      %v3517 = vadd.f32 %v3358, %v3471
      %v3518 = vadd.f32 %v3360, %v3473
      %v3519 = vadd.f32 %v3364, %v3477
      %v3520 = vadd.f32 %v3366, %v3479
      %v3521 = vadd.f32 %v3368, %v3481
      %v3522 = vadd.f32 %v3370, %v3483
      %v3523 = vadd.f32 %v3374, %v3487
      %v3524 = vadd.f32 %v3376, %v3489
      %v3525 = vadd.f32 %v3378, %v3491
      %v3526 = vadd.f32 %v3380, %v3493
      %3527 = vmatprep.subr.bf16.mxu0 %v2713
      %3528 = vmatpush1.bf16.msra.mxu0 %v2712
      %3529 = vmatprep.subr.bf16.mxu0 %v2715
      %3530 = vmatpush1.bf16.msra.mxu0 %v2714
      %3531 = vmatprep.subr.bf16.mxu0 %v2717
      %3532 = vmatpush1.bf16.msra.mxu0 %v2716
      %3533 = vmatprep.subr.bf16.mxu0 %v2719
      %3534 = vmatpush1.bf16.msra.mxu0 %v2718
      %3535 = vmatprep.subr.bf16.mxu0 %v2721
      %3536 = vmatpush1.bf16.msra.mxu0 %v2720
      %3537 = vmatprep.subr.bf16.mxu0 %v2723
      %3538 = vmatpush1.bf16.msra.mxu0 %v2722
      %3539 = vmatprep.subr.bf16.mxu0 %v2725
      %3540 = vmatpush1.bf16.msra.mxu0 %v2724
      %3541 = vmatprep.subr.bf16.mxu0 %v2727
      %3542 = vmatpush1.bf16.msra.mxu0 %v2726
      %3543 = vmatprep.subr.bf16.mxu0 0
      %3544 = vmatpush1.bf16.msra.mxu0 0
      %3545 = vmatprep.subr.bf16.mxu0 0
      %3546 = vmatpush1.bf16.msra.mxu0 0
      %3547 = vmatprep.subr.bf16.mxu0 0
      %3548 = vmatpush1.bf16.msra.mxu0 0
      %3549 = vmatprep.subr.bf16.mxu0 0
      %3550 = vmatpush1.bf16.msra.mxu0 0
      %3551 = vmatprep.subr.bf16.mxu0 0
      %3552 = vmatpush1.bf16.msra.mxu0 0
      %3553 = vmatprep.subr.bf16.mxu0 0
      %3554 = vmatpush1.bf16.msra.mxu0 0
      %3555 = vmatprep.subr.bf16.mxu0 0
      %3556 = vmatpush1.bf16.msra.mxu0 0
      %3557 = vmatprep.subr.bf16.mxu0 0
      %3558 = vmatpush1.bf16.msra.mxu0 0
      %3559 = vmatprep.mubr.bf16.mxu0 0
      %3560 = vmatmul.mubr.bf16.gmra.mrb[0].mxu0 %v2890
      %v3561 = vpop.f32.mrb[0].mxu0
      %v3562 = vadd.f32 0.0, %v3561
      %v3563 = vpop.f32.mrb[0].mxu0
      %v3564 = vadd.f32 0.0, %v3563
      %v3565 = vpop.f32.mrb[0].mxu0
      %v3566 = vadd.f32 0.0, %v3565
      %v3567 = vpop.f32.mrb[0].mxu0
      %v3568 = vadd.f32 0.0, %v3567
      %3569 = vmatprep.mubr.bf16.mxu0 0
      %3570 = vmatmul.mubr.bf16.gmra.mrb[0].mxu0 %v2891
      %v3571 = vpop.f32.mrb[0].mxu0
      %v3572 = vadd.f32 0.0, %v3571
      %v3573 = vpop.f32.mrb[0].mxu0
      %v3574 = vadd.f32 0.0, %v3573
      %v3575 = vpop.f32.mrb[0].mxu0
      %v3576 = vadd.f32 0.0, %v3575
      %v3577 = vpop.f32.mrb[0].mxu0
      %v3578 = vadd.f32 0.0, %v3577
      %3579 = vmatprep.mubr.bf16.mxu0 0
      %3580 = vmatmul.mubr.bf16.gmra.mrb[0].mxu0 %v2892
      %v3581 = vpop.f32.mrb[0].mxu0
      %v3582 = vadd.f32 0.0, %v3581
      %v3583 = vpop.f32.mrb[0].mxu0
      %v3584 = vadd.f32 0.0, %v3583
      %v3585 = vpop.f32.mrb[0].mxu0
      %v3586 = vadd.f32 0.0, %v3585
      %v3587 = vpop.f32.mrb[0].mxu0
      %v3588 = vadd.f32 0.0, %v3587
      %3589 = vmatprep.mubr.bf16.mxu0 0
      %3590 = vmatmul.mubr.bf16.gmra.mrb[0].mxu0 %v2893
      %v3591 = vpop.f32.mrb[0].mxu0
      %v3592 = vadd.f32 0.0, %v3591
      %v3593 = vpop.f32.mrb[0].mxu0
      %v3594 = vadd.f32 0.0, %v3593
      %v3595 = vpop.f32.mrb[0].mxu0
      %v3596 = vadd.f32 0.0, %v3595
      %v3597 = vpop.f32.mrb[0].mxu0
      %v3598 = vadd.f32 0.0, %v3597
      %3599 = vmatprep.mubr.bf16.mxu0 0
      %3600 = vmatmul.mubr.bf16.gmra.mrb[0].mxu0 %v2894
      %v3601 = vpop.f32.mrb[0].mxu0
      %v3602 = vadd.f32 0.0, %v3601
      %v3603 = vpop.f32.mrb[0].mxu0
      %v3604 = vadd.f32 0.0, %v3603
      %v3605 = vpop.f32.mrb[0].mxu0
      %v3606 = vadd.f32 0.0, %v3605
      %v3607 = vpop.f32.mrb[0].mxu0
      %v3608 = vadd.f32 0.0, %v3607
      %3609 = vmatprep.mubr.bf16.mxu0 0
      %3610 = vmatmul.mubr.bf16.gmra.mrb[0].mxu0 %v2895
      %v3611 = vpop.f32.mrb[0].mxu0
      %v3612 = vadd.f32 0.0, %v3611
      %v3613 = vpop.f32.mrb[0].mxu0
      %v3614 = vadd.f32 0.0, %v3613
      %v3615 = vpop.f32.mrb[0].mxu0
      %v3616 = vadd.f32 0.0, %v3615
      %v3617 = vpop.f32.mrb[0].mxu0
      %v3618 = vadd.f32 0.0, %v3617
      %3619 = vmatprep.mubr.bf16.mxu0 0
      %3620 = vmatmul.mubr.bf16.gmra.mrb[0].mxu0 %v2896
      %v3621 = vpop.f32.mrb[0].mxu0
      %v3622 = vadd.f32 0.0, %v3621
      %v3623 = vpop.f32.mrb[0].mxu0
      %v3624 = vadd.f32 0.0, %v3623
      %v3625 = vpop.f32.mrb[0].mxu0
      %v3626 = vadd.f32 0.0, %v3625
      %v3627 = vpop.f32.mrb[0].mxu0
      %v3628 = vadd.f32 0.0, %v3627
      %3629 = vmatprep.mubr.bf16.mxu0 0
      %3630 = vmatmul.mubr.bf16.gmra.mrb[0].mxu0 %v2897
      %v3631 = vpop.f32.mrb[0].mxu0
      %v3632 = vadd.f32 0.0, %v3631
      %v3633 = vpop.f32.mrb[0].mxu0
      %v3634 = vadd.f32 0.0, %v3633
      %v3635 = vpop.f32.mrb[0].mxu0
      %v3636 = vadd.f32 0.0, %v3635
      %v3637 = vpop.f32.mrb[0].mxu0
      %v3638 = vadd.f32 0.0, %v3637
      %3639 = vdwg.mxu0
      %v3640 = vadd.f32 %v3495, %v3562
      %v3641 = vadd.f32 %v3496, %v3564
      %v3642 = vadd.f32 %v3497, %v3566
      %v3643 = vadd.f32 %v3498, %v3568
      %v3644 = vadd.f32 %v3499, %v3572
      %v3645 = vadd.f32 %v3500, %v3574
      %v3646 = vadd.f32 %v3501, %v3576
      %v3647 = vadd.f32 %v3502, %v3578
      %v3648 = vadd.f32 %v3503, %v3582
      %v3649 = vadd.f32 %v3504, %v3584
      %v3650 = vadd.f32 %v3505, %v3586
      %v3651 = vadd.f32 %v3506, %v3588
      %v3652 = vadd.f32 %v3507, %v3592
      %v3653 = vadd.f32 %v3508, %v3594
      %v3654 = vadd.f32 %v3509, %v3596
      %v3655 = vadd.f32 %v3510, %v3598
      %v3656 = vadd.f32 %v3511, %v3602
      %v3657 = vadd.f32 %v3512, %v3604
      %v3658 = vadd.f32 %v3513, %v3606
      %v3659 = vadd.f32 %v3514, %v3608
      %v3660 = vadd.f32 %v3515, %v3612
      %v3661 = vadd.f32 %v3516, %v3614
      %v3662 = vadd.f32 %v3517, %v3616
      %v3663 = vadd.f32 %v3518, %v3618
      %v3664 = vadd.f32 %v3519, %v3622
      %v3665 = vadd.f32 %v3520, %v3624
      %v3666 = vadd.f32 %v3521, %v3626
      %v3667 = vadd.f32 %v3522, %v3628
      %v3668 = vadd.f32 %v3523, %v3632
      %v3669 = vadd.f32 %v3524, %v3634
      %v3670 = vadd.f32 %v3525, %v3636
      %v3671 = vadd.f32 %v3526, %v3638
      %s3672 = scalar_lea.vmem [#allocation2], 128
      %v3673 = vld [vmem:[%s3672] sm:$0xff]
      %v3674 = vld [vmem:[%s3672 + $0x8] sm:$0xff]
      %v3675 = vld [vmem:[%s3672 + $0x10] sm:$0xff]
      %v3676 = vld [vmem:[%s3672 + $0x18] sm:$0xff]
      %v3677 = vld [vmem:[%s3672 + $0x20] sm:$0xff]
      %v3678 = vld [vmem:[%s3672 + $0x28] sm:$0xff]
      %v3679 = vld [vmem:[%s3672 + $0x30] sm:$0xff]
      %v3680 = vld [vmem:[%s3672 + $0x38] sm:$0xff]
      %3681 = vmatprep.subr.bf16.mxu0 %v2964
      %3682 = vmatpush1.bf16.msra.mxu0 %v2963
      %3683 = vmatprep.subr.bf16.mxu0 %v2966
      %3684 = vmatpush1.bf16.msra.mxu0 %v2965
      %3685 = vmatprep.subr.bf16.mxu0 %v2968
      %3686 = vmatpush1.bf16.msra.mxu0 %v2967
      %3687 = vmatprep.subr.bf16.mxu0 %v2970
      %3688 = vmatpush1.bf16.msra.mxu0 %v2969
      %3689 = vmatprep.subr.bf16.mxu0 %v2972
      %3690 = vmatpush1.bf16.msra.mxu0 %v2971
      %3691 = vmatprep.subr.bf16.mxu0 %v2974
      %3692 = vmatpush1.bf16.msra.mxu0 %v2973
      %3693 = vmatprep.subr.bf16.mxu0 %v2976
      %3694 = vmatpush1.bf16.msra.mxu0 %v2975
      %3695 = vmatprep.subr.bf16.mxu0 %v2978
      %3696 = vmatpush1.bf16.msra.mxu0 %v2977
      %3697 = vmatprep.subr.bf16.mxu0 0
      %3698 = vmatpush1.bf16.msra.mxu0 0
      %3699 = vmatprep.subr.bf16.mxu0 0
      %3700 = vmatpush1.bf16.msra.mxu0 0
      %3701 = vmatprep.subr.bf16.mxu0 0
      %3702 = vmatpush1.bf16.msra.mxu0 0
      %3703 = vmatprep.subr.bf16.mxu0 0
      %3704 = vmatpush1.bf16.msra.mxu0 0
      %3705 = vmatprep.subr.bf16.mxu0 0
      %3706 = vmatpush1.bf16.msra.mxu0 0
      %3707 = vmatprep.subr.bf16.mxu0 0
      %3708 = vmatpush1.bf16.msra.mxu0 0
      %3709 = vmatprep.subr.bf16.mxu0 0
      %3710 = vmatpush1.bf16.msra.mxu0 0
      %3711 = vmatprep.subr.bf16.mxu0 0
      %3712 = vmatpush1.bf16.msra.mxu0 0
      %3713 = vmatprep.mubr.bf16.mxu0 0
      %3714 = vmatmul.mubr.bf16.gmra.mrb[0].mxu0 %v3673
      %v3715 = vpop.f32.mrb[0].mxu0
      %v3716 = vadd.f32 0.0, %v3715
      %v3717 = vpop.f32.mrb[0].mxu0
      %v3718 = vadd.f32 0.0, %v3717
      %v3719 = vpop.f32.mrb[0].mxu0
      %v3720 = vadd.f32 0.0, %v3719
      %v3721 = vpop.f32.mrb[0].mxu0
      %v3722 = vadd.f32 0.0, %v3721
      %3723 = vmatprep.mubr.bf16.mxu0 0
      %3724 = vmatmul.mubr.bf16.gmra.mrb[0].mxu0 %v3674
      %v3725 = vpop.f32.mrb[0].mxu0
      %v3726 = vadd.f32 0.0, %v3725
      %v3727 = vpop.f32.mrb[0].mxu0
      %v3728 = vadd.f32 0.0, %v3727
      %v3729 = vpop.f32.mrb[0].mxu0
      %v3730 = vadd.f32 0.0, %v3729
      %v3731 = vpop.f32.mrb[0].mxu0
      %v3732 = vadd.f32 0.0, %v3731
      %3733 = vmatprep.mubr.bf16.mxu0 0
      %3734 = vmatmul.mubr.bf16.gmra.mrb[0].mxu0 %v3675
      %v3735 = vpop.f32.mrb[0].mxu0
      %v3736 = vadd.f32 0.0, %v3735
      %v3737 = vpop.f32.mrb[0].mxu0
      %v3738 = vadd.f32 0.0, %v3737
      %v3739 = vpop.f32.mrb[0].mxu0
      %v3740 = vadd.f32 0.0, %v3739
      %v3741 = vpop.f32.mrb[0].mxu0
      %v3742 = vadd.f32 0.0, %v3741
      %3743 = vmatprep.mubr.bf16.mxu0 0
      %3744 = vmatmul.mubr.bf16.gmra.mrb[0].mxu0 %v3676
      %v3745 = vpop.f32.mrb[0].mxu0
      %v3746 = vadd.f32 0.0, %v3745
      %v3747 = vpop.f32.mrb[0].mxu0
      %v3748 = vadd.f32 0.0, %v3747
      %v3749 = vpop.f32.mrb[0].mxu0
      %v3750 = vadd.f32 0.0, %v3749
      %v3751 = vpop.f32.mrb[0].mxu0
      %v3752 = vadd.f32 0.0, %v3751
      %3753 = vmatprep.mubr.bf16.mxu0 0
      %3754 = vmatmul.mubr.bf16.gmra.mrb[0].mxu0 %v3677
      %v3755 = vpop.f32.mrb[0].mxu0
      %v3756 = vadd.f32 0.0, %v3755
      %v3757 = vpop.f32.mrb[0].mxu0
      %v3758 = vadd.f32 0.0, %v3757
      %v3759 = vpop.f32.mrb[0].mxu0
      %v3760 = vadd.f32 0.0, %v3759
      %v3761 = vpop.f32.mrb[0].mxu0
      %v3762 = vadd.f32 0.0, %v3761
      %3763 = vmatprep.mubr.bf16.mxu0 0
      %3764 = vmatmul.mubr.bf16.gmra.mrb[0].mxu0 %v3678
      %v3765 = vpop.f32.mrb[0].mxu0
      %v3766 = vadd.f32 0.0, %v3765
      %v3767 = vpop.f32.mrb[0].mxu0
      %v3768 = vadd.f32 0.0, %v3767
      %v3769 = vpop.f32.mrb[0].mxu0
      %v3770 = vadd.f32 0.0, %v3769
      %v3771 = vpop.f32.mrb[0].mxu0
      %v3772 = vadd.f32 0.0, %v3771
      %3773 = vmatprep.mubr.bf16.mxu0 0
      %3774 = vmatmul.mubr.bf16.gmra.mrb[0].mxu0 %v3679
      %v3775 = vpop.f32.mrb[0].mxu0
      %v3776 = vadd.f32 0.0, %v3775
      %v3777 = vpop.f32.mrb[0].mxu0
      %v3778 = vadd.f32 0.0, %v3777
      %v3779 = vpop.f32.mrb[0].mxu0
      %v3780 = vadd.f32 0.0, %v3779
      %v3781 = vpop.f32.mrb[0].mxu0
      %v3782 = vadd.f32 0.0, %v3781
      %3783 = vmatprep.mubr.bf16.mxu0 0
      %3784 = vmatmul.mubr.bf16.gmra.mrb[0].mxu0 %v3680
      %v3785 = vpop.f32.mrb[0].mxu0
      %v3786 = vadd.f32 0.0, %v3785
      %v3787 = vpop.f32.mrb[0].mxu0
      %v3788 = vadd.f32 0.0, %v3787
      %v3789 = vpop.f32.mrb[0].mxu0
      %v3790 = vadd.f32 0.0, %v3789
      %v3791 = vpop.f32.mrb[0].mxu0
      %v3792 = vadd.f32 0.0, %v3791
      %3793 = vdwg.mxu0
      %v3794 = vadd.f32 %v3640, %v3716
      %v3795 = vadd.f32 %v3641, %v3718
      %v3796 = vadd.f32 %v3642, %v3720
      %v3797 = vadd.f32 %v3643, %v3722
      %v3798 = vadd.f32 %v3644, %v3726
      %v3799 = vadd.f32 %v3645, %v3728
      %v3800 = vadd.f32 %v3646, %v3730
      %v3801 = vadd.f32 %v3647, %v3732
      %v3802 = vadd.f32 %v3648, %v3736
      %v3803 = vadd.f32 %v3649, %v3738
      %v3804 = vadd.f32 %v3650, %v3740
      %v3805 = vadd.f32 %v3651, %v3742
      %v3806 = vadd.f32 %v3652, %v3746
      %v3807 = vadd.f32 %v3653, %v3748
      %v3808 = vadd.f32 %v3654, %v3750
      %v3809 = vadd.f32 %v3655, %v3752
      %v3810 = vadd.f32 %v3656, %v3756
      %v3811 = vadd.f32 %v3657, %v3758
      %v3812 = vadd.f32 %v3658, %v3760
      %v3813 = vadd.f32 %v3659, %v3762
      %v3814 = vadd.f32 %v3660, %v3766
      %v3815 = vadd.f32 %v3661, %v3768
      %v3816 = vadd.f32 %v3662, %v3770
      %v3817 = vadd.f32 %v3663, %v3772
      %v3818 = vadd.f32 %v3664, %v3776
      %v3819 = vadd.f32 %v3665, %v3778
      %v3820 = vadd.f32 %v3666, %v3780
      %v3821 = vadd.f32 %v3667, %v3782
      %v3822 = vadd.f32 %v3668, %v3786
      %v3823 = vadd.f32 %v3669, %v3788
      %v3824 = vadd.f32 %v3670, %v3790
      %v3825 = vadd.f32 %v3671, %v3792
      %v3826 = vmax.f32 %v3794, %v3795
      %v3827 = vmax.f32 %v3796, %v3797
      %v3828 = vmax.f32 %v3798, %v3799
      %v3829 = vmax.f32 %v3800, %v3801
      %v3830 = vmax.f32 %v3802, %v3803
      %v3831 = vmax.f32 %v3804, %v3805
      %v3832 = vmax.f32 %v3806, %v3807
      %v3833 = vmax.f32 %v3808, %v3809
      %v3834 = vmax.f32 %v3810, %v3811
      %v3835 = vmax.f32 %v3812, %v3813
      %v3836 = vmax.f32 %v3814, %v3815
      %v3837 = vmax.f32 %v3816, %v3817
      %v3838 = vmax.f32 %v3818, %v3819
      %v3839 = vmax.f32 %v3820, %v3821
      %v3840 = vmax.f32 %v3822, %v3823
      %v3841 = vmax.f32 %v3824, %v3825
      %v3842 = vmax.f32 %v3140, %v3826
      %v3843 = vmax.f32 %v3141, %v3827
      %v3844 = vmax.f32 %v3142, %v3828
      %v3845 = vmax.f32 %v3143, %v3829
      %v3846 = vmax.f32 %v3144, %v3830
      %v3847 = vmax.f32 %v3145, %v3831
      %v3848 = vmax.f32 %v3146, %v3832
      %v3849 = vmax.f32 %v3147, %v3833
      %v3850 = vmax.f32 %v3148, %v3834
      %v3851 = vmax.f32 %v3149, %v3835
      %v3852 = vmax.f32 %v3150, %v3836
      %v3853 = vmax.f32 %v3151, %v3837
      %v3854 = vmax.f32 %v3152, %v3838
      %v3855 = vmax.f32 %v3153, %v3839
      %v3856 = vmax.f32 %v3154, %v3840
      %v3857 = vmax.f32 %v3155, %v3841
      %v3858 = vlaneseq
      %v3859 = vshrl.u32 %v3858, 7
      %v3860 = vsub.s32 0, %v3859
      %v3861 = vrot.slane %v255, %v3860
      %v3862 = vadd.f32 %v3842, %v3861
      %v3863 = vadd.f32 %v3843, %v3861
      %v3864 = vadd.f32 %v3844, %v3861
      %v3865 = vadd.f32 %v3845, %v3861
      %v3866 = vadd.f32 %v3846, %v3861
      %v3867 = vadd.f32 %v3847, %v3861
      %v3868 = vadd.f32 %v3848, %v3861
      %v3869 = vadd.f32 %v3849, %v3861
      %v3870 = vadd.f32 %v3850, %v3861
      %v3871 = vadd.f32 %v3851, %v3861
      %v3872 = vadd.f32 %v3852, %v3861
      %v3873 = vadd.f32 %v3853, %v3861
      %v3874 = vadd.f32 %v3854, %v3861
      %v3875 = vadd.f32 %v3855, %v3861
      %v3876 = vadd.f32 %v3856, %v3861
      %v3877 = vadd.f32 %v3857, %v3861
      %v3878 = vmax.f32 %v3862, 0.0
      %v3879 = vmax.f32 %v3863, 0.0
      %v3880 = vmax.f32 %v3864, 0.0
      %v3881 = vmax.f32 %v3865, 0.0
      %v3882 = vmax.f32 %v3866, 0.0
      %v3883 = vmax.f32 %v3867, 0.0
      %v3884 = vmax.f32 %v3868, 0.0
      %v3885 = vmax.f32 %v3869, 0.0
      %v3886 = vmax.f32 %v3870, 0.0
      %v3887 = vmax.f32 %v3871, 0.0
      %v3888 = vmax.f32 %v3872, 0.0
      %v3889 = vmax.f32 %v3873, 0.0
      %v3890 = vmax.f32 %v3874, 0.0
      %v3891 = vmax.f32 %v3875, 0.0
      %v3892 = vmax.f32 %v3876, 0.0
      %v3893 = vmax.f32 %v3877, 0.0
      %v3894 = vpack.c.bf16 %v3879, %v3878
      %v3895 = vpack.c.bf16 %v3881, %v3880
      %v3896 = vpack.c.bf16 %v3883, %v3882
      %v3897 = vpack.c.bf16 %v3885, %v3884
      %v3898 = vpack.c.bf16 %v3887, %v3886
      %v3899 = vpack.c.bf16 %v3889, %v3888
      %v3900 = vpack.c.bf16 %v3891, %v3890
      %v3901 = vpack.c.bf16 %v3893, %v3892
      %v3902 = vld [vmem:[%s3] sm:$0xf]
      %v3903 = vld [vmem:[%s3 + $0x4] sm:$0xf]
      %v3904 = vld [vmem:[%s3 + $0x8] sm:$0xf]
      %v3905 = vld [vmem:[%s3 + $0xc] sm:$0xf]
      %v3906 = vld [vmem:[%s3 + $0x10] sm:$0xf]
      %v3907 = vld [vmem:[%s3 + $0x14] sm:$0xf]
      %v3908 = vld [vmem:[%s3 + $0x18] sm:$0xf]
      %v3909 = vld [vmem:[%s3 + $0x1c] sm:$0xf]
      %v3910 = vld [vmem:[%s3 + $0x20] sm:$0xf]
      %v3911 = vld [vmem:[%s3 + $0x24] sm:$0xf]
      %v3912 = vld [vmem:[%s3 + $0x28] sm:$0xf]
      %v3913 = vld [vmem:[%s3 + $0x2c] sm:$0xf]
      %v3914 = vld [vmem:[%s3 + $0x30] sm:$0xf]
      %v3915 = vld [vmem:[%s3 + $0x34] sm:$0xf]
      %v3916 = vld [vmem:[%s3 + $0x38] sm:$0xf]
      %v3917 = vld [vmem:[%s3 + $0x3c] sm:$0xf]
      %v3918 = vld [vmem:[%s3 + $0x40] sm:$0xf]
      %v3919 = vld [vmem:[%s3 + $0x44] sm:$0xf]
      %v3920 = vld [vmem:[%s3 + $0x48] sm:$0xf]
      %v3921 = vld [vmem:[%s3 + $0x4c] sm:$0xf]
      %v3922 = vld [vmem:[%s3 + $0x50] sm:$0xf]
      %v3923 = vld [vmem:[%s3 + $0x54] sm:$0xf]
      %v3924 = vld [vmem:[%s3 + $0x58] sm:$0xf]
      %v3925 = vld [vmem:[%s3 + $0x5c] sm:$0xf]
      %v3926 = vld [vmem:[%s3 + $0x60] sm:$0xf]
      %v3927 = vld [vmem:[%s3 + $0x64] sm:$0xf]
      %v3928 = vld [vmem:[%s3 + $0x68] sm:$0xf]
      %v3929 = vld [vmem:[%s3 + $0x6c] sm:$0xf]
      %v3930 = vld [vmem:[%s3 + $0x70] sm:$0xf]
      %v3931 = vld [vmem:[%s3 + $0x74] sm:$0xf]
      %v3932 = vld [vmem:[%s3 + $0x78] sm:$0xf]
      %v3933 = vld [vmem:[%s3 + $0x7c] sm:$0xf]
      %v3934 = vld [vmem:[%s3 + $0x80] sm:$0xf]
      %v3935 = vld [vmem:[%s3 + $0x84] sm:$0xf]
      %v3936 = vld [vmem:[%s3 + $0x88] sm:$0xf]
      %v3937 = vld [vmem:[%s3 + $0x8c] sm:$0xf]
      %v3938 = vld [vmem:[%s3 + $0x90] sm:$0xf]
      %v3939 = vld [vmem:[%s3 + $0x94] sm:$0xf]
      %v3940 = vld [vmem:[%s3 + $0x98] sm:$0xf]
      %v3941 = vld [vmem:[%s3 + $0x9c] sm:$0xf]
      %v3942 = vld [vmem:[%s3 + $0xa0] sm:$0xf]
      %v3943 = vld [vmem:[%s3 + $0xa4] sm:$0xf]
      %v3944 = vld [vmem:[%s3 + $0xa8] sm:$0xf]
      %v3945 = vld [vmem:[%s3 + $0xac] sm:$0xf]
      %v3946 = vld [vmem:[%s3 + $0xb0] sm:$0xf]
      %v3947 = vld [vmem:[%s3 + $0xb4] sm:$0xf]
      %v3948 = vld [vmem:[%s3 + $0xb8] sm:$0xf]
      %v3949 = vld [vmem:[%s3 + $0xbc] sm:$0xf]
      %v3950 = vld [vmem:[%s3 + $0xc0] sm:$0xf]
      %v3951 = vld [vmem:[%s3 + $0xc4] sm:$0xf]
      %v3952 = vld [vmem:[%s3 + $0xc8] sm:$0xf]
      %v3953 = vld [vmem:[%s3 + $0xcc] sm:$0xf]
      %v3954 = vld [vmem:[%s3 + $0xd0] sm:$0xf]
      %v3955 = vld [vmem:[%s3 + $0xd4] sm:$0xf]
      %v3956 = vld [vmem:[%s3 + $0xd8] sm:$0xf]
      %v3957 = vld [vmem:[%s3 + $0xdc] sm:$0xf]
      %v3958 = vld [vmem:[%s3 + $0xe0] sm:$0xf]
      %v3959 = vld [vmem:[%s3 + $0xe4] sm:$0xf]
      %v3960 = vld [vmem:[%s3 + $0xe8] sm:$0xf]
      %v3961 = vld [vmem:[%s3 + $0xec] sm:$0xf]
      %v3962 = vld [vmem:[%s3 + $0xf0] sm:$0xf]
      %v3963 = vld [vmem:[%s3 + $0xf4] sm:$0xf]
      %v3964 = vld [vmem:[%s3 + $0xf8] sm:$0xf]
      %v3965 = vld [vmem:[%s3 + $0xfc] sm:$0xf]
      %v3966 = vlaneseq
      %v3967 = vshrl.u32 %v3966, 7
      %v3968 = vsub.s32 0, %v3967
      %v3969 = vrot.slane %v256, %v3968
      %v4034 = vunpack.c.l.b16 %v3902
      %v4035 = vunpack.c.l.b16 %v3903
      %v4036 = vunpack.c.l.b16 %v3904
      %v4037 = vunpack.c.l.b16 %v3905
      %v4038 = vunpack.c.l.b16 %v3906
      %v4039 = vunpack.c.l.b16 %v3907
      %v4040 = vunpack.c.l.b16 %v3908
      %v4041 = vunpack.c.l.b16 %v3909
      %v4042 = vunpack.c.l.b16 %v3910
      %v4043 = vunpack.c.l.b16 %v3911
      %v4044 = vunpack.c.l.b16 %v3912
      %v4045 = vunpack.c.l.b16 %v3913
      %v4046 = vunpack.c.l.b16 %v3914
      %v4047 = vunpack.c.l.b16 %v3915
      %v4048 = vunpack.c.l.b16 %v3916
      %v4049 = vunpack.c.l.b16 %v3917
      %v4050 = vunpack.c.l.b16 %v3918
      %v4051 = vunpack.c.l.b16 %v3919
      %v4052 = vunpack.c.l.b16 %v3920
      %v4053 = vunpack.c.l.b16 %v3921
      %v4054 = vunpack.c.l.b16 %v3922
      %v4055 = vunpack.c.l.b16 %v3923
      %v4056 = vunpack.c.l.b16 %v3924
      %v4057 = vunpack.c.l.b16 %v3925
      %v4058 = vunpack.c.l.b16 %v3926
      %v4059 = vunpack.c.l.b16 %v3927
      %v4060 = vunpack.c.l.b16 %v3928
      %v4061 = vunpack.c.l.b16 %v3929
      %v4062 = vunpack.c.l.b16 %v3930
      %v4063 = vunpack.c.l.b16 %v3931
      %v4064 = vunpack.c.l.b16 %v3932
      %v4065 = vunpack.c.l.b16 %v3933
      %v4066 = vunpack.c.l.b16 %v3934
      %v4067 = vunpack.c.l.b16 %v3935
      %v4068 = vunpack.c.l.b16 %v3936
      %v4069 = vunpack.c.l.b16 %v3937
      %v4070 = vunpack.c.l.b16 %v3938
      %v4071 = vunpack.c.l.b16 %v3939
      %v4072 = vunpack.c.l.b16 %v3940
      %v4073 = vunpack.c.l.b16 %v3941
      %v4074 = vunpack.c.l.b16 %v3942
      %v4075 = vunpack.c.l.b16 %v3943
      %v4076 = vunpack.c.l.b16 %v3944
      %v4077 = vunpack.c.l.b16 %v3945
      %v4078 = vunpack.c.l.b16 %v3946
      %v4079 = vunpack.c.l.b16 %v3947
      %v4080 = vunpack.c.l.b16 %v3948
      %v4081 = vunpack.c.l.b16 %v3949
      %v4082 = vunpack.c.l.b16 %v3950
      %v4083 = vunpack.c.l.b16 %v3951
      %v4084 = vunpack.c.l.b16 %v3952
      %v4085 = vunpack.c.l.b16 %v3953
      %v4086 = vunpack.c.l.b16 %v3954
      %v4087 = vunpack.c.l.b16 %v3955
      %v4088 = vunpack.c.l.b16 %v3956
      %v4089 = vunpack.c.l.b16 %v3957
      %v4090 = vunpack.c.l.b16 %v3958
      %v4091 = vunpack.c.l.b16 %v3959
      %v4092 = vunpack.c.l.b16 %v3960
      %v4093 = vunpack.c.l.b16 %v3961
      %v4094 = vunpack.c.l.b16 %v3962
      %v4095 = vunpack.c.l.b16 %v3963
      %v4096 = vunpack.c.l.b16 %v3964
      %v4097 = vunpack.c.l.b16 %v3965
      %v4098 = vpack.c.b16 %v4035, %v4034
      %v4099 = vpack.c.b16 %v4037, %v4036
      %v4100 = vpack.c.b16 %v4039, %v4038
      %v4101 = vpack.c.b16 %v4041, %v4040
      %v4102 = vpack.c.b16 %v4043, %v4042
      %v4103 = vpack.c.b16 %v4045, %v4044
      %v4104 = vpack.c.b16 %v4047, %v4046
      %v4105 = vpack.c.b16 %v4049, %v4048
      %v4106 = vpack.c.b16 %v4051, %v4050
      %v4107 = vpack.c.b16 %v4053, %v4052
      %v4108 = vpack.c.b16 %v4055, %v4054
      %v4109 = vpack.c.b16 %v4057, %v4056
      %v4110 = vpack.c.b16 %v4059, %v4058
      %v4111 = vpack.c.b16 %v4061, %v4060
      %v4112 = vpack.c.b16 %v4063, %v4062
      %v4113 = vpack.c.b16 %v4065, %v4064
      %v4114 = vpack.c.b16 %v4067, %v4066
      %v4115 = vpack.c.b16 %v4069, %v4068
      %v4116 = vpack.c.b16 %v4071, %v4070
      %v4117 = vpack.c.b16 %v4073, %v4072
      %v4118 = vpack.c.b16 %v4075, %v4074
      %v4119 = vpack.c.b16 %v4077, %v4076
      %v4120 = vpack.c.b16 %v4079, %v4078
      %v4121 = vpack.c.b16 %v4081, %v4080
      %v4122 = vpack.c.b16 %v4083, %v4082
      %v4123 = vpack.c.b16 %v4085, %v4084
      %v4124 = vpack.c.b16 %v4087, %v4086
      %v4125 = vpack.c.b16 %v4089, %v4088
      %v4126 = vpack.c.b16 %v4091, %v4090
      %v4127 = vpack.c.b16 %v4093, %v4092
      %v4128 = vpack.c.b16 %v4095, %v4094
      %v4129 = vpack.c.b16 %v4097, %v4096
      %4162 = vmatprep.subr.bf16.mxu0 0
      %4163 = vmatpush1.bf16.msra.mxu0 %v4098
      %4164 = vmatprep.subr.bf16.mxu0 0
      %4165 = vmatpush1.bf16.msra.mxu0 %v4099
      %4166 = vmatprep.subr.bf16.mxu0 0
      %4167 = vmatpush1.bf16.msra.mxu0 %v4100
      %4168 = vmatprep.subr.bf16.mxu0 0
      %4169 = vmatpush1.bf16.msra.mxu0 %v4101
      %4170 = vmatprep.subr.bf16.mxu0 0
      %4171 = vmatpush1.bf16.msra.mxu0 %v4102
      %4172 = vmatprep.subr.bf16.mxu0 0
      %4173 = vmatpush1.bf16.msra.mxu0 %v4103
      %4174 = vmatprep.subr.bf16.mxu0 0
      %4175 = vmatpush1.bf16.msra.mxu0 %v4104
      %4176 = vmatprep.subr.bf16.mxu0 0
      %4177 = vmatpush1.bf16.msra.mxu0 %v4105
      %4178 = vmatprep.subr.bf16.mxu0 0
      %4179 = vmatpush1.bf16.msra.mxu0 %v4106
      %4180 = vmatprep.subr.bf16.mxu0 0
      %4181 = vmatpush1.bf16.msra.mxu0 %v4107
      %4182 = vmatprep.subr.bf16.mxu0 0
      %4183 = vmatpush1.bf16.msra.mxu0 %v4108
      %4184 = vmatprep.subr.bf16.mxu0 0
      %4185 = vmatpush1.bf16.msra.mxu0 %v4109
      %4186 = vmatprep.subr.bf16.mxu0 0
      %4187 = vmatpush1.bf16.msra.mxu0 %v4110
      %4188 = vmatprep.subr.bf16.mxu0 0
      %4189 = vmatpush1.bf16.msra.mxu0 %v4111
      %4190 = vmatprep.subr.bf16.mxu0 0
      %4191 = vmatpush1.bf16.msra.mxu0 %v4112
      %4192 = vmatprep.subr.bf16.mxu0 0
      %4193 = vmatpush1.bf16.msra.mxu0 %v4113
      %4194 = vmatprep.mubr.bf16.mxu0 %v3896
      %4195 = vmatmul.mubr.bf16.gmra.mrb[0].mxu0 %v3894
      %v4196 = vpop.f32.mrb[0].mxu0
      %v4197 = vadd.f32 %v3969, %v4196
      %v4198 = vpop.f32.mrb[0].mxu0
      %v4199 = vpop.f32.mrb[0].mxu0
      %v4200 = vadd.f32 %v3969, %v4199
      %v4201 = vpop.f32.mrb[0].mxu0
      %4202 = vmatprep.mubr.bf16.mxu0 %v3897
      %4203 = vmatmul.mubr.bf16.gmra.mrb[0].mxu0 %v3895
      %v4204 = vpop.f32.mrb[0].mxu0
      %v4205 = vadd.f32 %v3969, %v4204
      %v4206 = vpop.f32.mrb[0].mxu0
      %v4207 = vpop.f32.mrb[0].mxu0
      %v4208 = vadd.f32 %v3969, %v4207
      %v4209 = vpop.f32.mrb[0].mxu0
      %4210 = vdwg.mxu0
      %4211 = vmatprep.subr.bf16.mxu0 0
      %4212 = vmatpush1.bf16.msra.mxu0 %v4114
      %4213 = vmatprep.subr.bf16.mxu0 0
      %4214 = vmatpush1.bf16.msra.mxu0 %v4115
      %4215 = vmatprep.subr.bf16.mxu0 0
      %4216 = vmatpush1.bf16.msra.mxu0 %v4116
      %4217 = vmatprep.subr.bf16.mxu0 0
      %4218 = vmatpush1.bf16.msra.mxu0 %v4117
      %4219 = vmatprep.subr.bf16.mxu0 0
      %4220 = vmatpush1.bf16.msra.mxu0 %v4118
      %4221 = vmatprep.subr.bf16.mxu0 0
      %4222 = vmatpush1.bf16.msra.mxu0 %v4119
      %4223 = vmatprep.subr.bf16.mxu0 0
      %4224 = vmatpush1.bf16.msra.mxu0 %v4120
      %4225 = vmatprep.subr.bf16.mxu0 0
      %4226 = vmatpush1.bf16.msra.mxu0 %v4121
      %4227 = vmatprep.subr.bf16.mxu0 0
      %4228 = vmatpush1.bf16.msra.mxu0 %v4122
      %4229 = vmatprep.subr.bf16.mxu0 0
      %4230 = vmatpush1.bf16.msra.mxu0 %v4123
      %4231 = vmatprep.subr.bf16.mxu0 0
      %4232 = vmatpush1.bf16.msra.mxu0 %v4124
      %4233 = vmatprep.subr.bf16.mxu0 0
      %4234 = vmatpush1.bf16.msra.mxu0 %v4125
      %4235 = vmatprep.subr.bf16.mxu0 0
      %4236 = vmatpush1.bf16.msra.mxu0 %v4126
      %4237 = vmatprep.subr.bf16.mxu0 0
      %4238 = vmatpush1.bf16.msra.mxu0 %v4127
      %4239 = vmatprep.subr.bf16.mxu0 0
      %4240 = vmatpush1.bf16.msra.mxu0 %v4128
      %4241 = vmatprep.subr.bf16.mxu0 0
      %4242 = vmatpush1.bf16.msra.mxu0 %v4129
      %4243 = vmatprep.mubr.bf16.mxu0 %v3900
      %4244 = vmatmul.mubr.bf16.gmra.mrb[0].mxu0 %v3898
      %v4245 = vpop.f32.mrb[0].mxu0
      %v4246 = vadd.f32 %v4197, %v4245
      %v4247 = vpop.f32.mrb[0].mxu0
      %v4248 = vpop.f32.mrb[0].mxu0
      %v4249 = vadd.f32 %v4200, %v4248
      %v4250 = vpop.f32.mrb[0].mxu0
      %4251 = vmatprep.mubr.bf16.mxu0 %v3901
      %4252 = vmatmul.mubr.bf16.gmra.mrb[0].mxu0 %v3899
      %v4253 = vpop.f32.mrb[0].mxu0
      %v4254 = vadd.f32 %v4205, %v4253
      %v4255 = vpop.f32.mrb[0].mxu0
      %v4256 = vpop.f32.mrb[0].mxu0
      %v4257 = vadd.f32 %v4208, %v4256
      %v4258 = vpop.f32.mrb[0].mxu0
      %4259 = vdwg.mxu0
      %v4260 = vmax.f32 %v4246, 0.0
      %v4261 = vmax.f32 %v4249, 0.0
      %v4262 = vmax.f32 %v4254, 0.0
      %v4263 = vmax.f32 %v4257, 0.0
      %v4264 = vpack.c.bf16 %v4261, %v4260
      %v4265 = vpack.c.bf16 %v4263, %v4262
      %v4266 = vld [vmem:[%s4] sm:$0xf]
      %v4267 = vld [vmem:[%s4 + $0x4] sm:$0xf]
      %v4268 = vld [vmem:[%s4 + $0x8] sm:$0xf]
      %v4269 = vld [vmem:[%s4 + $0xc] sm:$0xf]
      %v4270 = vld [vmem:[%s4 + $0x10] sm:$0xf]
      %v4271 = vld [vmem:[%s4 + $0x14] sm:$0xf]
      %v4272 = vld [vmem:[%s4 + $0x18] sm:$0xf]
      %v4273 = vld [vmem:[%s4 + $0x1c] sm:$0xf]
      %v4274 = vld [vmem:[%s4 + $0x20] sm:$0xf]
      %v4275 = vld [vmem:[%s4 + $0x24] sm:$0xf]
      %v4276 = vld [vmem:[%s4 + $0x28] sm:$0xf]
      %v4277 = vld [vmem:[%s4 + $0x2c] sm:$0xf]
      %v4278 = vld [vmem:[%s4 + $0x30] sm:$0xf]
      %v4279 = vld [vmem:[%s4 + $0x34] sm:$0xf]
      %v4280 = vld [vmem:[%s4 + $0x38] sm:$0xf]
      %v4281 = vld [vmem:[%s4 + $0x3c] sm:$0xf]
      %v4282 = vlaneseq
      %v4283 = vshrl.u32 %v4282, 7
      %v4284 = vsub.s32 0, %v4283
      %v4285 = vrot.slane %v257, %v4284
      %v4302 = vunpack.c.l.b16 %v4266
      %v4303 = vunpack.c.l.b16 %v4267
      %v4304 = vunpack.c.l.b16 %v4268
      %v4305 = vunpack.c.l.b16 %v4269
      %v4306 = vunpack.c.l.b16 %v4270
      %v4307 = vunpack.c.l.b16 %v4271
      %v4308 = vunpack.c.l.b16 %v4272
      %v4309 = vunpack.c.l.b16 %v4273
      %v4310 = vunpack.c.l.b16 %v4274
      %v4311 = vunpack.c.l.b16 %v4275
      %v4312 = vunpack.c.l.b16 %v4276
      %v4313 = vunpack.c.l.b16 %v4277
      %v4314 = vunpack.c.l.b16 %v4278
      %v4315 = vunpack.c.l.b16 %v4279
      %v4316 = vunpack.c.l.b16 %v4280
      %v4317 = vunpack.c.l.b16 %v4281
      %v4318 = vpack.c.b16 %v4303, %v4302
      %v4319 = vpack.c.b16 %v4305, %v4304
      %v4320 = vpack.c.b16 %v4307, %v4306
      %v4321 = vpack.c.b16 %v4309, %v4308
      %v4322 = vpack.c.b16 %v4311, %v4310
      %v4323 = vpack.c.b16 %v4313, %v4312
      %v4324 = vpack.c.b16 %v4315, %v4314
      %v4325 = vpack.c.b16 %v4317, %v4316
      %4334 = vmatprep.subr.bf16.mxu0 0
      %4335 = vmatpush1.bf16.msra.mxu0 %v4318
      %4336 = vmatprep.subr.bf16.mxu0 0
      %4337 = vmatpush1.bf16.msra.mxu0 %v4319
      %4338 = vmatprep.subr.bf16.mxu0 0
      %4339 = vmatpush1.bf16.msra.mxu0 %v4320
      %4340 = vmatprep.subr.bf16.mxu0 0
      %4341 = vmatpush1.bf16.msra.mxu0 %v4321
      %4342 = vmatprep.subr.bf16.mxu0 0
      %4343 = vmatpush1.bf16.msra.mxu0 %v4322
      %4344 = vmatprep.subr.bf16.mxu0 0
      %4345 = vmatpush1.bf16.msra.mxu0 %v4323
      %4346 = vmatprep.subr.bf16.mxu0 0
      %4347 = vmatpush1.bf16.msra.mxu0 %v4324
      %4348 = vmatprep.subr.bf16.mxu0 0
      %4349 = vmatpush1.bf16.msra.mxu0 %v4325
      %4350 = vmatprep.subr.bf16.mxu0 0
      %4351 = vmatpush1.bf16.msra.mxu0 0
      %4352 = vmatprep.subr.bf16.mxu0 0
      %4353 = vmatpush1.bf16.msra.mxu0 0
      %4354 = vmatprep.subr.bf16.mxu0 0
      %4355 = vmatpush1.bf16.msra.mxu0 0
      %4356 = vmatprep.subr.bf16.mxu0 0
      %4357 = vmatpush1.bf16.msra.mxu0 0
      %4358 = vmatprep.subr.bf16.mxu0 0
      %4359 = vmatpush1.bf16.msra.mxu0 0
      %4360 = vmatprep.subr.bf16.mxu0 0
      %4361 = vmatpush1.bf16.msra.mxu0 0
      %4362 = vmatprep.subr.bf16.mxu0 0
      %4363 = vmatpush1.bf16.msra.mxu0 0
      %4364 = vmatprep.subr.bf16.mxu0 0
      %4365 = vmatpush1.bf16.msra.mxu0 0
      %4366 = vmatprep.mubr.bf16.mxu0 0
      %4367 = vmatmul.mubr.bf16.gmra.mrb[0].mxu0 %v4264
      %v4368 = vpop.f32.mrb[0].mxu0
      %v4369 = vadd.f32 %v4285, %v4368
      %v4370 = vpop.f32.mrb[0].mxu0
      %v4371 = vpop.f32.mrb[0].mxu0
      %v4372 = vadd.f32 %v4285, %v4371
      %v4373 = vpop.f32.mrb[0].mxu0
      %4374 = vmatprep.mubr.bf16.mxu0 0
      %4375 = vmatmul.mubr.bf16.gmra.mrb[0].mxu0 %v4265
      %v4376 = vpop.f32.mrb[0].mxu0
      %v4377 = vadd.f32 %v4285, %v4376
      %v4378 = vpop.f32.mrb[0].mxu0
      %v4379 = vpop.f32.mrb[0].mxu0
      %v4380 = vadd.f32 %v4285, %v4379
      %v4381 = vpop.f32.mrb[0].mxu0
      %4382 = vdwg.mxu0
      %v4383 = vlaneseq
      %v4384 = vand.u32 %v4383, 127
      %vm4385 = vcmp.lt.s32.totalorder %v4384, 10
      %v4386 = vsel %vm4385, %v4369, -1e+30
      %v4387 = vsel %vm4385, %v4372, -1e+30
      %v4388 = vsel %vm4385, %v4377, -1e+30
      %v4389 = vsel %vm4385, %v4380, -1e+30
      %4390 = vmax.xlane.f32.xlu0 %v4386
      %v4391 = vpop.xlane.xlu0 %4390
      %4392 = vmax.xlane.f32.xlu0 %v4387
      %v4393 = vpop.xlane.xlu0 %4392
      %4394 = vmax.xlane.f32.xlu0 %v4388
      %v4395 = vpop.xlane.xlu0 %4394
      %4396 = vmax.xlane.f32.xlu0 %v4389
      %v4397 = vpop.xlane.xlu0 %4396
      %v4398 = vsub.f32 %v4386, %v4391
      %v4399 = vsub.f32 %v4387, %v4393
      %v4400 = vsub.f32 %v4388, %v4395
      %v4401 = vsub.f32 %v4389, %v4397
      %v4402 = vmul.f32 %v4398, 1.442695
      %v4403 = vpow.pop %v4402
      %v4404 = vmul.f32 %v4399, 1.442695
      %v4405 = vpow.pop %v4404
      %v4406 = vmul.f32 %v4400, 1.442695
      %v4407 = vpow.pop %v4406
      %v4408 = vmul.f32 %v4401, 1.442695
      %v4409 = vpow.pop %v4408
      %4410 = vadd.xlane.f32.xlu0 %v4403
      %v4411 = vpop.xlane.xlu0 %4410
      %4412 = vadd.xlane.f32.xlu0 %v4405
      %v4413 = vpop.xlane.xlu0 %4412
      %4414 = vadd.xlane.f32.xlu0 %v4407
      %v4415 = vpop.xlane.xlu0 %4414
      %4416 = vadd.xlane.f32.xlu0 %v4409
      %v4417 = vpop.xlane.xlu0 %4416
      %v4418 = vlog2.pop %v4411
      %v4419 = vmul.f32 %v4418, 0.6931472
      %v4420 = vlog2.pop %v4413
      %v4421 = vmul.f32 %v4420, 0.6931472
      %v4422 = vlog2.pop %v4415
      %v4423 = vmul.f32 %v4422, 0.6931472
      %v4424 = vlog2.pop %v4417
      %v4425 = vmul.f32 %v4424, 0.6931472
      %v4426 = vsub.f32 %v4398, %v4419
      %v4427 = vsub.f32 %v4399, %v4421
      %v4428 = vsub.f32 %v4400, %v4423
      %v4429 = vsub.f32 %v4401, %v4425
      %4430 = vst [vmem:[%s251] sm:$0xff] %v4426
      %4431 = vst [vmem:[%s251 + $0x8] sm:$0xff] %v4427
      %4432 = vst [vmem:[%s251 + $0x10] sm:$0xff] %v4428
      %4433 = vst [vmem:[%s251 + $0x18] sm:$0xff] %v4429
      %s4434 = smul.u32 4, %s17
      %p4435 = scmp.lt.s32.totalorder %s4434, 7
      %s4436 = scalar_select %p4435, %s4434, 7
      %s4437 = smul.addr %s4436, 8
      %s4438 = scalar_lea.vmem %s6, %s4437
      // Predicated region
      $region45: #{net_forward.1} parent=43 // pred_check
        %p4439 = pneg %p166
      $region46: #{net_forward.1} parent=43 // pred_check_branch
        %4441 = sbr.rel (%p4439) target = $region48
      $region47: #{net_forward.1} parent=43 // pred_region
        %s4442 = smul.u32 4, %s17
      $region48: #{net_forward.1} parent=43 // pred_fallthru
        _
    $region44: #{net_forward.1} parent=5 // pred_fallthru
      _
    %p4443 = scmp.le.s32.totalorder 2, %s12
    // Predicated region
    $region49: #{net_forward.1} parent=5 // pred_check
      %p4444 = pneg %p4443
    $region50: #{net_forward.1} parent=5 // pred_check_branch
      %4446 = sbr.rel (%p4444) target = $region52
    $region51: #{net_forward.1} parent=5 // pred_region
      %s4447 = ssub.s32 %s12, 2
      // Predicated region
      $region53: #{net_forward.1} parent=51 // pred_check
        %p4448 = pneg %p172
      $region54: #{net_forward.1} parent=51 // pred_check_branch
        %4450 = sbr.rel (%p4448) target = $region56
      $region55: #{net_forward.1} parent=51 // pred_region
        %s4451 = smul.u32 4, %s18
        %p4452 = scmp.lt.s32.totalorder %s4451, 7
        %s4453 = scalar_select %p4452, %s4451, 7
        %s4454 = smul.addr %s4453, 8
        %s4455 = scalar_lea.vmem %s6, %s4454
      $region56: #{net_forward.1} parent=51 // pred_fallthru
        _
    $region52: #{net_forward.1} parent=5 // pred_fallthru
      _
  $region6: #{net_forward.1} parent=0 // loop_footer
    %s16 = sadd.s32 1, %s12
  $region7: #{net_forward.1} parent=0 // loop_footer_branch
    %11 = sbr.rel target = $region3
  $region8: #{net_forward.1} parent=0 // loop_exit
    _

</llo_original>
